<compile_context>
chip_gen: v6e
topology: v6e:2x2x1
jax: 0.10.0
libtpu: 0.0.40
codegen_flags: <defaults>
</compile_context>

<pallas_src>
import jax
import jax.numpy as jnp
from jax.experimental import pallas as pl
from jax.experimental.pallas import tpu as pltpu

C_IN = 256   # fixed by LocalUseAdd.__init__ (ConvModule in_channels=256)
C_OUT = 256  # fixed by LocalUseAdd.__init__ (ConvModule out_channels=256)

# per-block cap for the add kernel: 2 inputs + 1 output, double-buffered
# -> ~12 MiB live, inside v5e's 16 MiB default scoped VMEM.
_ADD_BLOCK_BYTES = 2 * 1024 * 1024


# --------------------------- fused residual adds ----------------------------
def _add_kernel(a_ref, b_ref, o_ref):
    o_ref[...] = a_ref[...] + b_ref[...]


def fused_add(a, b):
    """a + b through one lane-dense tiled Pallas kernel (reshapes are free)."""
    assert a.shape == b.shape and a.dtype == b.dtype
    size = a.size
    lane = next((l for l in (1024, 512, 256, 128) if size % l == 0), None)
    if lane is None or (size // lane) % 8 != 0:
        # TODO(synk): unreachable for 256-channel FPN features; plain fallback.
        return a + b
    rows = size // lane
    a2 = a.reshape(rows, lane)
    b2 = b.reshape(rows, lane)

    itemsize = jnp.dtype(a.dtype).itemsize
    cap = max(8, (_ADD_BLOCK_BYTES // (itemsize * lane)) // 8 * 8)
    tile = min(cap, rows)
    if rows >= 16:                              # >= 2 grid steps (v7x megacore)
        tile = min(tile, max(8, (rows // 2) // 8 * 8))
    while rows % tile:                          # exact grid, no padding pass
        tile -= 8

    out = pl.pallas_call(
        _add_kernel,
        out_shape=jax.ShapeDtypeStruct((rows, lane), a.dtype),
        grid=(rows // tile,),
        in_specs=[pl.BlockSpec((tile, lane), lambda i: (i, 0)),
                  pl.BlockSpec((tile, lane), lambda i: (i, 0))],
        out_specs=pl.BlockSpec((tile, lane), lambda i: (i, 0)),
        compiler_params=pltpu.CompilerParams(
            dimension_semantics=("parallel",)),
    )(a2, b2)
    return out.reshape(a.shape)


# ------ conv3x3 / stride2 / pad1 + bias + ReLU + residual (no im2col) --------
def _conv_row_kernel(xe0_ref, xe1_ref, xe2_ref, xo0_ref, xo1_ref, xo2_ref,
                     w_ref, b_ref, res_ref, o_ref):
    wo = o_ref.shape[2]
    cout = o_ref.shape[3]
    acc = jnp.zeros((wo, cout), jnp.float32)
    xe_refs = (xe0_ref, xe1_ref, xe2_ref)       # kh = 0,1,2 rows, even columns
    xo_refs = (xo0_ref, xo1_ref, xo2_ref)       # kh = 0,1,2 rows, odd columns
    for kh in range(3):
        xe_row = xe_refs[kh][0, 0, :, :]        # (We,   Cin)
        xo_row = xo_refs[kh][0, 0, :, :]        # (Wodd, Cin)
        taps = (xe_row[0:wo, :],                # kw=0 : padded col 2*wo
                xo_row[0:wo, :],                # kw=1 : padded col 2*wo + 1
                xe_row[1:wo + 1, :])            # kw=2 : padded col 2*wo + 2
        for kw in range(3):
            acc = acc + jnp.dot(taps[kw], w_ref[kh, kw, :, :],
                                preferred_element_type=jnp.float32)
    y = jnp.maximum(acc + b_ref[...], 0.0) + res_ref[0, 0, :, :]
    o_ref[0, 0, :, :] = y.astype(o_ref.dtype)


def conv3x3_s2_relu_add(x_nchw, w_hwio, bias, residual_nchw):
    """residual + relu(conv3x3(x, stride=2, pad=1) + bias); NCHW in / NCHW out."""
    N, cin, H, W = x_nchw.shape
    cout = w_hwio.shape[-1]
    Ho = (H - 1) // 2 + 1
    Wo = (W - 1) // 2 + 1

    # TODO(synk): fold the NCHW<->NHWC layout change into the kernel DMA; on
    # this (smallest) FPN level the transposes are a negligible traffic slice.
    x = jnp.transpose(x_nchw, (0, 2, 3, 1))                  # (N, H,  W,  Cin)
    xp = jnp.pad(x, ((0, 0), (1, 1), (1, 1), (0, 0)))        # (N, H+2,W+2,Cin)
    # even / odd padded columns -> every tap is a contiguous in-kernel slice;
    # no (M, 9*Cin) im2col buffer and no strided loads.
    xe = xp[:, :, 0::2, :]                                   # cols 2wo, 2wo+2
    xo = xp[:, :, 1::2, :]                                   # cols 2wo+1
    res = jnp.transpose(residual_nchw, (0, 2, 3, 1))         # (N, Ho, Wo, Cout)
    b2 = bias.reshape(1, cout).astype(jnp.float32)

    def row_spec(arr, kh):
        # one padded input row per grid step; block row size 1 so the index
        # map can return the arbitrary (overlapping) row 2*h + kh directly.
        return pl.BlockSpec((1, 1, arr.shape[2], cin),
                            lambda n, h, _kh=kh: (n, 2 * h + _kh, 0, 0))

    out_nhwc = pl.pallas_call(
        _conv_row_kernel,
        out_shape=jax.ShapeDtypeStruct((N, Ho, Wo, cout), x_nchw.dtype),
        grid=(N, Ho),
        in_specs=[row_spec(xe, 0), row_spec(xe, 1), row_spec(xe, 2),
                  row_spec(xo, 0), row_spec(xo, 1), row_spec(xo, 2),
                  pl.BlockSpec((3, 3, cin, cout), lambda n, h: (0, 0, 0, 0)),
                  pl.BlockSpec((1, cout), lambda n, h: (0, 0)),
                  pl.BlockSpec((1, 1, Wo, cout), lambda n, h: (n, h, 0, 0))],
        out_specs=pl.BlockSpec((1, 1, Wo, cout), lambda n, h: (n, h, 0, 0)),
        compiler_params=pltpu.CompilerParams(
            dimension_semantics=("parallel", "parallel")),
    )(xe, xe, xe, xo, xo, xo,
      w_hwio.astype(jnp.float32), b2, res.astype(jnp.float32))
    return jnp.transpose(out_nhwc, (0, 3, 1, 2))             # back to NCHW


# --------------------------------- module ------------------------------------
def init_params(key):
    # xavier_init(distribution='uniform'): U(-a, a), a=sqrt(6/(fan_in+fan_out));
    # bias initialized to 0 (mmdet default).
    fan_in = 3 * 3 * C_IN
    fan_out = 3 * 3 * C_OUT
    a = (6.0 / (fan_in + fan_out)) ** 0.5
    w = jax.random.uniform(key, (3, 3, C_IN, C_OUT), jnp.float32, -a, a)  # HWIO
    b = jnp.zeros((C_OUT,), jnp.float32)
    return w, b


def local_use_add_forward(feat, feat_ref, w, b):
    return [fused_add(feat[0], feat_ref[1]),
            fused_add(feat[1], feat_ref[2]),
            fused_add(feat[2], feat_ref[3]),
            fused_add(feat[3], feat_ref[4]),
            conv3x3_s2_relu_add(feat_ref[4], w, b, feat[4])]


if __name__ == "__main__":
    key = jax.random.PRNGKey(0)
    k_w, *keys = jax.random.split(key, 11)
    w, b = init_params(k_w)

    N = 2
    ref_hw = [(16, 16), (16, 16), (8, 8), (8, 8), (8, 8)]        # feat_ref levels
    feat_hw = ref_hw[1:] + [((ref_hw[4][0] + 1) // 2,
                             (ref_hw[4][1] + 1) // 2)]           # feat levels

    feat_ref = [jax.random.normal(keys[i], (N, 256, h, ww), jnp.float32)
                for i, (h, ww) in enumerate(ref_hw)]
    feat = [jax.random.normal(keys[5 + i], (N, 256, h, ww), jnp.float32)
            for i, (h, ww) in enumerate(feat_hw)]

    fwd = jax.jit(local_use_add_forward)
    outs = jax.block_until_ready(fwd(feat, feat_ref, w, b))

    # pure-JAX f32 reference (HIGHEST-precision conv for torch-f32 parity).
    conv_ref = jax.lax.conv_general_dilated(
        feat_ref[4], jnp.transpose(w, (3, 2, 0, 1)),             # HWIO -> OIHW
        window_strides=(2, 2), padding=((1, 1), (1, 1)),
        dimension_numbers=('NCHW', 'OIHW', 'NCHW'),
        precision=jax.lax.Precision.HIGHEST)
    conv_ref = jnp.maximum(conv_ref + b.reshape(1, -1, 1, 1), 0.0)
    refs = [feat[0] + feat_ref[1], feat[1] + feat_ref[2],
            feat[2] + feat_ref[3], feat[3] + feat_ref[4],
            feat[4] + conv_ref]
    tols = [(1e-6, 1e-6)] * 4 + [(2e-3, 2e-3)]
    for o, r, (at, rt) in zip(outs, refs, tols):
        assert o.shape == r.shape, (o.shape, r.shape)
        err = float(jnp.abs(o - r).max())
        assert jnp.allclose(o, r, atol=at, rtol=rt), err

    print("KERNEL_OK")
</pallas_src>

<mosaic_0001>
module attributes {stable_mosaic.version = 11 : i64} {
  func.func @_add_kernel(%arg0: i32, %arg1: memref<64x1024xf32, #tpu.memory_space<vmem>>, %arg2: memref<64x1024xf32, #tpu.memory_space<vmem>>, %arg3: memref<64x1024xf32, #tpu.memory_space<vmem>>) attributes {dimension_semantics = [#tpu.dimension_semantics<parallel>], iteration_bounds = array<i64: 2>, scalar_prefetch = 0 : i64, scratch_operands = 0 : i64, tpu.core_type = #tpu.core_type<tc>, window_params = [{transform_indices = @transform_0, window_bounds = array<i64: 64, 1024>}, {transform_indices = @transform_1, window_bounds = array<i64: 64, 1024>}, {transform_indices = @transform_2, window_bounds = array<i64: 64, 1024>}]} {
    %c0 = arith.constant 0 : index
    %c0_0 = arith.constant 0 : index
    %0 = vector.load %arg1[%c0, %c0_0] : memref<64x1024xf32, #tpu.memory_space<vmem>>, vector<64x1024xf32>
    %c0_1 = arith.constant 0 : index
    %c0_2 = arith.constant 0 : index
    %1 = vector.load %arg2[%c0_1, %c0_2] : memref<64x1024xf32, #tpu.memory_space<vmem>>, vector<64x1024xf32>
    %2 = arith.addf %0, %1 : vector<64x1024xf32>
    %c0_3 = arith.constant 0 : index
    %c0_4 = arith.constant 0 : index
    %3 = vector.load %arg3[%c0_3, %c0_4] : memref<64x1024xf32, #tpu.memory_space<vmem>>, vector<64x1024xf32>
    tpu.vector_store %arg3[%c0_3, %c0_4], %2 {strides = array<i32>} : memref<64x1024xf32, #tpu.memory_space<vmem>>, vector<64x1024xf32>,
    return
  }
  func.func @transform_0(%arg0: i32) -> (i32, i32) {
    %c0_i32 = arith.constant 0 : i32
    %c0_i32_0 = arith.constant 0 : i32
    return %arg0, %c0_i32 : i32, i32
  }
  func.func @transform_1(%arg0: i32) -> (i32, i32) {
    %c0_i32 = arith.constant 0 : i32
    %c0_i32_0 = arith.constant 0 : i32
    return %arg0, %c0_i32 : i32, i32
  }
  func.func @transform_2(%arg0: i32) -> (i32, i32) {
    %c0_i32 = arith.constant 0 : i32
    %c0_i32_0 = arith.constant 0 : i32
    return %arg0, %c0_i32 : i32, i32
  }
}

module attributes {stable_mosaic.version = 11 : i64} {
  func.func @_add_kernel(%arg0: i32, %arg1: memref<16x1024xf32, #tpu.memory_space<vmem>>, %arg2: memref<16x1024xf32, #tpu.memory_space<vmem>>, %arg3: memref<16x1024xf32, #tpu.memory_space<vmem>>) attributes {dimension_semantics = [#tpu.dimension_semantics<parallel>], iteration_bounds = array<i64: 2>, scalar_prefetch = 0 : i64, scratch_operands = 0 : i64, tpu.core_type = #tpu.core_type<tc>, window_params = [{transform_indices = @transform_0, window_bounds = array<i64: 16, 1024>}, {transform_indices = @transform_1, window_bounds = array<i64: 16, 1024>}, {transform_indices = @transform_2, window_bounds = array<i64: 16, 1024>}]} {
    %c0 = arith.constant 0 : index
    %c0_0 = arith.constant 0 : index
    %0 = vector.load %arg1[%c0, %c0_0] : memref<16x1024xf32, #tpu.memory_space<vmem>>, vector<16x1024xf32>
    %c0_1 = arith.constant 0 : index
    %c0_2 = arith.constant 0 : index
    %1 = vector.load %arg2[%c0_1, %c0_2] : memref<16x1024xf32, #tpu.memory_space<vmem>>, vector<16x1024xf32>
    %2 = arith.addf %0, %1 : vector<16x1024xf32>
    %c0_3 = arith.constant 0 : index
    %c0_4 = arith.constant 0 : index
    %3 = vector.load %arg3[%c0_3, %c0_4] : memref<16x1024xf32, #tpu.memory_space<vmem>>, vector<16x1024xf32>
    tpu.vector_store %arg3[%c0_3, %c0_4], %2 {strides = array<i32>} : memref<16x1024xf32, #tpu.memory_space<vmem>>, vector<16x1024xf32>,
    return
  }
  func.func @transform_0(%arg0: i32) -> (i32, i32) {
    %c0_i32 = arith.constant 0 : i32
    %c0_i32_0 = arith.constant 0 : i32
    return %arg0, %c0_i32 : i32, i32
  }
  func.func @transform_1(%arg0: i32) -> (i32, i32) {
    %c0_i32 = arith.constant 0 : i32
    %c0_i32_0 = arith.constant 0 : i32
    return %arg0, %c0_i32 : i32, i32
  }
  func.func @transform_2(%arg0: i32) -> (i32, i32) {
    %c0_i32 = arith.constant 0 : i32
    %c0_i32_0 = arith.constant 0 : i32
    return %arg0, %c0_i32 : i32, i32
  }
}

module attributes {stable_mosaic.version = 11 : i64} {
  func.func @_conv_row_kernel(%arg0: i32, %arg1: i32, %arg2: memref<1x1x5x256xf32, #tpu.memory_space<vmem>>, %arg3: memref<1x1x5x256xf32, #tpu.memory_space<vmem>>, %arg4: memref<1x1x5x256xf32, #tpu.memory_space<vmem>>, %arg5: memref<1x1x5x256xf32, #tpu.memory_space<vmem>>, %arg6: memref<1x1x5x256xf32, #tpu.memory_space<vmem>>, %arg7: memref<1x1x5x256xf32, #tpu.memory_space<vmem>>, %arg8: memref<3x3x256x256xf32, #tpu.memory_space<vmem>>, %arg9: memref<1x256xf32, #tpu.memory_space<vmem>>, %arg10: memref<1x1x4x256xf32, #tpu.memory_space<vmem>>, %arg11: memref<1x1x4x256xf32, #tpu.memory_space<vmem>>) attributes {dimension_semantics = [#tpu.dimension_semantics<parallel>, #tpu.dimension_semantics<parallel>], iteration_bounds = array<i64: 2, 4>, scalar_prefetch = 0 : i64, scratch_operands = 0 : i64, tpu.core_type = #tpu.core_type<tc>, window_params = [{transform_indices = @transform_0, window_bounds = array<i64: 1, 1, 5, 256>}, {transform_indices = @transform_1, window_bounds = array<i64: 1, 1, 5, 256>}, {transform_indices = @transform_2, window_bounds = array<i64: 1, 1, 5, 256>}, {transform_indices = @transform_3, window_bounds = array<i64: 1, 1, 5, 256>}, {transform_indices = @transform_4, window_bounds = array<i64: 1, 1, 5, 256>}, {transform_indices = @transform_5, window_bounds = array<i64: 1, 1, 5, 256>}, {pipeline_mode = #tpu.pipeline_mode<synchronous>, transform_indices = @transform_6, window_bounds = array<i64: 3, 3, 256, 256>}, {pipeline_mode = #tpu.pipeline_mode<synchronous>, transform_indices = @transform_7, window_bounds = array<i64: 1, 256>}, {transform_indices = @transform_8, window_bounds = array<i64: 1, 1, 4, 256>}, {transform_indices = @transform_9, window_bounds = array<i64: 1, 1, 4, 256>}]} {
    %cst = arith.constant 0.000000e+00 : f32
    %0 = vector.broadcast %cst : f32 to vector<4x256xf32>
    %c0 = arith.constant 0 : index
    %c0_0 = arith.constant 0 : index
    %c0_1 = arith.constant 0 : index
    %c0_2 = arith.constant 0 : index
    %1 = vector.load %arg2[%c0, %c0_0, %c0_1, %c0_2] : memref<1x1x5x256xf32, #tpu.memory_space<vmem>>, vector<1x1x5x256xf32>
    %2 = vector.shape_cast %1 : vector<1x1x5x256xf32> to vector<5x256xf32>
    %c0_3 = arith.constant 0 : index
    %c0_4 = arith.constant 0 : index
    %c0_5 = arith.constant 0 : index
    %c0_6 = arith.constant 0 : index
    %3 = vector.load %arg5[%c0_3, %c0_4, %c0_5, %c0_6] : memref<1x1x5x256xf32, #tpu.memory_space<vmem>>, vector<1x1x5x256xf32>
    %4 = vector.shape_cast %3 : vector<1x1x5x256xf32> to vector<5x256xf32>
    %5 = vector.extract_strided_slice %2 {offsets = [0, 0], sizes = [4, 256], strides = [1, 1]} : vector<5x256xf32> to vector<4x256xf32>
    %6 = vector.extract_strided_slice %4 {offsets = [0, 0], sizes = [4, 256], strides = [1, 1]} : vector<5x256xf32> to vector<4x256xf32>
    %7 = vector.extract_strided_slice %2 {offsets = [1, 0], sizes = [4, 256], strides = [1, 1]} : vector<5x256xf32> to vector<4x256xf32>
    %c0_7 = arith.constant 0 : index
    %c0_8 = arith.constant 0 : index
    %c0_9 = arith.constant 0 : index
    %c0_10 = arith.constant 0 : index
    %8 = vector.load %arg8[%c0_7, %c0_8, %c0_9, %c0_10] : memref<3x3x256x256xf32, #tpu.memory_space<vmem>>, vector<1x1x256x256xf32>
    %9 = vector.shape_cast %8 : vector<1x1x256x256xf32> to vector<256x256xf32>
    %cst_11 = arith.constant dense<0.000000e+00> : vector<4x256xf32>
    %10 = tpu.matmul %5, %9, %cst_11 {dimension_numbers = #tpu.dot_dimension_numbers<[1], [0], [0], [1], [0, 0, 1, 1], [], []>} : vector<4x256xf32>, vector<256x256xf32>, vector<4x256xf32> -> vector<4x256xf32>
    %11 = arith.addf %0, %10 : vector<4x256xf32>
    %c0_12 = arith.constant 0 : index
    %c1 = arith.constant 1 : index
    %c0_13 = arith.constant 0 : index
    %c0_14 = arith.constant 0 : index
    %12 = vector.load %arg8[%c0_12, %c1, %c0_13, %c0_14] : memref<3x3x256x256xf32, #tpu.memory_space<vmem>>, vector<1x1x256x256xf32>
    %13 = vector.shape_cast %12 : vector<1x1x256x256xf32> to vector<256x256xf32>
    %cst_15 = arith.constant dense<0.000000e+00> : vector<4x256xf32>
    %14 = tpu.matmul %6, %13, %cst_15 {dimension_numbers = #tpu.dot_dimension_numbers<[1], [0], [0], [1], [0, 0, 1, 1], [], []>} : vector<4x256xf32>, vector<256x256xf32>, vector<4x256xf32> -> vector<4x256xf32>
    %15 = arith.addf %11, %14 : vector<4x256xf32>
    %c0_16 = arith.constant 0 : index
    %c2 = arith.constant 2 : index
    %c0_17 = arith.constant 0 : index
    %c0_18 = arith.constant 0 : index
    %16 = vector.load %arg8[%c0_16, %c2, %c0_17, %c0_18] : memref<3x3x256x256xf32, #tpu.memory_space<vmem>>, vector<1x1x256x256xf32>
    %17 = vector.shape_cast %16 : vector<1x1x256x256xf32> to vector<256x256xf32>
    %cst_19 = arith.constant dense<0.000000e+00> : vector<4x256xf32>
    %18 = tpu.matmul %7, %17, %cst_19 {dimension_numbers = #tpu.dot_dimension_numbers<[1], [0], [0], [1], [0, 0, 1, 1], [], []>} : vector<4x256xf32>, vector<256x256xf32>, vector<4x256xf32> -> vector<4x256xf32>
    %19 = arith.addf %15, %18 : vector<4x256xf32>
    %c0_20 = arith.constant 0 : index
    %c0_21 = arith.constant 0 : index
    %c0_22 = arith.constant 0 : index
    %c0_23 = arith.constant 0 : index
    %20 = vector.load %arg3[%c0_20, %c0_21, %c0_22, %c0_23] : memref<1x1x5x256xf32, #tpu.memory_space<vmem>>, vector<1x1x5x256xf32>
    %21 = vector.shape_cast %20 : vector<1x1x5x256xf32> to vector<5x256xf32>
    %c0_24 = arith.constant 0 : index
    %c0_25 = arith.constant 0 : index
    %c0_26 = arith.constant 0 : index
    %c0_27 = arith.constant 0 : index
    %22 = vector.load %arg6[%c0_24, %c0_25, %c0_26, %c0_27] : memref<1x1x5x256xf32, #tpu.memory_space<vmem>>, vector<1x1x5x256xf32>
    %23 = vector.shape_cast %22 : vector<1x1x5x256xf32> to vector<5x256xf32>
    %24 = vector.extract_strided_slice %21 {offsets = [0, 0], sizes = [4, 256], strides = [1, 1]} : vector<5x256xf32> to vector<4x256xf32>
    %25 = vector.extract_strided_slice %23 {offsets = [0, 0], sizes = [4, 256], strides = [1, 1]} : vector<5x256xf32> to vector<4x256xf32>
    %26 = vector.extract_strided_slice %21 {offsets = [1, 0], sizes = [4, 256], strides = [1, 1]} : vector<5x256xf32> to vector<4x256xf32>
    %c1_28 = arith.constant 1 : index
    %c0_29 = arith.constant 0 : index
    %c0_30 = arith.constant 0 : index
    %c0_31 = arith.constant 0 : index
    %27 = vector.load %arg8[%c1_28, %c0_29, %c0_30, %c0_31] : memref<3x3x256x256xf32, #tpu.memory_space<vmem>>, vector<1x1x256x256xf32>
    %28 = vector.shape_cast %27 : vector<1x1x256x256xf32> to vector<256x256xf32>
    %cst_32 = arith.constant dense<0.000000e+00> : vector<4x256xf32>
    %29 = tpu.matmul %24, %28, %cst_32 {dimension_numbers = #tpu.dot_dimension_numbers<[1], [0], [0], [1], [0, 0, 1, 1], [], []>} : vector<4x256xf32>, vector<256x256xf32>, vector<4x256xf32> -> vector<4x256xf32>
    %30 = arith.addf %19, %29 : vector<4x256xf32>
    %c1_33 = arith.constant 1 : index
    %c1_34 = arith.constant 1 : index
    %c0_35 = arith.constant 0 : index
    %c0_36 = arith.constant 0 : index
    %31 = vector.load %arg8[%c1_33, %c1_34, %c0_35, %c0_36] : memref<3x3x256x256xf32, #tpu.memory_space<vmem>>, vector<1x1x256x256xf32>
    %32 = vector.shape_cast %31 : vector<1x1x256x256xf32> to vector<256x256xf32>
    %cst_37 = arith.constant dense<0.000000e+00> : vector<4x256xf32>
    %33 = tpu.matmul %25, %32, %cst_37 {dimension_numbers = #tpu.dot_dimension_numbers<[1], [0], [0], [1], [0, 0, 1, 1], [], []>} : vector<4x256xf32>, vector<256x256xf32>, vector<4x256xf32> -> vector<4x256xf32>
    %34 = arith.addf %30, %33 : vector<4x256xf32>
    %c1_38 = arith.constant 1 : index
    %c2_39 = arith.constant 2 : index
    %c0_40 = arith.constant 0 : index
    %c0_41 = arith.constant 0 : index
    %35 = vector.load %arg8[%c1_38, %c2_39, %c0_40, %c0_41] : memref<3x3x256x256xf32, #tpu.memory_space<vmem>>, vector<1x1x256x256xf32>
    %36 = vector.shape_cast %35 : vector<1x1x256x256xf32> to vector<256x256xf32>
    %cst_42 = arith.constant dense<0.000000e+00> : vector<4x256xf32>
    %37 = tpu.matmul %26, %36, %cst_42 {dimension_numbers = #tpu.dot_dimension_numbers<[1], [0], [0], [1], [0, 0, 1, 1], [], []>} : vector<4x256xf32>, vector<256x256xf32>, vector<4x256xf32> -> vector<4x256xf32>
    %38 = arith.addf %34, %37 : vector<4x256xf32>
    %c0_43 = arith.constant 0 : index
    %c0_44 = arith.constant 0 : index
    %c0_45 = arith.constant 0 : index
    %c0_46 = arith.constant 0 : index
    %39 = vector.load %arg4[%c0_43, %c0_44, %c0_45, %c0_46] : memref<1x1x5x256xf32, #tpu.memory_space<vmem>>, vector<1x1x5x256xf32>
    %40 = vector.shape_cast %39 : vector<1x1x5x256xf32> to vector<5x256xf32>
    %c0_47 = arith.constant 0 : index
    %c0_48 = arith.constant 0 : index
    %c0_49 = arith.constant 0 : index
    %c0_50 = arith.constant 0 : index
    %41 = vector.load %arg7[%c0_47, %c0_48, %c0_49, %c0_50] : memref<1x1x5x256xf32, #tpu.memory_space<vmem>>, vector<1x1x5x256xf32>
    %42 = vector.shape_cast %41 : vector<1x1x5x256xf32> to vector<5x256xf32>
    %43 = vector.extract_strided_slice %40 {offsets = [0, 0], sizes = [4, 256], strides = [1, 1]} : vector<5x256xf32> to vector<4x256xf32>
    %44 = vector.extract_strided_slice %42 {offsets = [0, 0], sizes = [4, 256], strides = [1, 1]} : vector<5x256xf32> to vector<4x256xf32>
    %45 = vector.extract_strided_slice %40 {offsets = [1, 0], sizes = [4, 256], strides = [1, 1]} : vector<5x256xf32> to vector<4x256xf32>
    %c2_51 = arith.constant 2 : index
    %c0_52 = arith.constant 0 : index
    %c0_53 = arith.constant 0 : index
    %c0_54 = arith.constant 0 : index
    %46 = vector.load %arg8[%c2_51, %c0_52, %c0_53, %c0_54] : memref<3x3x256x256xf32, #tpu.memory_space<vmem>>, vector<1x1x256x256xf32>
    %47 = vector.shape_cast %46 : vector<1x1x256x256xf32> to vector<256x256xf32>
    %cst_55 = arith.constant dense<0.000000e+00> : vector<4x256xf32>
    %48 = tpu.matmul %43, %47, %cst_55 {dimension_numbers = #tpu.dot_dimension_numbers<[1], [0], [0], [1], [0, 0, 1, 1], [], []>} : vector<4x256xf32>, vector<256x256xf32>, vector<4x256xf32> -> vector<4x256xf32>
    %49 = arith.addf %38, %48 : vector<4x256xf32>
    %c2_56 = arith.constant 2 : index
    %c1_57 = arith.constant 1 : index
    %c0_58 = arith.constant 0 : index
    %c0_59 = arith.constant 0 : index
    %50 = vector.load %arg8[%c2_56, %c1_57, %c0_58, %c0_59] : memref<3x3x256x256xf32, #tpu.memory_space<vmem>>, vector<1x1x256x256xf32>
    %51 = vector.shape_cast %50 : vector<1x1x256x256xf32> to vector<256x256xf32>
    %cst_60 = arith.constant dense<0.000000e+00> : vector<4x256xf32>
    %52 = tpu.matmul %44, %51, %cst_60 {dimension_numbers = #tpu.dot_dimension_numbers<[1], [0], [0], [1], [0, 0, 1, 1], [], []>} : vector<4x256xf32>, vector<256x256xf32>, vector<4x256xf32> -> vector<4x256xf32>
    %53 = arith.addf %49, %52 : vector<4x256xf32>
    %c2_61 = arith.constant 2 : index
    %c2_62 = arith.constant 2 : index
    %c0_63 = arith.constant 0 : index
    %c0_64 = arith.constant 0 : index
    %54 = vector.load %arg8[%c2_61, %c2_62, %c0_63, %c0_64] : memref<3x3x256x256xf32, #tpu.memory_space<vmem>>, vector<1x1x256x256xf32>
    %55 = vector.shape_cast %54 : vector<1x1x256x256xf32> to vector<256x256xf32>
    %cst_65 = arith.constant dense<0.000000e+00> : vector<4x256xf32>
    %56 = tpu.matmul %45, %55, %cst_65 {dimension_numbers = #tpu.dot_dimension_numbers<[1], [0], [0], [1], [0, 0, 1, 1], [], []>} : vector<4x256xf32>, vector<256x256xf32>, vector<4x256xf32> -> vector<4x256xf32>
    %57 = arith.addf %53, %56 : vector<4x256xf32>
    %c0_66 = arith.constant 0 : index
    %c0_67 = arith.constant 0 : index
    %58 = vector.load %arg9[%c0_66, %c0_67] : memref<1x256xf32, #tpu.memory_space<vmem>>, vector<1x256xf32>
    %59 = vector.broadcast %58 : vector<1x256xf32> to vector<4x256xf32>
    %60 = arith.addf %57, %59 : vector<4x256xf32>
    %cst_68 = arith.constant 0.000000e+00 : f32
    %61 = vector.broadcast %cst_68 : f32 to vector<4x256xf32>
    %62 = arith.maximumf %60, %61 : vector<4x256xf32>
    %c0_69 = arith.constant 0 : index
    %c0_70 = arith.constant 0 : index
    %c0_71 = arith.constant 0 : index
    %c0_72 = arith.constant 0 : index
    %63 = vector.load %arg10[%c0_69, %c0_70, %c0_71, %c0_72] : memref<1x1x4x256xf32, #tpu.memory_space<vmem>>, vector<1x1x4x256xf32>
    %64 = vector.shape_cast %63 : vector<1x1x4x256xf32> to vector<4x256xf32>
    %65 = arith.addf %62, %64 : vector<4x256xf32>
    %c0_73 = arith.constant 0 : index
    %c0_74 = arith.constant 0 : index
    %c0_75 = arith.constant 0 : index
    %c0_76 = arith.constant 0 : index
    %66 = vector.load %arg11[%c0_73, %c0_74, %c0_75, %c0_76] : memref<1x1x4x256xf32, #tpu.memory_space<vmem>>, vector<1x1x4x256xf32>
    %67 = vector.shape_cast %66 : vector<1x1x4x256xf32> to vector<4x256xf32>
    %68 = vector.shape_cast %65 : vector<4x256xf32> to vector<1x1x4x256xf32>
    tpu.vector_store %arg11[%c0_73, %c0_74, %c0_75, %c0_76], %68 {strides = array<i32>} : memref<1x1x4x256xf32, #tpu.memory_space<vmem>>, vector<1x1x4x256xf32>,
    return
  }
  func.func @transform_0(%arg0: i32, %arg1: i32) -> (i32, i32, i32, i32) {
    %c2_i32 = arith.constant 2 : i32
    %0 = arith.muli %c2_i32, %arg1 : i32
    %c0_i32 = arith.constant 0 : i32
    %1 = arith.addi %0, %c0_i32 : i32
    %c0_i32_0 = arith.constant 0 : i32
    %c0_i32_1 = arith.constant 0 : i32
    %c0_i32_2 = arith.constant 0 : i32
    return %arg0, %1, %c0_i32_0, %c0_i32_1 : i32, i32, i32, i32
  }
  func.func @transform_1(%arg0: i32, %arg1: i32) -> (i32, i32, i32, i32) {
    %c2_i32 = arith.constant 2 : i32
    %0 = arith.muli %c2_i32, %arg1 : i32
    %c1_i32 = arith.constant 1 : i32
    %1 = arith.addi %0, %c1_i32 : i32
    %c0_i32 = arith.constant 0 : i32
    %c0_i32_0 = arith.constant 0 : i32
    %c0_i32_1 = arith.constant 0 : i32
    return %arg0, %1, %c0_i32, %c0_i32_0 : i32, i32, i32, i32
  }
  func.func @transform_2(%arg0: i32, %arg1: i32) -> (i32, i32, i32, i32) {
    %c2_i32 = arith.constant 2 : i32
    %0 = arith.muli %c2_i32, %arg1 : i32
    %c2_i32_0 = arith.constant 2 : i32
    %1 = arith.addi %0, %c2_i32_0 : i32
    %c0_i32 = arith.constant 0 : i32
    %c0_i32_1 = arith.constant 0 : i32
    %c0_i32_2 = arith.constant 0 : i32
    return %arg0, %1, %c0_i32, %c0_i32_1 : i32, i32, i32, i32
  }
  func.func @transform_3(%arg0: i32, %arg1: i32) -> (i32, i32, i32, i32) {
    %c2_i32 = arith.constant 2 : i32
    %0 = arith.muli %c2_i32, %arg1 : i32
    %c0_i32 = arith.constant 0 : i32
    %1 = arith.addi %0, %c0_i32 : i32
    %c0_i32_0 = arith.constant 0 : i32
    %c0_i32_1 = arith.constant 0 : i32
    %c0_i32_2 = arith.constant 0 : i32
    return %arg0, %1, %c0_i32_0, %c0_i32_1 : i32, i32, i32, i32
  }
  func.func @transform_4(%arg0: i32, %arg1: i32) -> (i32, i32, i32, i32) {
    %c2_i32 = arith.constant 2 : i32
    %0 = arith.muli %c2_i32, %arg1 : i32
    %c1_i32 = arith.constant 1 : i32
    %1 = arith.addi %0, %c1_i32 : i32
    %c0_i32 = arith.constant 0 : i32
    %c0_i32_0 = arith.constant 0 : i32
    %c0_i32_1 = arith.constant 0 : i32
    return %arg0, %1, %c0_i32, %c0_i32_0 : i32, i32, i32, i32
  }
  func.func @transform_5(%arg0: i32, %arg1: i32) -> (i32, i32, i32, i32) {
    %c2_i32 = arith.constant 2 : i32
    %0 = arith.muli %c2_i32, %arg1 : i32
    %c2_i32_0 = arith.constant 2 : i32
    %1 = arith.addi %0, %c2_i32_0 : i32
    %c0_i32 = arith.constant 0 : i32
    %c0_i32_1 = arith.constant 0 : i32
    %c0_i32_2 = arith.constant 0 : i32
    return %arg0, %1, %c0_i32, %c0_i32_1 : i32, i32, i32, i32
  }
  func.func @transform_6(%arg0: i32, %arg1: i32) -> (i32, i32, i32, i32) {
    %c0_i32 = arith.constant 0 : i32
    %c0_i32_0 = arith.constant 0 : i32
    %c0_i32_1 = arith.constant 0 : i32
    %c0_i32_2 = arith.constant 0 : i32
    %c0_i32_3 = arith.constant 0 : i32
    return %c0_i32, %c0_i32_0, %c0_i32_1, %c0_i32_2 : i32, i32, i32, i32
  }
  func.func @transform_7(%arg0: i32, %arg1: i32) -> (i32, i32) {
    %c0_i32 = arith.constant 0 : i32
    %c0_i32_0 = arith.constant 0 : i32
    %c0_i32_1 = arith.constant 0 : i32
    return %c0_i32, %c0_i32_0 : i32, i32
  }
  func.func @transform_8(%arg0: i32, %arg1: i32) -> (i32, i32, i32, i32) {
    %c0_i32 = arith.constant 0 : i32
    %c0_i32_0 = arith.constant 0 : i32
    %c0_i32_1 = arith.constant 0 : i32
    return %arg0, %arg1, %c0_i32, %c0_i32_0 : i32, i32, i32, i32
  }
  func.func @transform_9(%arg0: i32, %arg1: i32) -> (i32, i32, i32, i32) {
    %c0_i32 = arith.constant 0 : i32
    %c0_i32_0 = arith.constant 0 : i32
    %c0_i32_1 = arith.constant 0 : i32
    return %arg0, %arg1, %c0_i32, %c0_i32_0 : i32, i32, i32, i32
  }
}

</mosaic_0001>

<llo_original>
// kernel: local_use_add_forward.5
$region0: #{local_use_add_forward.5}
  #allocation0 [shape = 'u32[]', space=smem, size = 0x4, offset = 0x4, fixed_abs, tag = 'smem constant byte address 0x4 - core index']
  #allocation1 [shape = 'u32[144,128]{1,0:T(1,128)}', space=vmem, size = 0x12000, scoped, tag = 'internal scratch']
  %s0 = inlined_call_operand.vmem [shape: f32[128,1024], index: 0, kind: input, shape index: {}]
  %s1 = inlined_call_operand.vmem [shape: f32[128,1024], index: 1, kind: input, shape index: {}]
  %s2 = inlined_call_operand.vmem [shape: f32[128,1024], index: 2, kind: output, shape index: {}]
  %s3 = sld [smem:[#allocation0]]
  $region41: #{local_use_add_forward.5} parent=0
    _
  %s5 = ssub.s32 1, %s3
  %s6 = scalar_select 0, %s5, %s3
  loop: start=0, step=1, limit=4
  $region2: #{local_use_add_forward.5} parent=0 // loop_pre_header
    _
  $region3: #{local_use_add_forward.5} parent=0 // loop_header
    %s8 = sphi 0, %s12
    %p9 = scmp.ge.s32.totalorder %s8, 4
    %s18 = sphi 0, %s20
    %s21 = sphi 0, %s18
    %s22 = sphi 0, %s21
    %s38 = sphi 0, %s22
    %s44 = sphi 0, %s46
    %s47 = sphi 0, %s44
    %s48 = sphi 0, %s47
    %s64 = sphi 0, %s48
    %s70 = sphi 0, %s72
    %s73 = sphi 0, %s70
    %s74 = sphi 0, %s73
    %s90 = sphi 0, %s74
  $region4: #{local_use_add_forward.5} parent=0 // loop_header_branch
    %11 = sbr.rel (%p9) target = $region8
  $region5: #{local_use_add_forward.5} parent=0 // loop_body
    %s13 = ssub.s32 %s8, 1
    %s14 = ssub.s32 %s8, 2
    %s15 = sadd.s32 %s8, 1
    %s16 = ssub.s32 %s8, %s15
    %p17 = scmp.eq.s32.totalorder %s16, 0
    %s19 = sadd.s32 %s18, 1
    %s20 = scalar_select %p17, %s18, %s19
    %p23 = pneg %p17
    %p24 = scmp.eq.s32.totalorder %s8, 1
    %p25 = por %p23, %p24
    %p26 = scmp.ne.s32.totalorder %s18, %s21
    %p27 = scmp.eq.s32.totalorder %s8, 0
    %p28 = por %p26, %p27
    %p29 = scmp.ne.s32.totalorder %s18, %s21
    %p30 = scmp.eq.s32.totalorder %s13, 1
    %p31 = por %p29, %p30
    %p32 = scmp.ne.s32.totalorder %s21, %s22
    %p33 = scmp.eq.s32.totalorder %s13, 0
    %p34 = por %p32, %p33
    %p35 = scmp.ne.s32.totalorder %s21, %s22
    %p36 = scmp.eq.s32.totalorder %s14, 1
    %p37 = por %p35, %p36
    %p39 = scmp.ne.s32.totalorder %s22, %s38
    %p40 = scmp.eq.s32.totalorder %s14, 0
    %p41 = por %p39, %p40
    %s42 = ssub.s32 %s8, %s15
    %p43 = scmp.eq.s32.totalorder %s42, 0
    %s45 = sadd.s32 %s44, 1
    %s46 = scalar_select %p43, %s44, %s45
    %p49 = pneg %p43
    %p50 = scmp.eq.s32.totalorder %s8, 1
    %p51 = por %p49, %p50
    %p52 = scmp.ne.s32.totalorder %s44, %s47
    %p53 = scmp.eq.s32.totalorder %s8, 0
    %p54 = por %p52, %p53
    %p55 = scmp.ne.s32.totalorder %s44, %s47
    %p56 = scmp.eq.s32.totalorder %s13, 1
    %p57 = por %p55, %p56
    %p58 = scmp.ne.s32.totalorder %s47, %s48
    %p59 = scmp.eq.s32.totalorder %s13, 0
    %p60 = por %p58, %p59
    %p61 = scmp.ne.s32.totalorder %s47, %s48
    %p62 = scmp.eq.s32.totalorder %s14, 1
    %p63 = por %p61, %p62
    %p65 = scmp.ne.s32.totalorder %s48, %s64
    %p66 = scmp.eq.s32.totalorder %s14, 0
    %p67 = por %p65, %p66
    %s68 = ssub.s32 %s8, %s15
    %p69 = scmp.eq.s32.totalorder %s68, 0
    %s71 = sadd.s32 %s70, 1
    %s72 = scalar_select %p69, %s70, %s71
    %p75 = pneg %p69
    %p76 = scmp.eq.s32.totalorder %s8, 1
    %p77 = por %p75, %p76
    %p78 = scmp.ne.s32.totalorder %s70, %s73
    %p79 = scmp.eq.s32.totalorder %s8, 0
    %p80 = por %p78, %p79
    %p81 = scmp.ne.s32.totalorder %s70, %s73
    %p82 = scmp.eq.s32.totalorder %s13, 1
    %p83 = por %p81, %p82
    %p84 = scmp.ne.s32.totalorder %s73, %s74
    %p85 = scmp.eq.s32.totalorder %s13, 0
    %p86 = por %p84, %p85
    %p87 = scmp.ne.s32.totalorder %s73, %s74
    %p88 = scmp.eq.s32.totalorder %s14, 1
    %p89 = por %p87, %p88
    %p91 = scmp.ne.s32.totalorder %s74, %s90
    %p92 = scmp.eq.s32.totalorder %s14, 0
    %p93 = por %p91, %p92
    %p94 = scmp.le.s32.totalorder 1, %s8
    %p95 = scmp.lt.s32.totalorder %s8, 3
    %p96 = pnand %p94, %p95
    %p97 = pneg %p96
    // Predicated region
    $region9: #{local_use_add_forward.5} parent=5 // pred_check
      _
    $region10: #{local_use_add_forward.5} parent=5 // pred_check_branch
      %99 = sbr.rel (%p96) target = $region12
    $region11: #{local_use_add_forward.5} parent=5 // pred_region
      %s100 = ssub.s32 %s8, 1
    $region12: #{local_use_add_forward.5} parent=5 // pred_fallthru
      _
    %p101 = scmp.lt.s32.totalorder %s8, 2
    // Predicated region
    $region13: #{local_use_add_forward.5} parent=5 // pred_check
      %p102 = pneg %p101
    $region14: #{local_use_add_forward.5} parent=5 // pred_check_branch
      %104 = sbr.rel (%p102) target = $region16
    $region15: #{local_use_add_forward.5} parent=5 // pred_region
      // Predicated region
      $region17: #{local_use_add_forward.5} parent=15 // pred_check
        %p105 = pneg %p28
      $region18: #{local_use_add_forward.5} parent=15 // pred_check_branch
        %107 = sbr.rel (%p105) target = $region20
      $region19: #{local_use_add_forward.5} parent=15 // pred_region
        %s108 = smul.u32 8, %s8
        %p109 = scmp.lt.s32.totalorder %s108, 15
        %s110 = scalar_select %p109, %s108, 15
        %s111 = smul.addr %s110, 8
        %s112 = smul.addr %s111, 8
        %s113 = scalar_lea.vmem %s0, %s112
        %s114 = smul.u32 8, %s8
      $region20: #{local_use_add_forward.5} parent=15 // pred_fallthru
        _
      // Predicated region
      $region21: #{local_use_add_forward.5} parent=15 // pred_check
        %p115 = pneg %p54
      $region22: #{local_use_add_forward.5} parent=15 // pred_check_branch
        %117 = sbr.rel (%p115) target = $region24
      $region23: #{local_use_add_forward.5} parent=15 // pred_region
        %s118 = smul.u32 8, %s8
        %p119 = scmp.lt.s32.totalorder %s118, 15
        %s120 = scalar_select %p119, %s118, 15
        %s121 = smul.addr %s120, 8
        %s122 = smul.addr %s121, 8
        %s123 = scalar_lea.vmem %s1, %s122
        %s124 = smul.u32 8, %s8
      $region24: #{local_use_add_forward.5} parent=15 // pred_fallthru
        _
    $region16: #{local_use_add_forward.5} parent=5 // pred_fallthru
      _
    %p125 = scmp.le.s32.totalorder 1, %s8
    %p126 = scmp.lt.s32.totalorder %s8, 3
    %p127 = pnand %p125, %p126
    %p128 = pneg %p127
    // Predicated region
    $region25: #{local_use_add_forward.5} parent=5 // pred_check
      _
    $region26: #{local_use_add_forward.5} parent=5 // pred_check_branch
      %130 = sbr.rel (%p127) target = $region28
    $region27: #{local_use_add_forward.5} parent=5 // pred_region
      %s131 = ssub.s32 %s8, 1
      %s132 = smul.u32 8, %s13
      %p133 = scmp.lt.s32.totalorder %s132, 15
      %s134 = scalar_select %p133, %s132, 15
      %s135 = smul.addr %s134, 8
      %s136 = smul.addr %s135, 8
      %s137 = scalar_lea.vmem %s0, %s136
      %p138 = pneg %p34
      %p139 = pneg %p31
      %s140 = smul.u32 8, %s13
      %p141 = scmp.lt.s32.totalorder %s140, 15
      %s142 = scalar_select %p141, %s140, 15
      %s143 = smul.addr %s142, 8
      %s144 = smul.addr %s143, 8
      %s145 = scalar_lea.vmem %s1, %s144
      %p146 = pneg %p60
      %p147 = pneg %p57
      %p148 = pneg %p86
      %p149 = pneg %p83
      %s150 = smul.u32 8, %s13
      %p151 = scmp.lt.s32.totalorder %s150, 15
      %s152 = scalar_select %p151, %s150, 15
      %s153 = smul.addr %s152, 8
      %s154 = smul.addr %s153, 8
      %s155 = scalar_lea.vmem %s2, %s154
      %s156 = smul.u32 8, %s13
      %p157 = scmp.lt.s32.totalorder %s156, 15
      %s158 = scalar_select %p157, %s156, 15
      %s159 = smul.addr %s158, 8
      %s160 = smul.addr %s159, 8
      %s161 = scalar_lea.vmem %s0, %s160
      %s162 = smul.u32 8, %s13
      %s163 = smul.u32 8, %s13
      %p164 = scmp.lt.s32.totalorder %s163, 15
      %s165 = scalar_select %p164, %s163, 15
      %s166 = smul.addr %s165, 8
      %s167 = smul.addr %s166, 8
      %s168 = scalar_lea.vmem %s1, %s167
      %s169 = smul.u32 8, %s13
      %s170 = smul.u32 8, %s13
      %p171 = scmp.lt.s32.totalorder %s170, 15
      %s172 = scalar_select %p171, %s170, 15
      %s173 = smul.addr %s172, 8
      %s174 = smul.addr %s173, 8
      %s175 = scalar_lea.vmem %s2, %s174
      %s176 = smul.u32 8, %s13
      %v177 = vld [vmem:[%s161] sm:$0xff]
      %v178 = vld [vmem:[%s161 + $0x8] sm:$0xff]
      %v179 = vld [vmem:[%s161 + $0x10] sm:$0xff]
      %v180 = vld [vmem:[%s161 + $0x18] sm:$0xff]
      %v181 = vld [vmem:[%s161 + $0x20] sm:$0xff]
      %v182 = vld [vmem:[%s161 + $0x28] sm:$0xff]
      %v183 = vld [vmem:[%s161 + $0x30] sm:$0xff]
      %v184 = vld [vmem:[%s161 + $0x38] sm:$0xff]
      %v185 = vld [vmem:[%s161 + $0x40] sm:$0xff]
      %v186 = vld [vmem:[%s161 + $0x48] sm:$0xff]
      %v187 = vld [vmem:[%s161 + $0x50] sm:$0xff]
      %v188 = vld [vmem:[%s161 + $0x58] sm:$0xff]
      %v189 = vld [vmem:[%s161 + $0x60] sm:$0xff]
      %v190 = vld [vmem:[%s161 + $0x68] sm:$0xff]
      %v191 = vld [vmem:[%s161 + $0x70] sm:$0xff]
      %v192 = vld [vmem:[%s161 + $0x78] sm:$0xff]
      %v193 = vld [vmem:[%s161 + $0x80] sm:$0xff]
      %v194 = vld [vmem:[%s161 + $0x88] sm:$0xff]
      %v195 = vld [vmem:[%s161 + $0x90] sm:$0xff]
      %v196 = vld [vmem:[%s161 + $0x98] sm:$0xff]
      %v197 = vld [vmem:[%s161 + $0xa0] sm:$0xff]
      %v198 = vld [vmem:[%s161 + $0xa8] sm:$0xff]
      %v199 = vld [vmem:[%s161 + $0xb0] sm:$0xff]
      %v200 = vld [vmem:[%s161 + $0xb8] sm:$0xff]
      %v201 = vld [vmem:[%s161 + $0xc0] sm:$0xff]
      %v202 = vld [vmem:[%s161 + $0xc8] sm:$0xff]
      %v203 = vld [vmem:[%s161 + $0xd0] sm:$0xff]
      %v204 = vld [vmem:[%s161 + $0xd8] sm:$0xff]
      %v205 = vld [vmem:[%s161 + $0xe0] sm:$0xff]
      %v206 = vld [vmem:[%s161 + $0xe8] sm:$0xff]
      %v207 = vld [vmem:[%s161 + $0xf0] sm:$0xff]
      %v208 = vld [vmem:[%s161 + $0xf8] sm:$0xff]
      %v209 = vld [vmem:[%s161 + $0x100] sm:$0xff]
      %v210 = vld [vmem:[%s161 + $0x108] sm:$0xff]
      %v211 = vld [vmem:[%s161 + $0x110] sm:$0xff]
      %v212 = vld [vmem:[%s161 + $0x118] sm:$0xff]
      %v213 = vld [vmem:[%s161 + $0x120] sm:$0xff]
      %v214 = vld [vmem:[%s161 + $0x128] sm:$0xff]
      %v215 = vld [vmem:[%s161 + $0x130] sm:$0xff]
      %v216 = vld [vmem:[%s161 + $0x138] sm:$0xff]
      %v217 = vld [vmem:[%s161 + $0x140] sm:$0xff]
      %v218 = vld [vmem:[%s161 + $0x148] sm:$0xff]
      %v219 = vld [vmem:[%s161 + $0x150] sm:$0xff]
      %v220 = vld [vmem:[%s161 + $0x158] sm:$0xff]
      %v221 = vld [vmem:[%s161 + $0x160] sm:$0xff]
      %v222 = vld [vmem:[%s161 + $0x168] sm:$0xff]
      %v223 = vld [vmem:[%s161 + $0x170] sm:$0xff]
      %v224 = vld [vmem:[%s161 + $0x178] sm:$0xff]
      %v225 = vld [vmem:[%s161 + $0x180] sm:$0xff]
      %v226 = vld [vmem:[%s161 + $0x188] sm:$0xff]
      %v227 = vld [vmem:[%s161 + $0x190] sm:$0xff]
      %v228 = vld [vmem:[%s161 + $0x198] sm:$0xff]
      %v229 = vld [vmem:[%s161 + $0x1a0] sm:$0xff]
      %v230 = vld [vmem:[%s161 + $0x1a8] sm:$0xff]
      %v231 = vld [vmem:[%s161 + $0x1b0] sm:$0xff]
      %v232 = vld [vmem:[%s161 + $0x1b8] sm:$0xff]
      %v233 = vld [vmem:[%s161 + $0x1c0] sm:$0xff]
      %v234 = vld [vmem:[%s161 + $0x1c8] sm:$0xff]
      %v235 = vld [vmem:[%s161 + $0x1d0] sm:$0xff]
      %v236 = vld [vmem:[%s161 + $0x1d8] sm:$0xff]
      %v237 = vld [vmem:[%s161 + $0x1e0] sm:$0xff]
      %v238 = vld [vmem:[%s161 + $0x1e8] sm:$0xff]
      %v239 = vld [vmem:[%s161 + $0x1f0] sm:$0xff]
      %v240 = vld [vmem:[%s161 + $0x1f8] sm:$0xff]
      %v241 = vld [vmem:[%s168] sm:$0xff]
      %v242 = vld [vmem:[%s168 + $0x8] sm:$0xff]
      %v243 = vld [vmem:[%s168 + $0x10] sm:$0xff]
      %v244 = vld [vmem:[%s168 + $0x18] sm:$0xff]
      %v245 = vld [vmem:[%s168 + $0x20] sm:$0xff]
      %v246 = vld [vmem:[%s168 + $0x28] sm:$0xff]
      %v247 = vld [vmem:[%s168 + $0x30] sm:$0xff]
      %v248 = vld [vmem:[%s168 + $0x38] sm:$0xff]
      %v249 = vld [vmem:[%s168 + $0x40] sm:$0xff]
      %v250 = vld [vmem:[%s168 + $0x48] sm:$0xff]
      %v251 = vld [vmem:[%s168 + $0x50] sm:$0xff]
      %v252 = vld [vmem:[%s168 + $0x58] sm:$0xff]
      %v253 = vld [vmem:[%s168 + $0x60] sm:$0xff]
      %v254 = vld [vmem:[%s168 + $0x68] sm:$0xff]
      %v255 = vld [vmem:[%s168 + $0x70] sm:$0xff]
      %v256 = vld [vmem:[%s168 + $0x78] sm:$0xff]
      %v257 = vld [vmem:[%s168 + $0x80] sm:$0xff]
      %v258 = vld [vmem:[%s168 + $0x88] sm:$0xff]
      %v259 = vld [vmem:[%s168 + $0x90] sm:$0xff]
      %v260 = vld [vmem:[%s168 + $0x98] sm:$0xff]
      %v261 = vld [vmem:[%s168 + $0xa0] sm:$0xff]
      %v262 = vld [vmem:[%s168 + $0xa8] sm:$0xff]
      %v263 = vld [vmem:[%s168 + $0xb0] sm:$0xff]
      %v264 = vld [vmem:[%s168 + $0xb8] sm:$0xff]
      %v265 = vld [vmem:[%s168 + $0xc0] sm:$0xff]
      %v266 = vld [vmem:[%s168 + $0xc8] sm:$0xff]
      %v267 = vld [vmem:[%s168 + $0xd0] sm:$0xff]
      %v268 = vld [vmem:[%s168 + $0xd8] sm:$0xff]
      %v269 = vld [vmem:[%s168 + $0xe0] sm:$0xff]
      %v270 = vld [vmem:[%s168 + $0xe8] sm:$0xff]
      %v271 = vld [vmem:[%s168 + $0xf0] sm:$0xff]
      %v272 = vld [vmem:[%s168 + $0xf8] sm:$0xff]
      %v273 = vld [vmem:[%s168 + $0x100] sm:$0xff]
      %v274 = vld [vmem:[%s168 + $0x108] sm:$0xff]
      %v275 = vld [vmem:[%s168 + $0x110] sm:$0xff]
      %v276 = vld [vmem:[%s168 + $0x118] sm:$0xff]
      %v277 = vld [vmem:[%s168 + $0x120] sm:$0xff]
      %v278 = vld [vmem:[%s168 + $0x128] sm:$0xff]
      %v279 = vld [vmem:[%s168 + $0x130] sm:$0xff]
      %v280 = vld [vmem:[%s168 + $0x138] sm:$0xff]
      %v281 = vld [vmem:[%s168 + $0x140] sm:$0xff]
      %v282 = vld [vmem:[%s168 + $0x148] sm:$0xff]
      %v283 = vld [vmem:[%s168 + $0x150] sm:$0xff]
      %v284 = vld [vmem:[%s168 + $0x158] sm:$0xff]
      %v285 = vld [vmem:[%s168 + $0x160] sm:$0xff]
      %v286 = vld [vmem:[%s168 + $0x168] sm:$0xff]
      %v287 = vld [vmem:[%s168 + $0x170] sm:$0xff]
      %v288 = vld [vmem:[%s168 + $0x178] sm:$0xff]
      %v289 = vld [vmem:[%s168 + $0x180] sm:$0xff]
      %v290 = vld [vmem:[%s168 + $0x188] sm:$0xff]
      %v291 = vld [vmem:[%s168 + $0x190] sm:$0xff]
      %v292 = vld [vmem:[%s168 + $0x198] sm:$0xff]
      %v293 = vld [vmem:[%s168 + $0x1a0] sm:$0xff]
      %v294 = vld [vmem:[%s168 + $0x1a8] sm:$0xff]
      %v295 = vld [vmem:[%s168 + $0x1b0] sm:$0xff]
      %v296 = vld [vmem:[%s168 + $0x1b8] sm:$0xff]
      %v297 = vld [vmem:[%s168 + $0x1c0] sm:$0xff]
      %v298 = vld [vmem:[%s168 + $0x1c8] sm:$0xff]
      %v299 = vld [vmem:[%s168 + $0x1d0] sm:$0xff]
      %v300 = vld [vmem:[%s168 + $0x1d8] sm:$0xff]
      %v301 = vld [vmem:[%s168 + $0x1e0] sm:$0xff]
      %v302 = vld [vmem:[%s168 + $0x1e8] sm:$0xff]
      %v303 = vld [vmem:[%s168 + $0x1f0] sm:$0xff]
      %v304 = vld [vmem:[%s168 + $0x1f8] sm:$0xff]
      %v305 = vadd.f32 %v177, %v241
      %v306 = vadd.f32 %v178, %v242
      %v307 = vadd.f32 %v179, %v243
      %v308 = vadd.f32 %v180, %v244
      %v309 = vadd.f32 %v181, %v245
      %v310 = vadd.f32 %v182, %v246
      %v311 = vadd.f32 %v183, %v247
      %v312 = vadd.f32 %v184, %v248
      %v313 = vadd.f32 %v185, %v249
      %v314 = vadd.f32 %v186, %v250
      %v315 = vadd.f32 %v187, %v251
      %v316 = vadd.f32 %v188, %v252
      %v317 = vadd.f32 %v189, %v253
      %v318 = vadd.f32 %v190, %v254
      %v319 = vadd.f32 %v191, %v255
      %v320 = vadd.f32 %v192, %v256
      %v321 = vadd.f32 %v193, %v257
      %v322 = vadd.f32 %v194, %v258
      %v323 = vadd.f32 %v195, %v259
      %v324 = vadd.f32 %v196, %v260
      %v325 = vadd.f32 %v197, %v261
      %v326 = vadd.f32 %v198, %v262
      %v327 = vadd.f32 %v199, %v263
      %v328 = vadd.f32 %v200, %v264
      %v329 = vadd.f32 %v201, %v265
      %v330 = vadd.f32 %v202, %v266
      %v331 = vadd.f32 %v203, %v267
      %v332 = vadd.f32 %v204, %v268
      %v333 = vadd.f32 %v205, %v269
      %v334 = vadd.f32 %v206, %v270
      %v335 = vadd.f32 %v207, %v271
      %v336 = vadd.f32 %v208, %v272
      %v337 = vadd.f32 %v209, %v273
      %v338 = vadd.f32 %v210, %v274
      %v339 = vadd.f32 %v211, %v275
      %v340 = vadd.f32 %v212, %v276
      %v341 = vadd.f32 %v213, %v277
      %v342 = vadd.f32 %v214, %v278
      %v343 = vadd.f32 %v215, %v279
      %v344 = vadd.f32 %v216, %v280
      %v345 = vadd.f32 %v217, %v281
      %v346 = vadd.f32 %v218, %v282
      %v347 = vadd.f32 %v219, %v283
      %v348 = vadd.f32 %v220, %v284
      %v349 = vadd.f32 %v221, %v285
      %v350 = vadd.f32 %v222, %v286
      %v351 = vadd.f32 %v223, %v287
      %v352 = vadd.f32 %v224, %v288
      %v353 = vadd.f32 %v225, %v289
      %v354 = vadd.f32 %v226, %v290
      %v355 = vadd.f32 %v227, %v291
      %v356 = vadd.f32 %v228, %v292
      %v357 = vadd.f32 %v229, %v293
      %v358 = vadd.f32 %v230, %v294
      %v359 = vadd.f32 %v231, %v295
      %v360 = vadd.f32 %v232, %v296
      %v361 = vadd.f32 %v233, %v297
      %v362 = vadd.f32 %v234, %v298
      %v363 = vadd.f32 %v235, %v299
      %v364 = vadd.f32 %v236, %v300
      %v365 = vadd.f32 %v237, %v301
      %v366 = vadd.f32 %v238, %v302
      %v367 = vadd.f32 %v239, %v303
      %v368 = vadd.f32 %v240, %v304
      %369 = vst [vmem:[%s175] sm:$0xff] %v305
      %370 = vst [vmem:[%s175 + $0x8] sm:$0xff] %v306
      %371 = vst [vmem:[%s175 + $0x10] sm:$0xff] %v307
      %372 = vst [vmem:[%s175 + $0x18] sm:$0xff] %v308
      %373 = vst [vmem:[%s175 + $0x20] sm:$0xff] %v309
      %374 = vst [vmem:[%s175 + $0x28] sm:$0xff] %v310
      %375 = vst [vmem:[%s175 + $0x30] sm:$0xff] %v311
      %376 = vst [vmem:[%s175 + $0x38] sm:$0xff] %v312
      %377 = vst [vmem:[%s175 + $0x40] sm:$0xff] %v313
      %378 = vst [vmem:[%s175 + $0x48] sm:$0xff] %v314
      %379 = vst [vmem:[%s175 + $0x50] sm:$0xff] %v315
      %380 = vst [vmem:[%s175 + $0x58] sm:$0xff] %v316
      %381 = vst [vmem:[%s175 + $0x60] sm:$0xff] %v317
      %382 = vst [vmem:[%s175 + $0x68] sm:$0xff] %v318
      %383 = vst [vmem:[%s175 + $0x70] sm:$0xff] %v319
      %384 = vst [vmem:[%s175 + $0x78] sm:$0xff] %v320
      %385 = vst [vmem:[%s175 + $0x80] sm:$0xff] %v321
      %386 = vst [vmem:[%s175 + $0x88] sm:$0xff] %v322
      %387 = vst [vmem:[%s175 + $0x90] sm:$0xff] %v323
      %388 = vst [vmem:[%s175 + $0x98] sm:$0xff] %v324
      %389 = vst [vmem:[%s175 + $0xa0] sm:$0xff] %v325
      %390 = vst [vmem:[%s175 + $0xa8] sm:$0xff] %v326
      %391 = vst [vmem:[%s175 + $0xb0] sm:$0xff] %v327
      %392 = vst [vmem:[%s175 + $0xb8] sm:$0xff] %v328
      %393 = vst [vmem:[%s175 + $0xc0] sm:$0xff] %v329
      %394 = vst [vmem:[%s175 + $0xc8] sm:$0xff] %v330
      %395 = vst [vmem:[%s175 + $0xd0] sm:$0xff] %v331
      %396 = vst [vmem:[%s175 + $0xd8] sm:$0xff] %v332
      %397 = vst [vmem:[%s175 + $0xe0] sm:$0xff] %v333
      %398 = vst [vmem:[%s175 + $0xe8] sm:$0xff] %v334
      %399 = vst [vmem:[%s175 + $0xf0] sm:$0xff] %v335
      %400 = vst [vmem:[%s175 + $0xf8] sm:$0xff] %v336
      %401 = vst [vmem:[%s175 + $0x100] sm:$0xff] %v337
      %402 = vst [vmem:[%s175 + $0x108] sm:$0xff] %v338
      %403 = vst [vmem:[%s175 + $0x110] sm:$0xff] %v339
      %404 = vst [vmem:[%s175 + $0x118] sm:$0xff] %v340
      %405 = vst [vmem:[%s175 + $0x120] sm:$0xff] %v341
      %406 = vst [vmem:[%s175 + $0x128] sm:$0xff] %v342
      %407 = vst [vmem:[%s175 + $0x130] sm:$0xff] %v343
      %408 = vst [vmem:[%s175 + $0x138] sm:$0xff] %v344
      %409 = vst [vmem:[%s175 + $0x140] sm:$0xff] %v345
      %410 = vst [vmem:[%s175 + $0x148] sm:$0xff] %v346
      %411 = vst [vmem:[%s175 + $0x150] sm:$0xff] %v347
      %412 = vst [vmem:[%s175 + $0x158] sm:$0xff] %v348
      %413 = vst [vmem:[%s175 + $0x160] sm:$0xff] %v349
      %414 = vst [vmem:[%s175 + $0x168] sm:$0xff] %v350
      %415 = vst [vmem:[%s175 + $0x170] sm:$0xff] %v351
      %416 = vst [vmem:[%s175 + $0x178] sm:$0xff] %v352
      %417 = vst [vmem:[%s175 + $0x180] sm:$0xff] %v353
      %418 = vst [vmem:[%s175 + $0x188] sm:$0xff] %v354
      %419 = vst [vmem:[%s175 + $0x190] sm:$0xff] %v355
      %420 = vst [vmem:[%s175 + $0x198] sm:$0xff] %v356
      %421 = vst [vmem:[%s175 + $0x1a0] sm:$0xff] %v357
      %422 = vst [vmem:[%s175 + $0x1a8] sm:$0xff] %v358
      %423 = vst [vmem:[%s175 + $0x1b0] sm:$0xff] %v359
      %424 = vst [vmem:[%s175 + $0x1b8] sm:$0xff] %v360
      %425 = vst [vmem:[%s175 + $0x1c0] sm:$0xff] %v361
      %426 = vst [vmem:[%s175 + $0x1c8] sm:$0xff] %v362
      %427 = vst [vmem:[%s175 + $0x1d0] sm:$0xff] %v363
      %428 = vst [vmem:[%s175 + $0x1d8] sm:$0xff] %v364
      %429 = vst [vmem:[%s175 + $0x1e0] sm:$0xff] %v365
      %430 = vst [vmem:[%s175 + $0x1e8] sm:$0xff] %v366
      %431 = vst [vmem:[%s175 + $0x1f0] sm:$0xff] %v367
      %432 = vst [vmem:[%s175 + $0x1f8] sm:$0xff] %v368
      %s433 = smul.u32 8, %s13
      %p434 = scmp.lt.s32.totalorder %s433, 15
      %s435 = scalar_select %p434, %s433, 15
      %s436 = smul.addr %s435, 8
      %s437 = smul.addr %s436, 8
      %s438 = scalar_lea.vmem %s2, %s437
      // Predicated region
      $region29: #{local_use_add_forward.5} parent=27 // pred_check
        %p439 = pneg %p83
      $region30: #{local_use_add_forward.5} parent=27 // pred_check_branch
        %441 = sbr.rel (%p439) target = $region32
      $region31: #{local_use_add_forward.5} parent=27 // pred_region
        %s442 = smul.u32 8, %s13
      $region32: #{local_use_add_forward.5} parent=27 // pred_fallthru
        _
    $region28: #{local_use_add_forward.5} parent=5 // pred_fallthru
      _
    %p443 = scmp.le.s32.totalorder 2, %s8
    // Predicated region
    $region33: #{local_use_add_forward.5} parent=5 // pred_check
      %p444 = pneg %p443
    $region34: #{local_use_add_forward.5} parent=5 // pred_check_branch
      %446 = sbr.rel (%p444) target = $region36
    $region35: #{local_use_add_forward.5} parent=5 // pred_region
      %s447 = ssub.s32 %s8, 2
      // Predicated region
      $region37: #{local_use_add_forward.5} parent=35 // pred_check
        %p448 = pneg %p89
      $region38: #{local_use_add_forward.5} parent=35 // pred_check_branch
        %450 = sbr.rel (%p448) target = $region40
      $region39: #{local_use_add_forward.5} parent=35 // pred_region
        %s451 = smul.u32 8, %s14
        %p452 = scmp.lt.s32.totalorder %s451, 15
        %s453 = scalar_select %p452, %s451, 15
        %s454 = smul.addr %s453, 8
        %s455 = smul.addr %s454, 8
        %s456 = scalar_lea.vmem %s2, %s455
      $region40: #{local_use_add_forward.5} parent=35 // pred_fallthru
        _
    $region36: #{local_use_add_forward.5} parent=5 // pred_fallthru
      _
  $region6: #{local_use_add_forward.5} parent=0 // loop_footer
    %s12 = sadd.s32 1, %s8
  $region7: #{local_use_add_forward.5} parent=0 // loop_footer_branch
    %7 = sbr.rel target = $region3
  $region8: #{local_use_add_forward.5} parent=0 // loop_exit
    _

// kernel: local_use_add_forward.6
$region0: #{local_use_add_forward.6}
  #allocation0 [shape = 'u32[]', space=smem, size = 0x4, offset = 0x4, fixed_abs, tag = 'smem constant byte address 0x4 - core index']
  #allocation1 [shape = 'u32[144,128]{1,0:T(1,128)}', space=vmem, size = 0x12000, scoped, tag = 'internal scratch']
  %s0 = inlined_call_operand.vmem [shape: f32[32,1024], index: 0, kind: input, shape index: {}]
  %s1 = inlined_call_operand.vmem [shape: f32[32,1024], index: 1, kind: input, shape index: {}]
  %s2 = inlined_call_operand.vmem [shape: f32[32,1024], index: 2, kind: output, shape index: {}]
  %s3 = sld [smem:[#allocation0]]
  $region41: #{local_use_add_forward.6} parent=0
    _
  %s5 = ssub.s32 1, %s3
  %s6 = scalar_select 0, %s5, %s3
  loop: start=0, step=1, limit=4
  $region2: #{local_use_add_forward.6} parent=0 // loop_pre_header
    _
  $region3: #{local_use_add_forward.6} parent=0 // loop_header
    %s8 = sphi 0, %s12
    %p9 = scmp.ge.s32.totalorder %s8, 4
    %s18 = sphi 0, %s20
    %s21 = sphi 0, %s18
    %s22 = sphi 0, %s21
    %s38 = sphi 0, %s22
    %s44 = sphi 0, %s46
    %s47 = sphi 0, %s44
    %s48 = sphi 0, %s47
    %s64 = sphi 0, %s48
    %s70 = sphi 0, %s72
    %s73 = sphi 0, %s70
    %s74 = sphi 0, %s73
    %s90 = sphi 0, %s74
  $region4: #{local_use_add_forward.6} parent=0 // loop_header_branch
    %11 = sbr.rel (%p9) target = $region8
  $region5: #{local_use_add_forward.6} parent=0 // loop_body
    %s13 = ssub.s32 %s8, 1
    %s14 = ssub.s32 %s8, 2
    %s15 = sadd.s32 %s8, 1
    %s16 = ssub.s32 %s8, %s15
    %p17 = scmp.eq.s32.totalorder %s16, 0
    %s19 = sadd.s32 %s18, 1
    %s20 = scalar_select %p17, %s18, %s19
    %p23 = pneg %p17
    %p24 = scmp.eq.s32.totalorder %s8, 1
    %p25 = por %p23, %p24
    %p26 = scmp.ne.s32.totalorder %s18, %s21
    %p27 = scmp.eq.s32.totalorder %s8, 0
    %p28 = por %p26, %p27
    %p29 = scmp.ne.s32.totalorder %s18, %s21
    %p30 = scmp.eq.s32.totalorder %s13, 1
    %p31 = por %p29, %p30
    %p32 = scmp.ne.s32.totalorder %s21, %s22
    %p33 = scmp.eq.s32.totalorder %s13, 0
    %p34 = por %p32, %p33
    %p35 = scmp.ne.s32.totalorder %s21, %s22
    %p36 = scmp.eq.s32.totalorder %s14, 1
    %p37 = por %p35, %p36
    %p39 = scmp.ne.s32.totalorder %s22, %s38
    %p40 = scmp.eq.s32.totalorder %s14, 0
    %p41 = por %p39, %p40
    %s42 = ssub.s32 %s8, %s15
    %p43 = scmp.eq.s32.totalorder %s42, 0
    %s45 = sadd.s32 %s44, 1
    %s46 = scalar_select %p43, %s44, %s45
    %p49 = pneg %p43
    %p50 = scmp.eq.s32.totalorder %s8, 1
    %p51 = por %p49, %p50
    %p52 = scmp.ne.s32.totalorder %s44, %s47
    %p53 = scmp.eq.s32.totalorder %s8, 0
    %p54 = por %p52, %p53
    %p55 = scmp.ne.s32.totalorder %s44, %s47
    %p56 = scmp.eq.s32.totalorder %s13, 1
    %p57 = por %p55, %p56
    %p58 = scmp.ne.s32.totalorder %s47, %s48
    %p59 = scmp.eq.s32.totalorder %s13, 0
    %p60 = por %p58, %p59
    %p61 = scmp.ne.s32.totalorder %s47, %s48
    %p62 = scmp.eq.s32.totalorder %s14, 1
    %p63 = por %p61, %p62
    %p65 = scmp.ne.s32.totalorder %s48, %s64
    %p66 = scmp.eq.s32.totalorder %s14, 0
    %p67 = por %p65, %p66
    %s68 = ssub.s32 %s8, %s15
    %p69 = scmp.eq.s32.totalorder %s68, 0
    %s71 = sadd.s32 %s70, 1
    %s72 = scalar_select %p69, %s70, %s71
    %p75 = pneg %p69
    %p76 = scmp.eq.s32.totalorder %s8, 1
    %p77 = por %p75, %p76
    %p78 = scmp.ne.s32.totalorder %s70, %s73
    %p79 = scmp.eq.s32.totalorder %s8, 0
    %p80 = por %p78, %p79
    %p81 = scmp.ne.s32.totalorder %s70, %s73
    %p82 = scmp.eq.s32.totalorder %s13, 1
    %p83 = por %p81, %p82
    %p84 = scmp.ne.s32.totalorder %s73, %s74
    %p85 = scmp.eq.s32.totalorder %s13, 0
    %p86 = por %p84, %p85
    %p87 = scmp.ne.s32.totalorder %s73, %s74
    %p88 = scmp.eq.s32.totalorder %s14, 1
    %p89 = por %p87, %p88
    %p91 = scmp.ne.s32.totalorder %s74, %s90
    %p92 = scmp.eq.s32.totalorder %s14, 0
    %p93 = por %p91, %p92
    %p94 = scmp.le.s32.totalorder 1, %s8
    %p95 = scmp.lt.s32.totalorder %s8, 3
    %p96 = pnand %p94, %p95
    %p97 = pneg %p96
    // Predicated region
    $region9: #{local_use_add_forward.6} parent=5 // pred_check
      _
    $region10: #{local_use_add_forward.6} parent=5 // pred_check_branch
      %99 = sbr.rel (%p96) target = $region12
    $region11: #{local_use_add_forward.6} parent=5 // pred_region
      %s100 = ssub.s32 %s8, 1
    $region12: #{local_use_add_forward.6} parent=5 // pred_fallthru
      _
    %p101 = scmp.lt.s32.totalorder %s8, 2
    // Predicated region
    $region13: #{local_use_add_forward.6} parent=5 // pred_check
      %p102 = pneg %p101
    $region14: #{local_use_add_forward.6} parent=5 // pred_check_branch
      %104 = sbr.rel (%p102) target = $region16
    $region15: #{local_use_add_forward.6} parent=5 // pred_region
      // Predicated region
      $region17: #{local_use_add_forward.6} parent=15 // pred_check
        %p105 = pneg %p28
      $region18: #{local_use_add_forward.6} parent=15 // pred_check_branch
        %107 = sbr.rel (%p105) target = $region20
      $region19: #{local_use_add_forward.6} parent=15 // pred_region
        %s108 = smul.u32 2, %s8
        %p109 = scmp.lt.s32.totalorder %s108, 3
        %s110 = scalar_select %p109, %s108, 3
        %s111 = smul.addr %s110, 8
        %s112 = smul.addr %s111, 8
        %s113 = scalar_lea.vmem %s0, %s112
        %s114 = smul.u32 2, %s8
      $region20: #{local_use_add_forward.6} parent=15 // pred_fallthru
        _
      // Predicated region
      $region21: #{local_use_add_forward.6} parent=15 // pred_check
        %p115 = pneg %p54
      $region22: #{local_use_add_forward.6} parent=15 // pred_check_branch
        %117 = sbr.rel (%p115) target = $region24
      $region23: #{local_use_add_forward.6} parent=15 // pred_region
        %s118 = smul.u32 2, %s8
        %p119 = scmp.lt.s32.totalorder %s118, 3
        %s120 = scalar_select %p119, %s118, 3
        %s121 = smul.addr %s120, 8
        %s122 = smul.addr %s121, 8
        %s123 = scalar_lea.vmem %s1, %s122
        %s124 = smul.u32 2, %s8
      $region24: #{local_use_add_forward.6} parent=15 // pred_fallthru
        _
    $region16: #{local_use_add_forward.6} parent=5 // pred_fallthru
      _
    %p125 = scmp.le.s32.totalorder 1, %s8
    %p126 = scmp.lt.s32.totalorder %s8, 3
    %p127 = pnand %p125, %p126
    %p128 = pneg %p127
    // Predicated region
    $region25: #{local_use_add_forward.6} parent=5 // pred_check
      _
    $region26: #{local_use_add_forward.6} parent=5 // pred_check_branch
      %130 = sbr.rel (%p127) target = $region28
    $region27: #{local_use_add_forward.6} parent=5 // pred_region
      %s131 = ssub.s32 %s8, 1
      %s132 = smul.u32 2, %s13
      %p133 = scmp.lt.s32.totalorder %s132, 3
      %s134 = scalar_select %p133, %s132, 3
      %s135 = smul.addr %s134, 8
      %s136 = smul.addr %s135, 8
      %s137 = scalar_lea.vmem %s0, %s136
      %p138 = pneg %p34
      %p139 = pneg %p31
      %s140 = smul.u32 2, %s13
      %p141 = scmp.lt.s32.totalorder %s140, 3
      %s142 = scalar_select %p141, %s140, 3
      %s143 = smul.addr %s142, 8
      %s144 = smul.addr %s143, 8
      %s145 = scalar_lea.vmem %s1, %s144
      %p146 = pneg %p60
      %p147 = pneg %p57
      %p148 = pneg %p86
      %p149 = pneg %p83
      %s150 = smul.u32 2, %s13
      %p151 = scmp.lt.s32.totalorder %s150, 3
      %s152 = scalar_select %p151, %s150, 3
      %s153 = smul.addr %s152, 8
      %s154 = smul.addr %s153, 8
      %s155 = scalar_lea.vmem %s2, %s154
      %s156 = smul.u32 2, %s13
      %p157 = scmp.lt.s32.totalorder %s156, 3
      %s158 = scalar_select %p157, %s156, 3
      %s159 = smul.addr %s158, 8
      %s160 = smul.addr %s159, 8
      %s161 = scalar_lea.vmem %s0, %s160
      %s162 = smul.u32 2, %s13
      %s163 = smul.u32 2, %s13
      %p164 = scmp.lt.s32.totalorder %s163, 3
      %s165 = scalar_select %p164, %s163, 3
      %s166 = smul.addr %s165, 8
      %s167 = smul.addr %s166, 8
      %s168 = scalar_lea.vmem %s1, %s167
      %s169 = smul.u32 2, %s13
      %s170 = smul.u32 2, %s13
      %p171 = scmp.lt.s32.totalorder %s170, 3
      %s172 = scalar_select %p171, %s170, 3
      %s173 = smul.addr %s172, 8
      %s174 = smul.addr %s173, 8
      %s175 = scalar_lea.vmem %s2, %s174
      %s176 = smul.u32 2, %s13
      %v177 = vld [vmem:[%s161] sm:$0xff]
      %v178 = vld [vmem:[%s161 + $0x8] sm:$0xff]
      %v179 = vld [vmem:[%s161 + $0x10] sm:$0xff]
      %v180 = vld [vmem:[%s161 + $0x18] sm:$0xff]
      %v181 = vld [vmem:[%s161 + $0x20] sm:$0xff]
      %v182 = vld [vmem:[%s161 + $0x28] sm:$0xff]
      %v183 = vld [vmem:[%s161 + $0x30] sm:$0xff]
      %v184 = vld [vmem:[%s161 + $0x38] sm:$0xff]
      %v185 = vld [vmem:[%s161 + $0x40] sm:$0xff]
      %v186 = vld [vmem:[%s161 + $0x48] sm:$0xff]
      %v187 = vld [vmem:[%s161 + $0x50] sm:$0xff]
      %v188 = vld [vmem:[%s161 + $0x58] sm:$0xff]
      %v189 = vld [vmem:[%s161 + $0x60] sm:$0xff]
      %v190 = vld [vmem:[%s161 + $0x68] sm:$0xff]
      %v191 = vld [vmem:[%s161 + $0x70] sm:$0xff]
      %v192 = vld [vmem:[%s161 + $0x78] sm:$0xff]
      %v193 = vld [vmem:[%s168] sm:$0xff]
      %v194 = vld [vmem:[%s168 + $0x8] sm:$0xff]
      %v195 = vld [vmem:[%s168 + $0x10] sm:$0xff]
      %v196 = vld [vmem:[%s168 + $0x18] sm:$0xff]
      %v197 = vld [vmem:[%s168 + $0x20] sm:$0xff]
      %v198 = vld [vmem:[%s168 + $0x28] sm:$0xff]
      %v199 = vld [vmem:[%s168 + $0x30] sm:$0xff]
      %v200 = vld [vmem:[%s168 + $0x38] sm:$0xff]
      %v201 = vld [vmem:[%s168 + $0x40] sm:$0xff]
      %v202 = vld [vmem:[%s168 + $0x48] sm:$0xff]
      %v203 = vld [vmem:[%s168 + $0x50] sm:$0xff]
      %v204 = vld [vmem:[%s168 + $0x58] sm:$0xff]
      %v205 = vld [vmem:[%s168 + $0x60] sm:$0xff]
      %v206 = vld [vmem:[%s168 + $0x68] sm:$0xff]
      %v207 = vld [vmem:[%s168 + $0x70] sm:$0xff]
      %v208 = vld [vmem:[%s168 + $0x78] sm:$0xff]
      %v209 = vadd.f32 %v177, %v193
      %v210 = vadd.f32 %v178, %v194
      %v211 = vadd.f32 %v179, %v195
      %v212 = vadd.f32 %v180, %v196
      %v213 = vadd.f32 %v181, %v197
      %v214 = vadd.f32 %v182, %v198
      %v215 = vadd.f32 %v183, %v199
      %v216 = vadd.f32 %v184, %v200
      %v217 = vadd.f32 %v185, %v201
      %v218 = vadd.f32 %v186, %v202
      %v219 = vadd.f32 %v187, %v203
      %v220 = vadd.f32 %v188, %v204
      %v221 = vadd.f32 %v189, %v205
      %v222 = vadd.f32 %v190, %v206
      %v223 = vadd.f32 %v191, %v207
      %v224 = vadd.f32 %v192, %v208
      %225 = vst [vmem:[%s175] sm:$0xff] %v209
      %226 = vst [vmem:[%s175 + $0x8] sm:$0xff] %v210
      %227 = vst [vmem:[%s175 + $0x10] sm:$0xff] %v211
      %228 = vst [vmem:[%s175 + $0x18] sm:$0xff] %v212
      %229 = vst [vmem:[%s175 + $0x20] sm:$0xff] %v213
      %230 = vst [vmem:[%s175 + $0x28] sm:$0xff] %v214
      %231 = vst [vmem:[%s175 + $0x30] sm:$0xff] %v215
      %232 = vst [vmem:[%s175 + $0x38] sm:$0xff] %v216
      %233 = vst [vmem:[%s175 + $0x40] sm:$0xff] %v217
      %234 = vst [vmem:[%s175 + $0x48] sm:$0xff] %v218
      %235 = vst [vmem:[%s175 + $0x50] sm:$0xff] %v219
      %236 = vst [vmem:[%s175 + $0x58] sm:$0xff] %v220
      %237 = vst [vmem:[%s175 + $0x60] sm:$0xff] %v221
      %238 = vst [vmem:[%s175 + $0x68] sm:$0xff] %v222
      %239 = vst [vmem:[%s175 + $0x70] sm:$0xff] %v223
      %240 = vst [vmem:[%s175 + $0x78] sm:$0xff] %v224
      %s241 = smul.u32 2, %s13
      %p242 = scmp.lt.s32.totalorder %s241, 3
      %s243 = scalar_select %p242, %s241, 3
      %s244 = smul.addr %s243, 8
      %s245 = smul.addr %s244, 8
      %s246 = scalar_lea.vmem %s2, %s245
      // Predicated region
      $region29: #{local_use_add_forward.6} parent=27 // pred_check
        %p247 = pneg %p83
      $region30: #{local_use_add_forward.6} parent=27 // pred_check_branch
        %249 = sbr.rel (%p247) target = $region32
      $region31: #{local_use_add_forward.6} parent=27 // pred_region
        %s250 = smul.u32 2, %s13
      $region32: #{local_use_add_forward.6} parent=27 // pred_fallthru
        _
    $region28: #{local_use_add_forward.6} parent=5 // pred_fallthru
      _
    %p251 = scmp.le.s32.totalorder 2, %s8
    // Predicated region
    $region33: #{local_use_add_forward.6} parent=5 // pred_check
      %p252 = pneg %p251
    $region34: #{local_use_add_forward.6} parent=5 // pred_check_branch
      %254 = sbr.rel (%p252) target = $region36
    $region35: #{local_use_add_forward.6} parent=5 // pred_region
      %s255 = ssub.s32 %s8, 2
      // Predicated region
      $region37: #{local_use_add_forward.6} parent=35 // pred_check
        %p256 = pneg %p89
      $region38: #{local_use_add_forward.6} parent=35 // pred_check_branch
        %258 = sbr.rel (%p256) target = $region40
      $region39: #{local_use_add_forward.6} parent=35 // pred_region
        %s259 = smul.u32 2, %s14
        %p260 = scmp.lt.s32.totalorder %s259, 3
        %s261 = scalar_select %p260, %s259, 3
        %s262 = smul.addr %s261, 8
        %s263 = smul.addr %s262, 8
        %s264 = scalar_lea.vmem %s2, %s263
      $region40: #{local_use_add_forward.6} parent=35 // pred_fallthru
        _
    $region36: #{local_use_add_forward.6} parent=5 // pred_fallthru
      _
  $region6: #{local_use_add_forward.6} parent=0 // loop_footer
    %s12 = sadd.s32 1, %s8
  $region7: #{local_use_add_forward.6} parent=0 // loop_footer_branch
    %7 = sbr.rel target = $region3
  $region8: #{local_use_add_forward.6} parent=0 // loop_exit
    _

// kernel: local_use_add_forward.9
$region0: #{local_use_add_forward.9}
  #allocation0 [shape = 'u32[]', space=smem, size = 0x4, offset = 0x4, fixed_abs, tag = 'smem constant byte address 0x4 - core index']
  #allocation1 [shape = 'u32[144,128]{1,0:T(1,128)}', space=vmem, size = 0x12000, scoped, tag = 'internal scratch']
  %s0 = inlined_call_operand.vmem [shape: f32[2,10,5,256], index: 0, kind: input, shape index: {}, may-alias: {0,1,2}]
  %s1 = inlined_call_operand.vmem [shape: f32[2,10,5,256], index: 1, kind: input, shape index: {}, may-alias: {0,1,2}]
  %s2 = inlined_call_operand.vmem [shape: f32[2,10,5,256], index: 2, kind: input, shape index: {}, may-alias: {0,1,2}]
  %s3 = inlined_call_operand.vmem [shape: f32[2,10,5,256], index: 3, kind: input, shape index: {}, may-alias: {3,4,5}]
  %s4 = inlined_call_operand.vmem [shape: f32[2,10,5,256], index: 4, kind: input, shape index: {}, may-alias: {3,4,5}]
  %s5 = inlined_call_operand.vmem [shape: f32[2,10,5,256], index: 5, kind: input, shape index: {}, may-alias: {3,4,5}]
  %s6 = inlined_call_operand.vmem [shape: f32[3,3,256,256], index: 6, kind: input, shape index: {}]
  %s7 = inlined_call_operand.vmem [shape: f32[1,256], index: 7, kind: input, shape index: {}]
  %s8 = inlined_call_operand.vmem [shape: f32[2,4,4,256], index: 8, kind: input, shape index: {}]
  %s9 = inlined_call_operand.hbm [shape: f32[2,4,4,256], index: 9, kind: output, shape index: {}]
  %s10 = sld [smem:[#allocation0]]
  $region69: #{local_use_add_forward.9} parent=0
    _
  %s12 = ssub.s32 1, %s10
  %s13 = scalar_select 0, %s12, %s10
  $region1: #{local_use_add_forward.9} parent=0
    #allocation2 [shape = 'u8[8192]{0}', space=vmem, size = 0x2000, scoped, tag = 'output window, operand 0']
    #allocation3 [shape = 's32[2]{0}', space=sflag, size = 0x8, scoped, tag = 'scoped memory for local_use_add_forward.9']
    %14 = vsyncpa [#allocation3], 0
    %s15 = scalar_lea.sflag [#allocation3], 1
    %16 = vsyncpa %s15, 0
    loop: start=0, step=1, limit=10
    $region2: #{local_use_add_forward.9} parent=1 // loop_pre_header
      _
    $region3: #{local_use_add_forward.9} parent=1 // loop_header
      %s18 = sphi 0, %s22
      %p19 = scmp.ge.s32.totalorder %s18, 10
      %s25 = sphi 0, %s37
      %s26 = sphi 0, %s33
      %s27 = sphi 0, %s25
      %s28 = sphi 0, %s26
      %s29 = sphi 0, %s27
      %s30 = sphi 0, %s28
      %s44 = sphi 0, %s46
      %s47 = sphi 0, %s44
      %s48 = sphi 0, %s47
      %s64 = sphi 0, %s48
      %s76 = sphi 0, %s78
      %s79 = sphi 0, %s76
      %s80 = sphi 0, %s79
      %s96 = sphi 0, %s80
      %s108 = sphi 0, %s110
      %s111 = sphi 0, %s108
      %s112 = sphi 0, %s111
      %s128 = sphi 0, %s112
      %s138 = sphi 0, %s140
      %s141 = sphi 0, %s138
      %s142 = sphi 0, %s141
      %s158 = sphi 0, %s142
      %s170 = sphi 0, %s172
      %s173 = sphi 0, %s170
      %s174 = sphi 0, %s173
      %s190 = sphi 0, %s174
      %s202 = sphi 0, %s204
      %s205 = sphi 0, %s202
      %s206 = sphi 0, %s205
      %s222 = sphi 0, %s206
      %s226 = sphi 0, %s226
      %s228 = sphi 0, %s226
      %s229 = sphi 0, %s228
      %s243 = sphi 0, %s229
      %s247 = sphi 0, %s247
      %s249 = sphi 0, %s247
      %s250 = sphi 0, %s249
      %s264 = sphi 0, %s250
      %s272 = sphi 0, %s274
      %s275 = sphi 0, %s272
      %s276 = sphi 0, %s275
      %s292 = sphi 0, %s276
      %s300 = sphi 0, %s302
      %s303 = sphi 0, %s300
      %s304 = sphi 0, %s303
      %s320 = sphi 0, %s304
    $region4: #{local_use_add_forward.9} parent=1 // loop_header_branch
      %21 = sbr.rel (%p19) target = $region8
    $region5: #{local_use_add_forward.9} parent=1 // loop_body
      %s23 = ssub.s32 %s18, 1
      %s24 = ssub.s32 %s18, 2
      %s31 = sadd.s32 1, %s26
      %p32 = scmp.ge.s32.totalorder %s31, 4
      %s33 = scalar_select %p32, 0, %s31
      %s34 = sadd.s32 1, %s25
      %s35 = scalar_select %p32, %s34, %s25
      %p36 = scmp.ge.s32.totalorder %s35, 2
      %s37 = scalar_select %p36, 0, %s35
      %s38 = smul.u32 %s26, 2
      %s39 = smul.u32 %s33, 2
      %s40 = ssub.s32 %s25, %s37
      %s41 = ssub.s32 %s38, %s39
      %s42 = sor.u32 %s40, %s41
      %p43 = scmp.eq.s32.totalorder %s42, 0
      %s45 = sadd.s32 %s44, 1
      %s46 = scalar_select %p43, %s44, %s45
      %p49 = pneg %p43
      %p50 = scmp.eq.s32.totalorder %s18, 7
      %p51 = por %p49, %p50
      %p52 = scmp.ne.s32.totalorder %s44, %s47
      %p53 = scmp.eq.s32.totalorder %s18, 0
      %p54 = por %p52, %p53
      %p55 = scmp.ne.s32.totalorder %s44, %s47
      %p56 = scmp.eq.s32.totalorder %s23, 7
      %p57 = por %p55, %p56
      %p58 = scmp.ne.s32.totalorder %s47, %s48
      %p59 = scmp.eq.s32.totalorder %s23, 0
      %p60 = por %p58, %p59
      %p61 = scmp.ne.s32.totalorder %s47, %s48
      %p62 = scmp.eq.s32.totalorder %s24, 7
      %p63 = por %p61, %p62
      %p65 = scmp.ne.s32.totalorder %s48, %s64
      %p66 = scmp.eq.s32.totalorder %s24, 0
      %p67 = por %p65, %p66
      %s68 = smul.u32 %s26, 2
      %s69 = sadd.s32 %s68, 1
      %s70 = smul.u32 %s33, 2
      %s71 = sadd.s32 %s70, 1
      %s72 = ssub.s32 %s25, %s37
      %s73 = ssub.s32 %s69, %s71
      %s74 = sor.u32 %s72, %s73
      %p75 = scmp.eq.s32.totalorder %s74, 0
      %s77 = sadd.s32 %s76, 1
      %s78 = scalar_select %p75, %s76, %s77
      %p81 = pneg %p75
      %p82 = scmp.eq.s32.totalorder %s18, 7
      %p83 = por %p81, %p82
      %p84 = scmp.ne.s32.totalorder %s76, %s79
      %p85 = scmp.eq.s32.totalorder %s18, 0
      %p86 = por %p84, %p85
      %p87 = scmp.ne.s32.totalorder %s76, %s79
      %p88 = scmp.eq.s32.totalorder %s23, 7
      %p89 = por %p87, %p88
      %p90 = scmp.ne.s32.totalorder %s79, %s80
      %p91 = scmp.eq.s32.totalorder %s23, 0
      %p92 = por %p90, %p91
      %p93 = scmp.ne.s32.totalorder %s79, %s80
      %p94 = scmp.eq.s32.totalorder %s24, 7
      %p95 = por %p93, %p94
      %p97 = scmp.ne.s32.totalorder %s80, %s96
      %p98 = scmp.eq.s32.totalorder %s24, 0
      %p99 = por %p97, %p98
      %s100 = smul.u32 %s26, 2
      %s101 = sadd.s32 %s100, 2
      %s102 = smul.u32 %s33, 2
      %s103 = sadd.s32 %s102, 2
      %s104 = ssub.s32 %s25, %s37
      %s105 = ssub.s32 %s101, %s103
      %s106 = sor.u32 %s104, %s105
      %p107 = scmp.eq.s32.totalorder %s106, 0
      %s109 = sadd.s32 %s108, 1
      %s110 = scalar_select %p107, %s108, %s109
      %p113 = pneg %p107
      %p114 = scmp.eq.s32.totalorder %s18, 7
      %p115 = por %p113, %p114
      %p116 = scmp.ne.s32.totalorder %s108, %s111
      %p117 = scmp.eq.s32.totalorder %s18, 0
      %p118 = por %p116, %p117
      %p119 = scmp.ne.s32.totalorder %s108, %s111
      %p120 = scmp.eq.s32.totalorder %s23, 7
      %p121 = por %p119, %p120
      %p122 = scmp.ne.s32.totalorder %s111, %s112
      %p123 = scmp.eq.s32.totalorder %s23, 0
      %p124 = por %p122, %p123
      %p125 = scmp.ne.s32.totalorder %s111, %s112
      %p126 = scmp.eq.s32.totalorder %s24, 7
      %p127 = por %p125, %p126
      %p129 = scmp.ne.s32.totalorder %s112, %s128
      %p130 = scmp.eq.s32.totalorder %s24, 0
      %p131 = por %p129, %p130
      %s132 = smul.u32 %s26, 2
      %s133 = smul.u32 %s33, 2
      %s134 = ssub.s32 %s25, %s37
      %s135 = ssub.s32 %s132, %s133
      %s136 = sor.u32 %s134, %s135
      %p137 = scmp.eq.s32.totalorder %s136, 0
      %s139 = sadd.s32 %s138, 1
      %s140 = scalar_select %p137, %s138, %s139
      %p143 = pneg %p137
      %p144 = scmp.eq.s32.totalorder %s18, 7
      %p145 = por %p143, %p144
      %p146 = scmp.ne.s32.totalorder %s138, %s141
      %p147 = scmp.eq.s32.totalorder %s18, 0
      %p148 = por %p146, %p147
      %p149 = scmp.ne.s32.totalorder %s138, %s141
      %p150 = scmp.eq.s32.totalorder %s23, 7
      %p151 = por %p149, %p150
      %p152 = scmp.ne.s32.totalorder %s141, %s142
      %p153 = scmp.eq.s32.totalorder %s23, 0
      %p154 = por %p152, %p153
      %p155 = scmp.ne.s32.totalorder %s141, %s142
      %p156 = scmp.eq.s32.totalorder %s24, 7
      %p157 = por %p155, %p156
      %p159 = scmp.ne.s32.totalorder %s142, %s158
      %p160 = scmp.eq.s32.totalorder %s24, 0
      %p161 = por %p159, %p160
      %s162 = smul.u32 %s26, 2
      %s163 = sadd.s32 %s162, 1
      %s164 = smul.u32 %s33, 2
      %s165 = sadd.s32 %s164, 1
      %s166 = ssub.s32 %s25, %s37
      %s167 = ssub.s32 %s163, %s165
      %s168 = sor.u32 %s166, %s167
      %p169 = scmp.eq.s32.totalorder %s168, 0
      %s171 = sadd.s32 %s170, 1
      %s172 = scalar_select %p169, %s170, %s171
      %p175 = pneg %p169
      %p176 = scmp.eq.s32.totalorder %s18, 7
      %p177 = por %p175, %p176
      %p178 = scmp.ne.s32.totalorder %s170, %s173
      %p179 = scmp.eq.s32.totalorder %s18, 0
      %p180 = por %p178, %p179
      %p181 = scmp.ne.s32.totalorder %s170, %s173
      %p182 = scmp.eq.s32.totalorder %s23, 7
      %p183 = por %p181, %p182
      %p184 = scmp.ne.s32.totalorder %s173, %s174
      %p185 = scmp.eq.s32.totalorder %s23, 0
      %p186 = por %p184, %p185
      %p187 = scmp.ne.s32.totalorder %s173, %s174
      %p188 = scmp.eq.s32.totalorder %s24, 7
      %p189 = por %p187, %p188
      %p191 = scmp.ne.s32.totalorder %s174, %s190
      %p192 = scmp.eq.s32.totalorder %s24, 0
      %p193 = por %p191, %p192
      %s194 = smul.u32 %s26, 2
      %s195 = sadd.s32 %s194, 2
      %s196 = smul.u32 %s33, 2
      %s197 = sadd.s32 %s196, 2
      %s198 = ssub.s32 %s25, %s37
      %s199 = ssub.s32 %s195, %s197
      %s200 = sor.u32 %s198, %s199
      %p201 = scmp.eq.s32.totalorder %s200, 0
      %s203 = sadd.s32 %s202, 1
      %s204 = scalar_select %p201, %s202, %s203
      %p207 = pneg %p201
      %p208 = scmp.eq.s32.totalorder %s18, 7
      %p209 = por %p207, %p208
      %p210 = scmp.ne.s32.totalorder %s202, %s205
      %p211 = scmp.eq.s32.totalorder %s18, 0
      %p212 = por %p210, %p211
      %p213 = scmp.ne.s32.totalorder %s202, %s205
      %p214 = scmp.eq.s32.totalorder %s23, 7
      %p215 = por %p213, %p214
      %p216 = scmp.ne.s32.totalorder %s205, %s206
      %p217 = scmp.eq.s32.totalorder %s23, 0
      %p218 = por %p216, %p217
      %p219 = scmp.ne.s32.totalorder %s205, %s206
      %p220 = scmp.eq.s32.totalorder %s24, 7
      %p221 = por %p219, %p220
      %p223 = scmp.ne.s32.totalorder %s206, %s222
      %p224 = scmp.eq.s32.totalorder %s24, 0
      %p225 = por %p223, %p224
      %s227 = sadd.s32 %s226, 1
      %p230 = scmp.eq.s32.totalorder %s18, 7
      %p231 = scmp.ne.s32.totalorder %s226, %s228
      %p232 = scmp.eq.s32.totalorder %s18, 0
      %p233 = por %p231, %p232
      %p234 = scmp.ne.s32.totalorder %s226, %s228
      %p235 = scmp.eq.s32.totalorder %s23, 7
      %p236 = por %p234, %p235
      %p237 = scmp.ne.s32.totalorder %s228, %s229
      %p238 = scmp.eq.s32.totalorder %s23, 0
      %p239 = por %p237, %p238
      %p240 = scmp.ne.s32.totalorder %s228, %s229
      %p241 = scmp.eq.s32.totalorder %s24, 7
      %p242 = por %p240, %p241
      %p244 = scmp.ne.s32.totalorder %s229, %s243
      %p245 = scmp.eq.s32.totalorder %s24, 0
      %p246 = por %p244, %p245
      %s248 = sadd.s32 %s247, 1
      %p251 = scmp.eq.s32.totalorder %s18, 7
      %p252 = scmp.ne.s32.totalorder %s247, %s249
      %p253 = scmp.eq.s32.totalorder %s18, 0
      %p254 = por %p252, %p253
      %p255 = scmp.ne.s32.totalorder %s247, %s249
      %p256 = scmp.eq.s32.totalorder %s23, 7
      %p257 = por %p255, %p256
      %p258 = scmp.ne.s32.totalorder %s249, %s250
      %p259 = scmp.eq.s32.totalorder %s23, 0
      %p260 = por %p258, %p259
      %p261 = scmp.ne.s32.totalorder %s249, %s250
      %p262 = scmp.eq.s32.totalorder %s24, 7
      %p263 = por %p261, %p262
      %p265 = scmp.ne.s32.totalorder %s250, %s264
      %p266 = scmp.eq.s32.totalorder %s24, 0
      %p267 = por %p265, %p266
      %s268 = ssub.s32 %s25, %s37
      %s269 = ssub.s32 %s26, %s33
      %s270 = sor.u32 %s268, %s269
      %p271 = scmp.eq.s32.totalorder %s270, 0
      %s273 = sadd.s32 %s272, 1
      %s274 = scalar_select %p271, %s272, %s273
      %p277 = pneg %p271
      %p278 = scmp.eq.s32.totalorder %s18, 7
      %p279 = por %p277, %p278
      %p280 = scmp.ne.s32.totalorder %s272, %s275
      %p281 = scmp.eq.s32.totalorder %s18, 0
      %p282 = por %p280, %p281
      %p283 = scmp.ne.s32.totalorder %s272, %s275
      %p284 = scmp.eq.s32.totalorder %s23, 7
      %p285 = por %p283, %p284
      %p286 = scmp.ne.s32.totalorder %s275, %s276
      %p287 = scmp.eq.s32.totalorder %s23, 0
      %p288 = por %p286, %p287
      %p289 = scmp.ne.s32.totalorder %s275, %s276
      %p290 = scmp.eq.s32.totalorder %s24, 7
      %p291 = por %p289, %p290
      %p293 = scmp.ne.s32.totalorder %s276, %s292
      %p294 = scmp.eq.s32.totalorder %s24, 0
      %p295 = por %p293, %p294
      %s296 = ssub.s32 %s25, %s37
      %s297 = ssub.s32 %s26, %s33
      %s298 = sor.u32 %s296, %s297
      %p299 = scmp.eq.s32.totalorder %s298, 0
      %s301 = sadd.s32 %s300, 1
      %s302 = scalar_select %p299, %s300, %s301
      %p305 = pneg %p299
      %p306 = scmp.eq.s32.totalorder %s18, 7
      %p307 = por %p305, %p306
      %p308 = scmp.ne.s32.totalorder %s300, %s303
      %p309 = scmp.eq.s32.totalorder %s18, 0
      %p310 = por %p308, %p309
      %p311 = scmp.ne.s32.totalorder %s300, %s303
      %p312 = scmp.eq.s32.totalorder %s23, 7
      %p313 = por %p311, %p312
      %p314 = scmp.ne.s32.totalorder %s303, %s304
      %p315 = scmp.eq.s32.totalorder %s23, 0
      %p316 = por %p314, %p315
      %p317 = scmp.ne.s32.totalorder %s303, %s304
      %p318 = scmp.eq.s32.totalorder %s24, 7
      %p319 = por %p317, %p318
      %p321 = scmp.ne.s32.totalorder %s304, %s320
      %p322 = scmp.eq.s32.totalorder %s24, 0
      %p323 = por %p321, %p322
      %p324 = scmp.le.s32.totalorder 1, %s18
      %p325 = scmp.lt.s32.totalorder %s18, 9
      %p326 = pnand %p324, %p325
      %p327 = pneg %p326
      // Predicated region
      $region9: #{local_use_add_forward.9} parent=5 // pred_check
        _
      $region10: #{local_use_add_forward.9} parent=5 // pred_check_branch
        %329 = sbr.rel (%p326) target = $region12
      $region11: #{local_use_add_forward.9} parent=5 // pred_region
        %s330 = ssub.s32 %s18, 1
        // Predicated region
        $region13: #{local_use_add_forward.9} parent=11 // pred_check
          %p331 = pneg %p239
        $region14: #{local_use_add_forward.9} parent=11 // pred_check_branch
          %333 = sbr.rel (%p331) target = $region16
        $region15: #{local_use_add_forward.9} parent=11 // pred_region
          _
        $region16: #{local_use_add_forward.9} parent=11 // pred_fallthru
          _
        // Predicated region
        $region17: #{local_use_add_forward.9} parent=11 // pred_check
          %p334 = pneg %p260
        $region18: #{local_use_add_forward.9} parent=11 // pred_check_branch
          %336 = sbr.rel (%p334) target = $region20
        $region19: #{local_use_add_forward.9} parent=11 // pred_region
          _
        $region20: #{local_use_add_forward.9} parent=11 // pred_fallthru
          _
      $region12: #{local_use_add_forward.9} parent=5 // pred_fallthru
        _
      %p337 = scmp.lt.s32.totalorder %s18, 8
      // Predicated region
      $region21: #{local_use_add_forward.9} parent=5 // pred_check
        %p338 = pneg %p337
      $region22: #{local_use_add_forward.9} parent=5 // pred_check_branch
        %340 = sbr.rel (%p338) target = $region24
      $region23: #{local_use_add_forward.9} parent=5 // pred_region
        // Predicated region
        $region25: #{local_use_add_forward.9} parent=23 // pred_check
          %p341 = pneg %p54
        $region26: #{local_use_add_forward.9} parent=23 // pred_check_branch
          %343 = sbr.rel (%p341) target = $region28
        $region27: #{local_use_add_forward.9} parent=23 // pred_region
          %s344 = smul.u32 %s26, 2
          %p345 = scmp.lt.s32.totalorder %s25, 1
          %s346 = scalar_select %p345, %s25, 1
          %p347 = scmp.lt.s32.totalorder %s344, 9
          %s348 = scalar_select %p347, %s344, 9
          %s349 = smul.addr %s348, 2
          %s350 = smul.addr %s346, 20
          %s351 = sadd.s32 %s349, %s350
          %s352 = smul.addr %s351, 8
          %s353 = scalar_lea.vmem %s0, %s352
          %s354 = smul.u32 %s26, 2
        $region28: #{local_use_add_forward.9} parent=23 // pred_fallthru
          _
        // Predicated region
        $region29: #{local_use_add_forward.9} parent=23 // pred_check
          %p355 = pneg %p86
        $region30: #{local_use_add_forward.9} parent=23 // pred_check_branch
          %357 = sbr.rel (%p355) target = $region32
        $region31: #{local_use_add_forward.9} parent=23 // pred_region
          %s358 = smul.u32 %s26, 2
          %s359 = sadd.s32 %s358, 1
          %p360 = scmp.lt.s32.totalorder %s25, 1
          %s361 = scalar_select %p360, %s25, 1
          %p362 = scmp.lt.s32.totalorder %s359, 9
          %s363 = scalar_select %p362, %s359, 9
          %s364 = smul.addr %s363, 2
          %s365 = smul.addr %s361, 20
          %s366 = sadd.s32 %s364, %s365
          %s367 = smul.addr %s366, 8
          %s368 = scalar_lea.vmem %s1, %s367
          %s369 = smul.u32 %s26, 2
          %s370 = sadd.s32 %s369, 1
        $region32: #{local_use_add_forward.9} parent=23 // pred_fallthru
          _
        // Predicated region
        $region33: #{local_use_add_forward.9} parent=23 // pred_check
          %p371 = pneg %p118
        $region34: #{local_use_add_forward.9} parent=23 // pred_check_branch
          %373 = sbr.rel (%p371) target = $region36
        $region35: #{local_use_add_forward.9} parent=23 // pred_region
          %s374 = smul.u32 %s26, 2
          %s375 = sadd.s32 %s374, 2
          %p376 = scmp.lt.s32.totalorder %s25, 1
          %s377 = scalar_select %p376, %s25, 1
          %p378 = scmp.lt.s32.totalorder %s375, 9
          %s379 = scalar_select %p378, %s375, 9
          %s380 = smul.addr %s379, 2
          %s381 = smul.addr %s377, 20
          %s382 = sadd.s32 %s380, %s381
          %s383 = smul.addr %s382, 8
          %s384 = scalar_lea.vmem %s2, %s383
          %s385 = smul.u32 %s26, 2
          %s386 = sadd.s32 %s385, 2
        $region36: #{local_use_add_forward.9} parent=23 // pred_fallthru
          _
        // Predicated region
        $region37: #{local_use_add_forward.9} parent=23 // pred_check
          %p387 = pneg %p148
        $region38: #{local_use_add_forward.9} parent=23 // pred_check_branch
          %389 = sbr.rel (%p387) target = $region40
        $region39: #{local_use_add_forward.9} parent=23 // pred_region
          %s390 = smul.u32 %s26, 2
          %p391 = scmp.lt.s32.totalorder %s25, 1
          %s392 = scalar_select %p391, %s25, 1
          %p393 = scmp.lt.s32.totalorder %s390, 9
          %s394 = scalar_select %p393, %s390, 9
          %s395 = smul.addr %s394, 2
          %s396 = smul.addr %s392, 20
          %s397 = sadd.s32 %s395, %s396
          %s398 = smul.addr %s397, 8
          %s399 = scalar_lea.vmem %s3, %s398
          %s400 = smul.u32 %s26, 2
        $region40: #{local_use_add_forward.9} parent=23 // pred_fallthru
          _
        // Predicated region
        $region41: #{local_use_add_forward.9} parent=23 // pred_check
          %p401 = pneg %p180
        $region42: #{local_use_add_forward.9} parent=23 // pred_check_branch
          %403 = sbr.rel (%p401) target = $region44
        $region43: #{local_use_add_forward.9} parent=23 // pred_region
          %s404 = smul.u32 %s26, 2
          %s405 = sadd.s32 %s404, 1
          %p406 = scmp.lt.s32.totalorder %s25, 1
          %s407 = scalar_select %p406, %s25, 1
          %p408 = scmp.lt.s32.totalorder %s405, 9
          %s409 = scalar_select %p408, %s405, 9
          %s410 = smul.addr %s409, 2
          %s411 = smul.addr %s407, 20
          %s412 = sadd.s32 %s410, %s411
          %s413 = smul.addr %s412, 8
          %s414 = scalar_lea.vmem %s4, %s413
          %s415 = smul.u32 %s26, 2
          %s416 = sadd.s32 %s415, 1
        $region44: #{local_use_add_forward.9} parent=23 // pred_fallthru
          _
        // Predicated region
        $region45: #{local_use_add_forward.9} parent=23 // pred_check
          %p417 = pneg %p212
        $region46: #{local_use_add_forward.9} parent=23 // pred_check_branch
          %419 = sbr.rel (%p417) target = $region48
        $region47: #{local_use_add_forward.9} parent=23 // pred_region
          %s420 = smul.u32 %s26, 2
          %s421 = sadd.s32 %s420, 2
          %p422 = scmp.lt.s32.totalorder %s25, 1
          %s423 = scalar_select %p422, %s25, 1
          %p424 = scmp.lt.s32.totalorder %s421, 9
          %s425 = scalar_select %p424, %s421, 9
          %s426 = smul.addr %s425, 2
          %s427 = smul.addr %s423, 20
          %s428 = sadd.s32 %s426, %s427
          %s429 = smul.addr %s428, 8
          %s430 = scalar_lea.vmem %s5, %s429
          %s431 = smul.u32 %s26, 2
          %s432 = sadd.s32 %s431, 2
        $region48: #{local_use_add_forward.9} parent=23 // pred_fallthru
          _
        // Predicated region
        $region49: #{local_use_add_forward.9} parent=23 // pred_check
          %p433 = pneg %p282
        $region50: #{local_use_add_forward.9} parent=23 // pred_check_branch
          %435 = sbr.rel (%p433) target = $region52
        $region51: #{local_use_add_forward.9} parent=23 // pred_region
          %p436 = scmp.lt.s32.totalorder %s25, 1
          %s437 = scalar_select %p436, %s25, 1
          %p438 = scmp.lt.s32.totalorder %s26, 3
          %s439 = scalar_select %p438, %s26, 3
          %s440 = smul.addr %s439, 2
          %s441 = smul.addr %s437, 8
          %s442 = sadd.s32 %s440, %s441
          %s443 = smul.addr %s442, 4
          %s444 = scalar_lea.vmem %s8, %s443
        $region52: #{local_use_add_forward.9} parent=23 // pred_fallthru
          _
      $region24: #{local_use_add_forward.9} parent=5 // pred_fallthru
        _
      %p445 = scmp.le.s32.totalorder 1, %s18
      %p446 = scmp.lt.s32.totalorder %s18, 9
      %p447 = pnand %p445, %p446
      %p448 = pneg %p447
      // Predicated region
      $region53: #{local_use_add_forward.9} parent=5 // pred_check
        _
      $region54: #{local_use_add_forward.9} parent=5 // pred_check_branch
        %450 = sbr.rel (%p447) target = $region56
      $region55: #{local_use_add_forward.9} parent=5 // pred_region
        %s451 = ssub.s32 %s18, 1
        %s452 = smul.u32 %s28, 2
        %p453 = scmp.lt.s32.totalorder %s27, 1
        %s454 = scalar_select %p453, %s27, 1
        %p455 = scmp.lt.s32.totalorder %s452, 9
        %s456 = scalar_select %p455, %s452, 9
        %s457 = smul.addr %s456, 2
        %s458 = smul.addr %s454, 20
        %s459 = sadd.s32 %s457, %s458
        %s460 = smul.addr %s459, 8
        %s461 = scalar_lea.vmem %s0, %s460
        %p462 = pneg %p60
        %p463 = pneg %p57
        %s464 = smul.u32 %s28, 2
        %s465 = sadd.s32 %s464, 1
        %p466 = scmp.lt.s32.totalorder %s27, 1
        %s467 = scalar_select %p466, %s27, 1
        %p468 = scmp.lt.s32.totalorder %s465, 9
        %s469 = scalar_select %p468, %s465, 9
        %s470 = smul.addr %s469, 2
        %s471 = smul.addr %s467, 20
        %s472 = sadd.s32 %s470, %s471
        %s473 = smul.addr %s472, 8
        %s474 = scalar_lea.vmem %s1, %s473
        %p475 = pneg %p92
        %p476 = pneg %p89
        %s477 = smul.u32 %s28, 2
        %s478 = sadd.s32 %s477, 2
        %p479 = scmp.lt.s32.totalorder %s27, 1
        %s480 = scalar_select %p479, %s27, 1
        %p481 = scmp.lt.s32.totalorder %s478, 9
        %s482 = scalar_select %p481, %s478, 9
        %s483 = smul.addr %s482, 2
        %s484 = smul.addr %s480, 20
        %s485 = sadd.s32 %s483, %s484
        %s486 = smul.addr %s485, 8
        %s487 = scalar_lea.vmem %s2, %s486
        %p488 = pneg %p124
        %p489 = pneg %p121
        %s490 = smul.u32 %s28, 2
        %p491 = scmp.lt.s32.totalorder %s27, 1
        %s492 = scalar_select %p491, %s27, 1
        %p493 = scmp.lt.s32.totalorder %s490, 9
        %s494 = scalar_select %p493, %s490, 9
        %s495 = smul.addr %s494, 2
        %s496 = smul.addr %s492, 20
        %s497 = sadd.s32 %s495, %s496
        %s498 = smul.addr %s497, 8
        %s499 = scalar_lea.vmem %s3, %s498
        %p500 = pneg %p154
        %p501 = pneg %p151
        %s502 = smul.u32 %s28, 2
        %s503 = sadd.s32 %s502, 1
        %p504 = scmp.lt.s32.totalorder %s27, 1
        %s505 = scalar_select %p504, %s27, 1
        %p506 = scmp.lt.s32.totalorder %s503, 9
        %s507 = scalar_select %p506, %s503, 9
        %s508 = smul.addr %s507, 2
        %s509 = smul.addr %s505, 20
        %s510 = sadd.s32 %s508, %s509
        %s511 = smul.addr %s510, 8
        %s512 = scalar_lea.vmem %s4, %s511
        %p513 = pneg %p186
        %p514 = pneg %p183
        %s515 = smul.u32 %s28, 2
        %s516 = sadd.s32 %s515, 2
        %p517 = scmp.lt.s32.totalorder %s27, 1
        %s518 = scalar_select %p517, %s27, 1
        %p519 = scmp.lt.s32.totalorder %s516, 9
        %s520 = scalar_select %p519, %s516, 9
        %s521 = smul.addr %s520, 2
        %s522 = smul.addr %s518, 20
        %s523 = sadd.s32 %s521, %s522
        %s524 = smul.addr %s523, 8
        %s525 = scalar_lea.vmem %s5, %s524
        %p526 = pneg %p218
        %p527 = pneg %p215
        %p528 = pneg %p239
        %p529 = pneg %p236
        %p530 = pneg %p260
        %p531 = pneg %p257
        %p532 = scmp.lt.s32.totalorder %s27, 1
        %s533 = scalar_select %p532, %s27, 1
        %p534 = scmp.lt.s32.totalorder %s28, 3
        %s535 = scalar_select %p534, %s28, 3
        %s536 = smul.addr %s535, 2
        %s537 = smul.addr %s533, 8
        %s538 = sadd.s32 %s536, %s537
        %s539 = smul.addr %s538, 4
        %s540 = scalar_lea.vmem %s8, %s539
        %p541 = pneg %p288
        %p542 = pneg %p285
        %p543 = pneg %p316
        %p544 = pneg %p313
        %s545 = sand.u32 %s303, 1
        %s546 = scalar_lea.sflag [#allocation3], %s545
        %s547 = sand.u32 %s303, 1
        %s548 = smul.addr %s547, 8
        %s549 = scalar_lea.vmem [#allocation2], %s548
        %s550 = smul.u32 %s28, 2
        %p551 = scmp.lt.s32.totalorder %s27, 1
        %s552 = scalar_select %p551, %s27, 1
        %p553 = scmp.lt.s32.totalorder %s550, 9
        %s554 = scalar_select %p553, %s550, 9
        %s555 = smul.addr %s554, 2
        %s556 = smul.addr %s552, 20
        %s557 = sadd.s32 %s555, %s556
        %s558 = smul.addr %s557, 8
        %s559 = scalar_lea.vmem %s0, %s558
        %s560 = smul.u32 %s28, 2
        %s561 = smul.u32 %s28, 2
        %s562 = sadd.s32 %s561, 1
        %p563 = scmp.lt.s32.totalorder %s27, 1
        %s564 = scalar_select %p563, %s27, 1
        %p565 = scmp.lt.s32.totalorder %s562, 9
        %s566 = scalar_select %p565, %s562, 9
        %s567 = smul.addr %s566, 2
        %s568 = smul.addr %s564, 20
        %s569 = sadd.s32 %s567, %s568
        %s570 = smul.addr %s569, 8
        %s571 = scalar_lea.vmem %s1, %s570
        %s572 = smul.u32 %s28, 2
        %s573 = sadd.s32 %s572, 1
        %s574 = smul.u32 %s28, 2
        %s575 = sadd.s32 %s574, 2
        %p576 = scmp.lt.s32.totalorder %s27, 1
        %s577 = scalar_select %p576, %s27, 1
        %p578 = scmp.lt.s32.totalorder %s575, 9
        %s579 = scalar_select %p578, %s575, 9
        %s580 = smul.addr %s579, 2
        %s581 = smul.addr %s577, 20
        %s582 = sadd.s32 %s580, %s581
        %s583 = smul.addr %s582, 8
        %s584 = scalar_lea.vmem %s2, %s583
        %s585 = smul.u32 %s28, 2
        %s586 = sadd.s32 %s585, 2
        %s587 = smul.u32 %s28, 2
        %p588 = scmp.lt.s32.totalorder %s27, 1
        %s589 = scalar_select %p588, %s27, 1
        %p590 = scmp.lt.s32.totalorder %s587, 9
        %s591 = scalar_select %p590, %s587, 9
        %s592 = smul.addr %s591, 2
        %s593 = smul.addr %s589, 20
        %s594 = sadd.s32 %s592, %s593
        %s595 = smul.addr %s594, 8
        %s596 = scalar_lea.vmem %s3, %s595
        %s597 = smul.u32 %s28, 2
        %s598 = smul.u32 %s28, 2
        %s599 = sadd.s32 %s598, 1
        %p600 = scmp.lt.s32.totalorder %s27, 1
        %s601 = scalar_select %p600, %s27, 1
        %p602 = scmp.lt.s32.totalorder %s599, 9
        %s603 = scalar_select %p602, %s599, 9
        %s604 = smul.addr %s603, 2
        %s605 = smul.addr %s601, 20
        %s606 = sadd.s32 %s604, %s605
        %s607 = smul.addr %s606, 8
        %s608 = scalar_lea.vmem %s4, %s607
        %s609 = smul.u32 %s28, 2
        %s610 = sadd.s32 %s609, 1
        %s611 = smul.u32 %s28, 2
        %s612 = sadd.s32 %s611, 2
        %p613 = scmp.lt.s32.totalorder %s27, 1
        %s614 = scalar_select %p613, %s27, 1
        %p615 = scmp.lt.s32.totalorder %s612, 9
        %s616 = scalar_select %p615, %s612, 9
        %s617 = smul.addr %s616, 2
        %s618 = smul.addr %s614, 20
        %s619 = sadd.s32 %s617, %s618
        %s620 = smul.addr %s619, 8
        %s621 = scalar_lea.vmem %s5, %s620
        %s622 = smul.u32 %s28, 2
        %s623 = sadd.s32 %s622, 2
        %p624 = scmp.lt.s32.totalorder %s27, 1
        %s625 = scalar_select %p624, %s27, 1
        %p626 = scmp.lt.s32.totalorder %s28, 3
        %s627 = scalar_select %p626, %s28, 3
        %s628 = smul.addr %s627, 2
        %s629 = smul.addr %s625, 8
        %s630 = sadd.s32 %s628, %s629
        %s631 = smul.addr %s630, 4
        %s632 = scalar_lea.vmem %s8, %s631
        %v633 = vld [vmem:[%s559] sm:$0x1f]
        %v634 = vld [vmem:[%s559 + $0x8] sm:$0x1f]
        %v635 = vld [vmem:[%s596] sm:$0x1f]
        %v636 = vld [vmem:[%s596 + $0x8] sm:$0x1f]
        %v637 = vld [vmem:[%s6] sm:$0xff]
        %v638 = vld [vmem:[%s6 + $0x8] sm:$0xff]
        %v639 = vld [vmem:[%s6 + $0x10] sm:$0xff]
        %v640 = vld [vmem:[%s6 + $0x18] sm:$0xff]
        %v641 = vld [vmem:[%s6 + $0x20] sm:$0xff]
        %v642 = vld [vmem:[%s6 + $0x28] sm:$0xff]
        %v643 = vld [vmem:[%s6 + $0x30] sm:$0xff]
        %v644 = vld [vmem:[%s6 + $0x38] sm:$0xff]
        %v645 = vld [vmem:[%s6 + $0x40] sm:$0xff]
        %v646 = vld [vmem:[%s6 + $0x48] sm:$0xff]
        %v647 = vld [vmem:[%s6 + $0x50] sm:$0xff]
        %v648 = vld [vmem:[%s6 + $0x58] sm:$0xff]
        %v649 = vld [vmem:[%s6 + $0x60] sm:$0xff]
        %v650 = vld [vmem:[%s6 + $0x68] sm:$0xff]
        %v651 = vld [vmem:[%s6 + $0x70] sm:$0xff]
        %v652 = vld [vmem:[%s6 + $0x78] sm:$0xff]
        %v653 = vld [vmem:[%s6 + $0x80] sm:$0xff]
        %v654 = vld [vmem:[%s6 + $0x88] sm:$0xff]
        %v655 = vld [vmem:[%s6 + $0x90] sm:$0xff]
        %v656 = vld [vmem:[%s6 + $0x98] sm:$0xff]
        %v657 = vld [vmem:[%s6 + $0xa0] sm:$0xff]
        %v658 = vld [vmem:[%s6 + $0xa8] sm:$0xff]
        %v659 = vld [vmem:[%s6 + $0xb0] sm:$0xff]
        %v660 = vld [vmem:[%s6 + $0xb8] sm:$0xff]
        %v661 = vld [vmem:[%s6 + $0xc0] sm:$0xff]
        %v662 = vld [vmem:[%s6 + $0xc8] sm:$0xff]
        %v663 = vld [vmem:[%s6 + $0xd0] sm:$0xff]
        %v664 = vld [vmem:[%s6 + $0xd8] sm:$0xff]
        %v665 = vld [vmem:[%s6 + $0xe0] sm:$0xff]
        %v666 = vld [vmem:[%s6 + $0xe8] sm:$0xff]
        %v667 = vld [vmem:[%s6 + $0xf0] sm:$0xff]
        %v668 = vld [vmem:[%s6 + $0xf8] sm:$0xff]
        %v669 = vld [vmem:[%s6 + $0x100] sm:$0xff]
        %v670 = vld [vmem:[%s6 + $0x108] sm:$0xff]
        %v671 = vld [vmem:[%s6 + $0x110] sm:$0xff]
        %v672 = vld [vmem:[%s6 + $0x118] sm:$0xff]
        %v673 = vld [vmem:[%s6 + $0x120] sm:$0xff]
        %v674 = vld [vmem:[%s6 + $0x128] sm:$0xff]
        %v675 = vld [vmem:[%s6 + $0x130] sm:$0xff]
        %v676 = vld [vmem:[%s6 + $0x138] sm:$0xff]
        %v677 = vld [vmem:[%s6 + $0x140] sm:$0xff]
        %v678 = vld [vmem:[%s6 + $0x148] sm:$0xff]
        %v679 = vld [vmem:[%s6 + $0x150] sm:$0xff]
        %v680 = vld [vmem:[%s6 + $0x158] sm:$0xff]
        %v681 = vld [vmem:[%s6 + $0x160] sm:$0xff]
        %v682 = vld [vmem:[%s6 + $0x168] sm:$0xff]
        %v683 = vld [vmem:[%s6 + $0x170] sm:$0xff]
        %v684 = vld [vmem:[%s6 + $0x178] sm:$0xff]
        %v685 = vld [vmem:[%s6 + $0x180] sm:$0xff]
        %v686 = vld [vmem:[%s6 + $0x188] sm:$0xff]
        %v687 = vld [vmem:[%s6 + $0x190] sm:$0xff]
        %v688 = vld [vmem:[%s6 + $0x198] sm:$0xff]
        %v689 = vld [vmem:[%s6 + $0x1a0] sm:$0xff]
        %v690 = vld [vmem:[%s6 + $0x1a8] sm:$0xff]
        %v691 = vld [vmem:[%s6 + $0x1b0] sm:$0xff]
        %v692 = vld [vmem:[%s6 + $0x1b8] sm:$0xff]
        %v693 = vld [vmem:[%s6 + $0x1c0] sm:$0xff]
        %v694 = vld [vmem:[%s6 + $0x1c8] sm:$0xff]
        %v695 = vld [vmem:[%s6 + $0x1d0] sm:$0xff]
        %v696 = vld [vmem:[%s6 + $0x1d8] sm:$0xff]
        %v697 = vld [vmem:[%s6 + $0x1e0] sm:$0xff]
        %v698 = vld [vmem:[%s6 + $0x1e8] sm:$0xff]
        %v699 = vld [vmem:[%s6 + $0x1f0] sm:$0xff]
        %v700 = vld [vmem:[%s6 + $0x1f8] sm:$0xff]
        %s701 = scalar_lea.vmem %s6, 512
        %v702 = vld [vmem:[%s701] sm:$0xff]
        %v703 = vld [vmem:[%s701 + $0x8] sm:$0xff]
        %v704 = vld [vmem:[%s701 + $0x10] sm:$0xff]
        %v705 = vld [vmem:[%s701 + $0x18] sm:$0xff]
        %v706 = vld [vmem:[%s701 + $0x20] sm:$0xff]
        %v707 = vld [vmem:[%s701 + $0x28] sm:$0xff]
        %v708 = vld [vmem:[%s701 + $0x30] sm:$0xff]
        %v709 = vld [vmem:[%s701 + $0x38] sm:$0xff]
        %v710 = vld [vmem:[%s701 + $0x40] sm:$0xff]
        %v711 = vld [vmem:[%s701 + $0x48] sm:$0xff]
        %v712 = vld [vmem:[%s701 + $0x50] sm:$0xff]
        %v713 = vld [vmem:[%s701 + $0x58] sm:$0xff]
        %v714 = vld [vmem:[%s701 + $0x60] sm:$0xff]
        %v715 = vld [vmem:[%s701 + $0x68] sm:$0xff]
        %v716 = vld [vmem:[%s701 + $0x70] sm:$0xff]
        %v717 = vld [vmem:[%s701 + $0x78] sm:$0xff]
        %v718 = vld [vmem:[%s701 + $0x80] sm:$0xff]
        %v719 = vld [vmem:[%s701 + $0x88] sm:$0xff]
        %v720 = vld [vmem:[%s701 + $0x90] sm:$0xff]
        %v721 = vld [vmem:[%s701 + $0x98] sm:$0xff]
        %v722 = vld [vmem:[%s701 + $0xa0] sm:$0xff]
        %v723 = vld [vmem:[%s701 + $0xa8] sm:$0xff]
        %v724 = vld [vmem:[%s701 + $0xb0] sm:$0xff]
        %v725 = vld [vmem:[%s701 + $0xb8] sm:$0xff]
        %v726 = vld [vmem:[%s701 + $0xc0] sm:$0xff]
        %v727 = vld [vmem:[%s701 + $0xc8] sm:$0xff]
        %v728 = vld [vmem:[%s701 + $0xd0] sm:$0xff]
        %v729 = vld [vmem:[%s701 + $0xd8] sm:$0xff]
        %v730 = vld [vmem:[%s701 + $0xe0] sm:$0xff]
        %v731 = vld [vmem:[%s701 + $0xe8] sm:$0xff]
        %v732 = vld [vmem:[%s701 + $0xf0] sm:$0xff]
        %v733 = vld [vmem:[%s701 + $0xf8] sm:$0xff]
        %v734 = vld [vmem:[%s701 + $0x100] sm:$0xff]
        %v735 = vld [vmem:[%s701 + $0x108] sm:$0xff]
        %v736 = vld [vmem:[%s701 + $0x110] sm:$0xff]
        %v737 = vld [vmem:[%s701 + $0x118] sm:$0xff]
        %v738 = vld [vmem:[%s701 + $0x120] sm:$0xff]
        %v739 = vld [vmem:[%s701 + $0x128] sm:$0xff]
        %v740 = vld [vmem:[%s701 + $0x130] sm:$0xff]
        %v741 = vld [vmem:[%s701 + $0x138] sm:$0xff]
        %v742 = vld [vmem:[%s701 + $0x140] sm:$0xff]
        %v743 = vld [vmem:[%s701 + $0x148] sm:$0xff]
        %v744 = vld [vmem:[%s701 + $0x150] sm:$0xff]
        %v745 = vld [vmem:[%s701 + $0x158] sm:$0xff]
        %v746 = vld [vmem:[%s701 + $0x160] sm:$0xff]
        %v747 = vld [vmem:[%s701 + $0x168] sm:$0xff]
        %v748 = vld [vmem:[%s701 + $0x170] sm:$0xff]
        %v749 = vld [vmem:[%s701 + $0x178] sm:$0xff]
        %v750 = vld [vmem:[%s701 + $0x180] sm:$0xff]
        %v751 = vld [vmem:[%s701 + $0x188] sm:$0xff]
        %v752 = vld [vmem:[%s701 + $0x190] sm:$0xff]
        %v753 = vld [vmem:[%s701 + $0x198] sm:$0xff]
        %v754 = vld [vmem:[%s701 + $0x1a0] sm:$0xff]
        %v755 = vld [vmem:[%s701 + $0x1a8] sm:$0xff]
        %v756 = vld [vmem:[%s701 + $0x1b0] sm:$0xff]
        %v757 = vld [vmem:[%s701 + $0x1b8] sm:$0xff]
        %v758 = vld [vmem:[%s701 + $0x1c0] sm:$0xff]
        %v759 = vld [vmem:[%s701 + $0x1c8] sm:$0xff]
        %v760 = vld [vmem:[%s701 + $0x1d0] sm:$0xff]
        %v761 = vld [vmem:[%s701 + $0x1d8] sm:$0xff]
        %v762 = vld [vmem:[%s701 + $0x1e0] sm:$0xff]
        %v763 = vld [vmem:[%s701 + $0x1e8] sm:$0xff]
        %v764 = vld [vmem:[%s701 + $0x1f0] sm:$0xff]
        %v765 = vld [vmem:[%s701 + $0x1f8] sm:$0xff]
        %766 = vmatprep.subr.mxu0 %v733
        %767 = vmatpush1.msra.mxu0 %v732
        %768 = vmatprep.subr.mxu0 %v731
        %769 = vmatpush1.msra.mxu0 %v730
        %770 = vmatprep.subr.mxu0 %v729
        %771 = vmatpush1.msra.mxu0 %v728
        %772 = vmatprep.subr.mxu0 %v727
        %773 = vmatpush1.msra.mxu0 %v726
        %774 = vmatprep.subr.mxu0 %v725
        %775 = vmatpush1.msra.mxu0 %v724
        %776 = vmatprep.subr.mxu0 %v723
        %777 = vmatpush1.msra.mxu0 %v722
        %778 = vmatprep.subr.mxu0 %v721
        %779 = vmatpush1.msra.mxu0 %v720
        %780 = vmatprep.subr.mxu0 %v719
        %781 = vmatpush1.msra.mxu0 %v718
        %782 = vmatprep.subr.mxu0 %v717
        %783 = vmatpush1.msra.mxu0 %v716
        %784 = vmatprep.subr.mxu0 %v715
        %785 = vmatpush1.msra.mxu0 %v714
        %786 = vmatprep.subr.mxu0 %v713
        %787 = vmatpush1.msra.mxu0 %v712
        %788 = vmatprep.subr.mxu0 %v711
        %789 = vmatpush1.msra.mxu0 %v710
        %790 = vmatprep.subr.mxu0 %v709
        %791 = vmatpush1.msra.mxu0 %v708
        %792 = vmatprep.subr.mxu0 %v707
        %793 = vmatpush1.msra.mxu0 %v706
        %794 = vmatprep.subr.mxu0 %v705
        %795 = vmatpush1.msra.mxu0 %v704
        %796 = vmatprep.subr.mxu0 %v703
        %797 = vmatpush1.msra.mxu0 %v702
        %798 = vmatprep.subr.mxu0 %v765
        %799 = vmatpush2.msra.mxu0 %v764
        %800 = vmatprep.subr.mxu0 %v763
        %801 = vmatpush2.msra.mxu0 %v762
        %802 = vmatprep.subr.mxu0 %v761
        %803 = vmatpush2.msra.mxu0 %v760
        %804 = vmatprep.subr.mxu0 %v759
        %805 = vmatpush2.msra.mxu0 %v758
        %806 = vmatprep.subr.mxu0 %v757
        %807 = vmatpush2.msra.mxu0 %v756
        %808 = vmatprep.subr.mxu0 %v755
        %809 = vmatpush2.msra.mxu0 %v754
        %810 = vmatprep.subr.mxu0 %v753
        %811 = vmatpush2.msra.mxu0 %v752
        %812 = vmatprep.subr.mxu0 %v751
        %813 = vmatpush2.msra.mxu0 %v750
        %814 = vmatprep.subr.mxu0 %v749
        %815 = vmatpush2.msra.mxu0 %v748
        %816 = vmatprep.subr.mxu0 %v747
        %817 = vmatpush2.msra.mxu0 %v746
        %818 = vmatprep.subr.mxu0 %v745
        %819 = vmatpush2.msra.mxu0 %v744
        %820 = vmatprep.subr.mxu0 %v743
        %821 = vmatpush2.msra.mxu0 %v742
        %822 = vmatprep.subr.mxu0 %v741
        %823 = vmatpush2.msra.mxu0 %v740
        %824 = vmatprep.subr.mxu0 %v739
        %825 = vmatpush2.msra.mxu0 %v738
        %826 = vmatprep.subr.mxu0 %v737
        %827 = vmatpush2.msra.mxu0 %v736
        %828 = vmatprep.subr.mxu0 %v735
        %829 = vmatpush2.msra.mxu0 %v734
        %830 = vmatprep.mubr.f32.mxu0 %v636
        %831 = vmatmul.mubr.f32.gmra.mxu0 %v635
        %v832 = vpop.f32.mrf.mxu0
        %v833 = vadd.f32 0.0, %v832
        %v834 = vpop.f32.mrf.mxu0
        %v835 = vadd.f32 0.0, %v834
        %836 = vdwg.mxu0
        %837 = vmatprep.subr.mxu0 %v668
        %838 = vmatpush1.msra.mxu0 %v667
        %839 = vmatprep.subr.mxu0 %v666
        %840 = vmatpush1.msra.mxu0 %v665
        %841 = vmatprep.subr.mxu0 %v664
        %842 = vmatpush1.msra.mxu0 %v663
        %843 = vmatprep.subr.mxu0 %v662
        %844 = vmatpush1.msra.mxu0 %v661
        %845 = vmatprep.subr.mxu0 %v660
        %846 = vmatpush1.msra.mxu0 %v659
        %847 = vmatprep.subr.mxu0 %v658
        %848 = vmatpush1.msra.mxu0 %v657
        %849 = vmatprep.subr.mxu0 %v656
        %850 = vmatpush1.msra.mxu0 %v655
        %851 = vmatprep.subr.mxu0 %v654
        %852 = vmatpush1.msra.mxu0 %v653
        %853 = vmatprep.subr.mxu0 %v652
        %854 = vmatpush1.msra.mxu0 %v651
        %855 = vmatprep.subr.mxu0 %v650
        %856 = vmatpush1.msra.mxu0 %v649
        %857 = vmatprep.subr.mxu0 %v648
        %858 = vmatpush1.msra.mxu0 %v647
        %859 = vmatprep.subr.mxu0 %v646
        %860 = vmatpush1.msra.mxu0 %v645
        %861 = vmatprep.subr.mxu0 %v644
        %862 = vmatpush1.msra.mxu0 %v643
        %863 = vmatprep.subr.mxu0 %v642
        %864 = vmatpush1.msra.mxu0 %v641
        %865 = vmatprep.subr.mxu0 %v640
        %866 = vmatpush1.msra.mxu0 %v639
        %867 = vmatprep.subr.mxu0 %v638
        %868 = vmatpush1.msra.mxu0 %v637
        %869 = vmatprep.subr.mxu0 %v700
        %870 = vmatpush2.msra.mxu0 %v699
        %871 = vmatprep.subr.mxu0 %v698
        %872 = vmatpush2.msra.mxu0 %v697
        %873 = vmatprep.subr.mxu0 %v696
        %874 = vmatpush2.msra.mxu0 %v695
        %875 = vmatprep.subr.mxu0 %v694
        %876 = vmatpush2.msra.mxu0 %v693
        %877 = vmatprep.subr.mxu0 %v692
        %878 = vmatpush2.msra.mxu0 %v691
        %879 = vmatprep.subr.mxu0 %v690
        %880 = vmatpush2.msra.mxu0 %v689
        %881 = vmatprep.subr.mxu0 %v688
        %882 = vmatpush2.msra.mxu0 %v687
        %883 = vmatprep.subr.mxu0 %v686
        %884 = vmatpush2.msra.mxu0 %v685
        %885 = vmatprep.subr.mxu0 %v684
        %886 = vmatpush2.msra.mxu0 %v683
        %887 = vmatprep.subr.mxu0 %v682
        %888 = vmatpush2.msra.mxu0 %v681
        %889 = vmatprep.subr.mxu0 %v680
        %890 = vmatpush2.msra.mxu0 %v679
        %891 = vmatprep.subr.mxu0 %v678
        %892 = vmatpush2.msra.mxu0 %v677
        %893 = vmatprep.subr.mxu0 %v676
        %894 = vmatpush2.msra.mxu0 %v675
        %895 = vmatprep.subr.mxu0 %v674
        %896 = vmatpush2.msra.mxu0 %v673
        %897 = vmatprep.subr.mxu0 %v672
        %898 = vmatpush2.msra.mxu0 %v671
        %899 = vmatprep.subr.mxu0 %v670
        %900 = vmatpush2.msra.mxu0 %v669
        %901 = vmatprep.mubr.f32.mxu0 %v634
        %902 = vmatmul.mubr.f32.gmra.mxu0 %v633
        %v903 = vpop.f32.mrf.mxu0
        %v904 = vadd.f32 %v833, %v903
        %v905 = vpop.f32.mrf.mxu0
        %v906 = vadd.f32 %v835, %v905
        %907 = vdwg.mxu0
        %s908 = scalar_lea.vmem %s6, 1024
        %v909 = vld [vmem:[%s908] sm:$0xff]
        %v910 = vld [vmem:[%s908 + $0x8] sm:$0xff]
        %v911 = vld [vmem:[%s908 + $0x10] sm:$0xff]
        %v912 = vld [vmem:[%s908 + $0x18] sm:$0xff]
        %v913 = vld [vmem:[%s908 + $0x20] sm:$0xff]
        %v914 = vld [vmem:[%s908 + $0x28] sm:$0xff]
        %v915 = vld [vmem:[%s908 + $0x30] sm:$0xff]
        %v916 = vld [vmem:[%s908 + $0x38] sm:$0xff]
        %v917 = vld [vmem:[%s908 + $0x40] sm:$0xff]
        %v918 = vld [vmem:[%s908 + $0x48] sm:$0xff]
        %v919 = vld [vmem:[%s908 + $0x50] sm:$0xff]
        %v920 = vld [vmem:[%s908 + $0x58] sm:$0xff]
        %v921 = vld [vmem:[%s908 + $0x60] sm:$0xff]
        %v922 = vld [vmem:[%s908 + $0x68] sm:$0xff]
        %v923 = vld [vmem:[%s908 + $0x70] sm:$0xff]
        %v924 = vld [vmem:[%s908 + $0x78] sm:$0xff]
        %v925 = vld [vmem:[%s908 + $0x80] sm:$0xff]
        %v926 = vld [vmem:[%s908 + $0x88] sm:$0xff]
        %v927 = vld [vmem:[%s908 + $0x90] sm:$0xff]
        %v928 = vld [vmem:[%s908 + $0x98] sm:$0xff]
        %v929 = vld [vmem:[%s908 + $0xa0] sm:$0xff]
        %v930 = vld [vmem:[%s908 + $0xa8] sm:$0xff]
        %v931 = vld [vmem:[%s908 + $0xb0] sm:$0xff]
        %v932 = vld [vmem:[%s908 + $0xb8] sm:$0xff]
        %v933 = vld [vmem:[%s908 + $0xc0] sm:$0xff]
        %v934 = vld [vmem:[%s908 + $0xc8] sm:$0xff]
        %v935 = vld [vmem:[%s908 + $0xd0] sm:$0xff]
        %v936 = vld [vmem:[%s908 + $0xd8] sm:$0xff]
        %v937 = vld [vmem:[%s908 + $0xe0] sm:$0xff]
        %v938 = vld [vmem:[%s908 + $0xe8] sm:$0xff]
        %v939 = vld [vmem:[%s908 + $0xf0] sm:$0xff]
        %v940 = vld [vmem:[%s908 + $0xf8] sm:$0xff]
        %v941 = vld [vmem:[%s908 + $0x100] sm:$0xff]
        %v942 = vld [vmem:[%s908 + $0x108] sm:$0xff]
        %v943 = vld [vmem:[%s908 + $0x110] sm:$0xff]
        %v944 = vld [vmem:[%s908 + $0x118] sm:$0xff]
        %v945 = vld [vmem:[%s908 + $0x120] sm:$0xff]
        %v946 = vld [vmem:[%s908 + $0x128] sm:$0xff]
        %v947 = vld [vmem:[%s908 + $0x130] sm:$0xff]
        %v948 = vld [vmem:[%s908 + $0x138] sm:$0xff]
        %v949 = vld [vmem:[%s908 + $0x140] sm:$0xff]
        %v950 = vld [vmem:[%s908 + $0x148] sm:$0xff]
        %v951 = vld [vmem:[%s908 + $0x150] sm:$0xff]
        %v952 = vld [vmem:[%s908 + $0x158] sm:$0xff]
        %v953 = vld [vmem:[%s908 + $0x160] sm:$0xff]
        %v954 = vld [vmem:[%s908 + $0x168] sm:$0xff]
        %v955 = vld [vmem:[%s908 + $0x170] sm:$0xff]
        %v956 = vld [vmem:[%s908 + $0x178] sm:$0xff]
        %v957 = vld [vmem:[%s908 + $0x180] sm:$0xff]
        %v958 = vld [vmem:[%s908 + $0x188] sm:$0xff]
        %v959 = vld [vmem:[%s908 + $0x190] sm:$0xff]
        %v960 = vld [vmem:[%s908 + $0x198] sm:$0xff]
        %v961 = vld [vmem:[%s908 + $0x1a0] sm:$0xff]
        %v962 = vld [vmem:[%s908 + $0x1a8] sm:$0xff]
        %v963 = vld [vmem:[%s908 + $0x1b0] sm:$0xff]
        %v964 = vld [vmem:[%s908 + $0x1b8] sm:$0xff]
        %v965 = vld [vmem:[%s908 + $0x1c0] sm:$0xff]
        %v966 = vld [vmem:[%s908 + $0x1c8] sm:$0xff]
        %v967 = vld [vmem:[%s908 + $0x1d0] sm:$0xff]
        %v968 = vld [vmem:[%s908 + $0x1d8] sm:$0xff]
        %v969 = vld [vmem:[%s908 + $0x1e0] sm:$0xff]
        %v970 = vld [vmem:[%s908 + $0x1e8] sm:$0xff]
        %v971 = vld [vmem:[%s908 + $0x1f0] sm:$0xff]
        %v972 = vld [vmem:[%s908 + $0x1f8] sm:$0xff]
        %v975 = vrot.slane %v633, 1
        %v976 = vrot.slane %v634, 1
        %979 = vmatprep.subr.mxu0 %v940
        %980 = vmatpush1.msra.mxu0 %v939
        %981 = vmatprep.subr.mxu0 %v938
        %982 = vmatpush1.msra.mxu0 %v937
        %983 = vmatprep.subr.mxu0 %v936
        %984 = vmatpush1.msra.mxu0 %v935
        %985 = vmatprep.subr.mxu0 %v934
        %986 = vmatpush1.msra.mxu0 %v933
        %987 = vmatprep.subr.mxu0 %v932
        %988 = vmatpush1.msra.mxu0 %v931
        %989 = vmatprep.subr.mxu0 %v930
        %990 = vmatpush1.msra.mxu0 %v929
        %991 = vmatprep.subr.mxu0 %v928
        %992 = vmatpush1.msra.mxu0 %v927
        %993 = vmatprep.subr.mxu0 %v926
        %994 = vmatpush1.msra.mxu0 %v925
        %995 = vmatprep.subr.mxu0 %v924
        %996 = vmatpush1.msra.mxu0 %v923
        %997 = vmatprep.subr.mxu0 %v922
        %998 = vmatpush1.msra.mxu0 %v921
        %999 = vmatprep.subr.mxu0 %v920
        %1000 = vmatpush1.msra.mxu0 %v919
        %1001 = vmatprep.subr.mxu0 %v918
        %1002 = vmatpush1.msra.mxu0 %v917
        %1003 = vmatprep.subr.mxu0 %v916
        %1004 = vmatpush1.msra.mxu0 %v915
        %1005 = vmatprep.subr.mxu0 %v914
        %1006 = vmatpush1.msra.mxu0 %v913
        %1007 = vmatprep.subr.mxu0 %v912
        %1008 = vmatpush1.msra.mxu0 %v911
        %1009 = vmatprep.subr.mxu0 %v910
        %1010 = vmatpush1.msra.mxu0 %v909
        %1011 = vmatprep.subr.mxu0 %v972
        %1012 = vmatpush2.msra.mxu0 %v971
        %1013 = vmatprep.subr.mxu0 %v970
        %1014 = vmatpush2.msra.mxu0 %v969
        %1015 = vmatprep.subr.mxu0 %v968
        %1016 = vmatpush2.msra.mxu0 %v967
        %1017 = vmatprep.subr.mxu0 %v966
        %1018 = vmatpush2.msra.mxu0 %v965
        %1019 = vmatprep.subr.mxu0 %v964
        %1020 = vmatpush2.msra.mxu0 %v963
        %1021 = vmatprep.subr.mxu0 %v962
        %1022 = vmatpush2.msra.mxu0 %v961
        %1023 = vmatprep.subr.mxu0 %v960
        %1024 = vmatpush2.msra.mxu0 %v959
        %1025 = vmatprep.subr.mxu0 %v958
        %1026 = vmatpush2.msra.mxu0 %v957
        %1027 = vmatprep.subr.mxu0 %v956
        %1028 = vmatpush2.msra.mxu0 %v955
        %1029 = vmatprep.subr.mxu0 %v954
        %1030 = vmatpush2.msra.mxu0 %v953
        %1031 = vmatprep.subr.mxu0 %v952
        %1032 = vmatpush2.msra.mxu0 %v951
        %1033 = vmatprep.subr.mxu0 %v950
        %1034 = vmatpush2.msra.mxu0 %v949
        %1035 = vmatprep.subr.mxu0 %v948
        %1036 = vmatpush2.msra.mxu0 %v947
        %1037 = vmatprep.subr.mxu0 %v946
        %1038 = vmatpush2.msra.mxu0 %v945
        %1039 = vmatprep.subr.mxu0 %v944
        %1040 = vmatpush2.msra.mxu0 %v943
        %1041 = vmatprep.subr.mxu0 %v942
        %1042 = vmatpush2.msra.mxu0 %v941
        %1043 = vmatprep.mubr.f32.mxu0 %v976
        %1044 = vmatmul.mubr.f32.gmra.mxu0 %v975
        %v1045 = vpop.f32.mrf.mxu0
        %v1046 = vadd.f32 0.0, %v1045
        %v1047 = vpop.f32.mrf.mxu0
        %v1048 = vadd.f32 0.0, %v1047
        %1049 = vdwg.mxu0
        %v1050 = vadd.f32 %v904, %v1046
        %v1051 = vadd.f32 %v906, %v1048
        %v1052 = vld [vmem:[%s571] sm:$0x1f]
        %v1053 = vld [vmem:[%s571 + $0x8] sm:$0x1f]
        %v1054 = vld [vmem:[%s608] sm:$0x1f]
        %v1055 = vld [vmem:[%s608 + $0x8] sm:$0x1f]
        %s1056 = scalar_lea.vmem %s6, 1536
        %v1057 = vld [vmem:[%s1056] sm:$0xff]
        %v1058 = vld [vmem:[%s1056 + $0x8] sm:$0xff]
        %v1059 = vld [vmem:[%s1056 + $0x10] sm:$0xff]
        %v1060 = vld [vmem:[%s1056 + $0x18] sm:$0xff]
        %v1061 = vld [vmem:[%s1056 + $0x20] sm:$0xff]
        %v1062 = vld [vmem:[%s1056 + $0x28] sm:$0xff]
        %v1063 = vld [vmem:[%s1056 + $0x30] sm:$0xff]
        %v1064 = vld [vmem:[%s1056 + $0x38] sm:$0xff]
        %v1065 = vld [vmem:[%s1056 + $0x40] sm:$0xff]
        %v1066 = vld [vmem:[%s1056 + $0x48] sm:$0xff]
        %v1067 = vld [vmem:[%s1056 + $0x50] sm:$0xff]
        %v1068 = vld [vmem:[%s1056 + $0x58] sm:$0xff]
        %v1069 = vld [vmem:[%s1056 + $0x60] sm:$0xff]
        %v1070 = vld [vmem:[%s1056 + $0x68] sm:$0xff]
        %v1071 = vld [vmem:[%s1056 + $0x70] sm:$0xff]
        %v1072 = vld [vmem:[%s1056 + $0x78] sm:$0xff]
        %v1073 = vld [vmem:[%s1056 + $0x80] sm:$0xff]
        %v1074 = vld [vmem:[%s1056 + $0x88] sm:$0xff]
        %v1075 = vld [vmem:[%s1056 + $0x90] sm:$0xff]
        %v1076 = vld [vmem:[%s1056 + $0x98] sm:$0xff]
        %v1077 = vld [vmem:[%s1056 + $0xa0] sm:$0xff]
        %v1078 = vld [vmem:[%s1056 + $0xa8] sm:$0xff]
        %v1079 = vld [vmem:[%s1056 + $0xb0] sm:$0xff]
        %v1080 = vld [vmem:[%s1056 + $0xb8] sm:$0xff]
        %v1081 = vld [vmem:[%s1056 + $0xc0] sm:$0xff]
        %v1082 = vld [vmem:[%s1056 + $0xc8] sm:$0xff]
        %v1083 = vld [vmem:[%s1056 + $0xd0] sm:$0xff]
        %v1084 = vld [vmem:[%s1056 + $0xd8] sm:$0xff]
        %v1085 = vld [vmem:[%s1056 + $0xe0] sm:$0xff]
        %v1086 = vld [vmem:[%s1056 + $0xe8] sm:$0xff]
        %v1087 = vld [vmem:[%s1056 + $0xf0] sm:$0xff]
        %v1088 = vld [vmem:[%s1056 + $0xf8] sm:$0xff]
        %v1089 = vld [vmem:[%s1056 + $0x100] sm:$0xff]
        %v1090 = vld [vmem:[%s1056 + $0x108] sm:$0xff]
        %v1091 = vld [vmem:[%s1056 + $0x110] sm:$0xff]
        %v1092 = vld [vmem:[%s1056 + $0x118] sm:$0xff]
        %v1093 = vld [vmem:[%s1056 + $0x120] sm:$0xff]
        %v1094 = vld [vmem:[%s1056 + $0x128] sm:$0xff]
        %v1095 = vld [vmem:[%s1056 + $0x130] sm:$0xff]
        %v1096 = vld [vmem:[%s1056 + $0x138] sm:$0xff]
        %v1097 = vld [vmem:[%s1056 + $0x140] sm:$0xff]
        %v1098 = vld [vmem:[%s1056 + $0x148] sm:$0xff]
        %v1099 = vld [vmem:[%s1056 + $0x150] sm:$0xff]
        %v1100 = vld [vmem:[%s1056 + $0x158] sm:$0xff]
        %v1101 = vld [vmem:[%s1056 + $0x160] sm:$0xff]
        %v1102 = vld [vmem:[%s1056 + $0x168] sm:$0xff]
        %v1103 = vld [vmem:[%s1056 + $0x170] sm:$0xff]
        %v1104 = vld [vmem:[%s1056 + $0x178] sm:$0xff]
        %v1105 = vld [vmem:[%s1056 + $0x180] sm:$0xff]
        %v1106 = vld [vmem:[%s1056 + $0x188] sm:$0xff]
        %v1107 = vld [vmem:[%s1056 + $0x190] sm:$0xff]
        %v1108 = vld [vmem:[%s1056 + $0x198] sm:$0xff]
        %v1109 = vld [vmem:[%s1056 + $0x1a0] sm:$0xff]
        %v1110 = vld [vmem:[%s1056 + $0x1a8] sm:$0xff]
        %v1111 = vld [vmem:[%s1056 + $0x1b0] sm:$0xff]
        %v1112 = vld [vmem:[%s1056 + $0x1b8] sm:$0xff]
        %v1113 = vld [vmem:[%s1056 + $0x1c0] sm:$0xff]
        %v1114 = vld [vmem:[%s1056 + $0x1c8] sm:$0xff]
        %v1115 = vld [vmem:[%s1056 + $0x1d0] sm:$0xff]
        %v1116 = vld [vmem:[%s1056 + $0x1d8] sm:$0xff]
        %v1117 = vld [vmem:[%s1056 + $0x1e0] sm:$0xff]
        %v1118 = vld [vmem:[%s1056 + $0x1e8] sm:$0xff]
        %v1119 = vld [vmem:[%s1056 + $0x1f0] sm:$0xff]
        %v1120 = vld [vmem:[%s1056 + $0x1f8] sm:$0xff]
        %1121 = vmatprep.subr.mxu0 %v1088
        %1122 = vmatpush1.msra.mxu0 %v1087
        %1123 = vmatprep.subr.mxu0 %v1086
        %1124 = vmatpush1.msra.mxu0 %v1085
        %1125 = vmatprep.subr.mxu0 %v1084
        %1126 = vmatpush1.msra.mxu0 %v1083
        %1127 = vmatprep.subr.mxu0 %v1082
        %1128 = vmatpush1.msra.mxu0 %v1081
        %1129 = vmatprep.subr.mxu0 %v1080
        %1130 = vmatpush1.msra.mxu0 %v1079
        %1131 = vmatprep.subr.mxu0 %v1078
        %1132 = vmatpush1.msra.mxu0 %v1077
        %1133 = vmatprep.subr.mxu0 %v1076
        %1134 = vmatpush1.msra.mxu0 %v1075
        %1135 = vmatprep.subr.mxu0 %v1074
        %1136 = vmatpush1.msra.mxu0 %v1073
        %1137 = vmatprep.subr.mxu0 %v1072
        %1138 = vmatpush1.msra.mxu0 %v1071
        %1139 = vmatprep.subr.mxu0 %v1070
        %1140 = vmatpush1.msra.mxu0 %v1069
        %1141 = vmatprep.subr.mxu0 %v1068
        %1142 = vmatpush1.msra.mxu0 %v1067
        %1143 = vmatprep.subr.mxu0 %v1066
        %1144 = vmatpush1.msra.mxu0 %v1065
        %1145 = vmatprep.subr.mxu0 %v1064
        %1146 = vmatpush1.msra.mxu0 %v1063
        %1147 = vmatprep.subr.mxu0 %v1062
        %1148 = vmatpush1.msra.mxu0 %v1061
        %1149 = vmatprep.subr.mxu0 %v1060
        %1150 = vmatpush1.msra.mxu0 %v1059
        %1151 = vmatprep.subr.mxu0 %v1058
        %1152 = vmatpush1.msra.mxu0 %v1057
        %1153 = vmatprep.subr.mxu0 %v1120
        %1154 = vmatpush2.msra.mxu0 %v1119
        %1155 = vmatprep.subr.mxu0 %v1118
        %1156 = vmatpush2.msra.mxu0 %v1117
        %1157 = vmatprep.subr.mxu0 %v1116
        %1158 = vmatpush2.msra.mxu0 %v1115
        %1159 = vmatprep.subr.mxu0 %v1114
        %1160 = vmatpush2.msra.mxu0 %v1113
        %1161 = vmatprep.subr.mxu0 %v1112
        %1162 = vmatpush2.msra.mxu0 %v1111
        %1163 = vmatprep.subr.mxu0 %v1110
        %1164 = vmatpush2.msra.mxu0 %v1109
        %1165 = vmatprep.subr.mxu0 %v1108
        %1166 = vmatpush2.msra.mxu0 %v1107
        %1167 = vmatprep.subr.mxu0 %v1106
        %1168 = vmatpush2.msra.mxu0 %v1105
        %1169 = vmatprep.subr.mxu0 %v1104
        %1170 = vmatpush2.msra.mxu0 %v1103
        %1171 = vmatprep.subr.mxu0 %v1102
        %1172 = vmatpush2.msra.mxu0 %v1101
        %1173 = vmatprep.subr.mxu0 %v1100
        %1174 = vmatpush2.msra.mxu0 %v1099
        %1175 = vmatprep.subr.mxu0 %v1098
        %1176 = vmatpush2.msra.mxu0 %v1097
        %1177 = vmatprep.subr.mxu0 %v1096
        %1178 = vmatpush2.msra.mxu0 %v1095
        %1179 = vmatprep.subr.mxu0 %v1094
        %1180 = vmatpush2.msra.mxu0 %v1093
        %1181 = vmatprep.subr.mxu0 %v1092
        %1182 = vmatpush2.msra.mxu0 %v1091
        %1183 = vmatprep.subr.mxu0 %v1090
        %1184 = vmatpush2.msra.mxu0 %v1089
        %1185 = vmatprep.mubr.f32.mxu0 %v1053
        %1186 = vmatmul.mubr.f32.gmra.mxu0 %v1052
        %v1187 = vpop.f32.mrf.mxu0
        %v1188 = vadd.f32 0.0, %v1187
        %v1189 = vpop.f32.mrf.mxu0
        %v1190 = vadd.f32 0.0, %v1189
        %1191 = vdwg.mxu0
        %v1192 = vadd.f32 %v1050, %v1188
        %v1193 = vadd.f32 %v1051, %v1190
        %s1194 = scalar_lea.vmem %s6, 2048
        %v1195 = vld [vmem:[%s1194] sm:$0xff]
        %v1196 = vld [vmem:[%s1194 + $0x8] sm:$0xff]
        %v1197 = vld [vmem:[%s1194 + $0x10] sm:$0xff]
        %v1198 = vld [vmem:[%s1194 + $0x18] sm:$0xff]
        %v1199 = vld [vmem:[%s1194 + $0x20] sm:$0xff]
        %v1200 = vld [vmem:[%s1194 + $0x28] sm:$0xff]
        %v1201 = vld [vmem:[%s1194 + $0x30] sm:$0xff]
        %v1202 = vld [vmem:[%s1194 + $0x38] sm:$0xff]
        %v1203 = vld [vmem:[%s1194 + $0x40] sm:$0xff]
        %v1204 = vld [vmem:[%s1194 + $0x48] sm:$0xff]
        %v1205 = vld [vmem:[%s1194 + $0x50] sm:$0xff]
        %v1206 = vld [vmem:[%s1194 + $0x58] sm:$0xff]
        %v1207 = vld [vmem:[%s1194 + $0x60] sm:$0xff]
        %v1208 = vld [vmem:[%s1194 + $0x68] sm:$0xff]
        %v1209 = vld [vmem:[%s1194 + $0x70] sm:$0xff]
        %v1210 = vld [vmem:[%s1194 + $0x78] sm:$0xff]
        %v1211 = vld [vmem:[%s1194 + $0x80] sm:$0xff]
        %v1212 = vld [vmem:[%s1194 + $0x88] sm:$0xff]
        %v1213 = vld [vmem:[%s1194 + $0x90] sm:$0xff]
        %v1214 = vld [vmem:[%s1194 + $0x98] sm:$0xff]
        %v1215 = vld [vmem:[%s1194 + $0xa0] sm:$0xff]
        %v1216 = vld [vmem:[%s1194 + $0xa8] sm:$0xff]
        %v1217 = vld [vmem:[%s1194 + $0xb0] sm:$0xff]
        %v1218 = vld [vmem:[%s1194 + $0xb8] sm:$0xff]
        %v1219 = vld [vmem:[%s1194 + $0xc0] sm:$0xff]
        %v1220 = vld [vmem:[%s1194 + $0xc8] sm:$0xff]
        %v1221 = vld [vmem:[%s1194 + $0xd0] sm:$0xff]
        %v1222 = vld [vmem:[%s1194 + $0xd8] sm:$0xff]
        %v1223 = vld [vmem:[%s1194 + $0xe0] sm:$0xff]
        %v1224 = vld [vmem:[%s1194 + $0xe8] sm:$0xff]
        %v1225 = vld [vmem:[%s1194 + $0xf0] sm:$0xff]
        %v1226 = vld [vmem:[%s1194 + $0xf8] sm:$0xff]
        %v1227 = vld [vmem:[%s1194 + $0x100] sm:$0xff]
        %v1228 = vld [vmem:[%s1194 + $0x108] sm:$0xff]
        %v1229 = vld [vmem:[%s1194 + $0x110] sm:$0xff]
        %v1230 = vld [vmem:[%s1194 + $0x118] sm:$0xff]
        %v1231 = vld [vmem:[%s1194 + $0x120] sm:$0xff]
        %v1232 = vld [vmem:[%s1194 + $0x128] sm:$0xff]
        %v1233 = vld [vmem:[%s1194 + $0x130] sm:$0xff]
        %v1234 = vld [vmem:[%s1194 + $0x138] sm:$0xff]
        %v1235 = vld [vmem:[%s1194 + $0x140] sm:$0xff]
        %v1236 = vld [vmem:[%s1194 + $0x148] sm:$0xff]
        %v1237 = vld [vmem:[%s1194 + $0x150] sm:$0xff]
        %v1238 = vld [vmem:[%s1194 + $0x158] sm:$0xff]
        %v1239 = vld [vmem:[%s1194 + $0x160] sm:$0xff]
        %v1240 = vld [vmem:[%s1194 + $0x168] sm:$0xff]
        %v1241 = vld [vmem:[%s1194 + $0x170] sm:$0xff]
        %v1242 = vld [vmem:[%s1194 + $0x178] sm:$0xff]
        %v1243 = vld [vmem:[%s1194 + $0x180] sm:$0xff]
        %v1244 = vld [vmem:[%s1194 + $0x188] sm:$0xff]
        %v1245 = vld [vmem:[%s1194 + $0x190] sm:$0xff]
        %v1246 = vld [vmem:[%s1194 + $0x198] sm:$0xff]
        %v1247 = vld [vmem:[%s1194 + $0x1a0] sm:$0xff]
        %v1248 = vld [vmem:[%s1194 + $0x1a8] sm:$0xff]
        %v1249 = vld [vmem:[%s1194 + $0x1b0] sm:$0xff]
        %v1250 = vld [vmem:[%s1194 + $0x1b8] sm:$0xff]
        %v1251 = vld [vmem:[%s1194 + $0x1c0] sm:$0xff]
        %v1252 = vld [vmem:[%s1194 + $0x1c8] sm:$0xff]
        %v1253 = vld [vmem:[%s1194 + $0x1d0] sm:$0xff]
        %v1254 = vld [vmem:[%s1194 + $0x1d8] sm:$0xff]
        %v1255 = vld [vmem:[%s1194 + $0x1e0] sm:$0xff]
        %v1256 = vld [vmem:[%s1194 + $0x1e8] sm:$0xff]
        %v1257 = vld [vmem:[%s1194 + $0x1f0] sm:$0xff]
        %v1258 = vld [vmem:[%s1194 + $0x1f8] sm:$0xff]
        %1259 = vmatprep.subr.mxu0 %v1226
        %1260 = vmatpush1.msra.mxu0 %v1225
        %1261 = vmatprep.subr.mxu0 %v1224
        %1262 = vmatpush1.msra.mxu0 %v1223
        %1263 = vmatprep.subr.mxu0 %v1222
        %1264 = vmatpush1.msra.mxu0 %v1221
        %1265 = vmatprep.subr.mxu0 %v1220
        %1266 = vmatpush1.msra.mxu0 %v1219
        %1267 = vmatprep.subr.mxu0 %v1218
        %1268 = vmatpush1.msra.mxu0 %v1217
        %1269 = vmatprep.subr.mxu0 %v1216
        %1270 = vmatpush1.msra.mxu0 %v1215
        %1271 = vmatprep.subr.mxu0 %v1214
        %1272 = vmatpush1.msra.mxu0 %v1213
        %1273 = vmatprep.subr.mxu0 %v1212
        %1274 = vmatpush1.msra.mxu0 %v1211
        %1275 = vmatprep.subr.mxu0 %v1210
        %1276 = vmatpush1.msra.mxu0 %v1209
        %1277 = vmatprep.subr.mxu0 %v1208
        %1278 = vmatpush1.msra.mxu0 %v1207
        %1279 = vmatprep.subr.mxu0 %v1206
        %1280 = vmatpush1.msra.mxu0 %v1205
        %1281 = vmatprep.subr.mxu0 %v1204
        %1282 = vmatpush1.msra.mxu0 %v1203
        %1283 = vmatprep.subr.mxu0 %v1202
        %1284 = vmatpush1.msra.mxu0 %v1201
        %1285 = vmatprep.subr.mxu0 %v1200
        %1286 = vmatpush1.msra.mxu0 %v1199
        %1287 = vmatprep.subr.mxu0 %v1198
        %1288 = vmatpush1.msra.mxu0 %v1197
        %1289 = vmatprep.subr.mxu0 %v1196
        %1290 = vmatpush1.msra.mxu0 %v1195
        %1291 = vmatprep.subr.mxu0 %v1258
        %1292 = vmatpush2.msra.mxu0 %v1257
        %1293 = vmatprep.subr.mxu0 %v1256
        %1294 = vmatpush2.msra.mxu0 %v1255
        %1295 = vmatprep.subr.mxu0 %v1254
        %1296 = vmatpush2.msra.mxu0 %v1253
        %1297 = vmatprep.subr.mxu0 %v1252
        %1298 = vmatpush2.msra.mxu0 %v1251
        %1299 = vmatprep.subr.mxu0 %v1250
        %1300 = vmatpush2.msra.mxu0 %v1249
        %1301 = vmatprep.subr.mxu0 %v1248
        %1302 = vmatpush2.msra.mxu0 %v1247
        %1303 = vmatprep.subr.mxu0 %v1246
        %1304 = vmatpush2.msra.mxu0 %v1245
        %1305 = vmatprep.subr.mxu0 %v1244
        %1306 = vmatpush2.msra.mxu0 %v1243
        %1307 = vmatprep.subr.mxu0 %v1242
        %1308 = vmatpush2.msra.mxu0 %v1241
        %1309 = vmatprep.subr.mxu0 %v1240
        %1310 = vmatpush2.msra.mxu0 %v1239
        %1311 = vmatprep.subr.mxu0 %v1238
        %1312 = vmatpush2.msra.mxu0 %v1237
        %1313 = vmatprep.subr.mxu0 %v1236
        %1314 = vmatpush2.msra.mxu0 %v1235
        %1315 = vmatprep.subr.mxu0 %v1234
        %1316 = vmatpush2.msra.mxu0 %v1233
        %1317 = vmatprep.subr.mxu0 %v1232
        %1318 = vmatpush2.msra.mxu0 %v1231
        %1319 = vmatprep.subr.mxu0 %v1230
        %1320 = vmatpush2.msra.mxu0 %v1229
        %1321 = vmatprep.subr.mxu0 %v1228
        %1322 = vmatpush2.msra.mxu0 %v1227
        %1323 = vmatprep.mubr.f32.mxu0 %v1055
        %1324 = vmatmul.mubr.f32.gmra.mxu0 %v1054
        %v1325 = vpop.f32.mrf.mxu0
        %v1326 = vadd.f32 0.0, %v1325
        %v1327 = vpop.f32.mrf.mxu0
        %v1328 = vadd.f32 0.0, %v1327
        %1329 = vdwg.mxu0
        %v1330 = vadd.f32 %v1192, %v1326
        %v1331 = vadd.f32 %v1193, %v1328
        %s1332 = scalar_lea.vmem %s6, 2560
        %v1333 = vld [vmem:[%s1332] sm:$0xff]
        %v1334 = vld [vmem:[%s1332 + $0x8] sm:$0xff]
        %v1335 = vld [vmem:[%s1332 + $0x10] sm:$0xff]
        %v1336 = vld [vmem:[%s1332 + $0x18] sm:$0xff]
        %v1337 = vld [vmem:[%s1332 + $0x20] sm:$0xff]
        %v1338 = vld [vmem:[%s1332 + $0x28] sm:$0xff]
        %v1339 = vld [vmem:[%s1332 + $0x30] sm:$0xff]
        %v1340 = vld [vmem:[%s1332 + $0x38] sm:$0xff]
        %v1341 = vld [vmem:[%s1332 + $0x40] sm:$0xff]
        %v1342 = vld [vmem:[%s1332 + $0x48] sm:$0xff]
        %v1343 = vld [vmem:[%s1332 + $0x50] sm:$0xff]
        %v1344 = vld [vmem:[%s1332 + $0x58] sm:$0xff]
        %v1345 = vld [vmem:[%s1332 + $0x60] sm:$0xff]
        %v1346 = vld [vmem:[%s1332 + $0x68] sm:$0xff]
        %v1347 = vld [vmem:[%s1332 + $0x70] sm:$0xff]
        %v1348 = vld [vmem:[%s1332 + $0x78] sm:$0xff]
        %v1349 = vld [vmem:[%s1332 + $0x80] sm:$0xff]
        %v1350 = vld [vmem:[%s1332 + $0x88] sm:$0xff]
        %v1351 = vld [vmem:[%s1332 + $0x90] sm:$0xff]
        %v1352 = vld [vmem:[%s1332 + $0x98] sm:$0xff]
        %v1353 = vld [vmem:[%s1332 + $0xa0] sm:$0xff]
        %v1354 = vld [vmem:[%s1332 + $0xa8] sm:$0xff]
        %v1355 = vld [vmem:[%s1332 + $0xb0] sm:$0xff]
        %v1356 = vld [vmem:[%s1332 + $0xb8] sm:$0xff]
        %v1357 = vld [vmem:[%s1332 + $0xc0] sm:$0xff]
        %v1358 = vld [vmem:[%s1332 + $0xc8] sm:$0xff]
        %v1359 = vld [vmem:[%s1332 + $0xd0] sm:$0xff]
        %v1360 = vld [vmem:[%s1332 + $0xd8] sm:$0xff]
        %v1361 = vld [vmem:[%s1332 + $0xe0] sm:$0xff]
        %v1362 = vld [vmem:[%s1332 + $0xe8] sm:$0xff]
        %v1363 = vld [vmem:[%s1332 + $0xf0] sm:$0xff]
        %v1364 = vld [vmem:[%s1332 + $0xf8] sm:$0xff]
        %v1365 = vld [vmem:[%s1332 + $0x100] sm:$0xff]
        %v1366 = vld [vmem:[%s1332 + $0x108] sm:$0xff]
        %v1367 = vld [vmem:[%s1332 + $0x110] sm:$0xff]
        %v1368 = vld [vmem:[%s1332 + $0x118] sm:$0xff]
        %v1369 = vld [vmem:[%s1332 + $0x120] sm:$0xff]
        %v1370 = vld [vmem:[%s1332 + $0x128] sm:$0xff]
        %v1371 = vld [vmem:[%s1332 + $0x130] sm:$0xff]
        %v1372 = vld [vmem:[%s1332 + $0x138] sm:$0xff]
        %v1373 = vld [vmem:[%s1332 + $0x140] sm:$0xff]
        %v1374 = vld [vmem:[%s1332 + $0x148] sm:$0xff]
        %v1375 = vld [vmem:[%s1332 + $0x150] sm:$0xff]
        %v1376 = vld [vmem:[%s1332 + $0x158] sm:$0xff]
        %v1377 = vld [vmem:[%s1332 + $0x160] sm:$0xff]
        %v1378 = vld [vmem:[%s1332 + $0x168] sm:$0xff]
        %v1379 = vld [vmem:[%s1332 + $0x170] sm:$0xff]
        %v1380 = vld [vmem:[%s1332 + $0x178] sm:$0xff]
        %v1381 = vld [vmem:[%s1332 + $0x180] sm:$0xff]
        %v1382 = vld [vmem:[%s1332 + $0x188] sm:$0xff]
        %v1383 = vld [vmem:[%s1332 + $0x190] sm:$0xff]
        %v1384 = vld [vmem:[%s1332 + $0x198] sm:$0xff]
        %v1385 = vld [vmem:[%s1332 + $0x1a0] sm:$0xff]
        %v1386 = vld [vmem:[%s1332 + $0x1a8] sm:$0xff]
        %v1387 = vld [vmem:[%s1332 + $0x1b0] sm:$0xff]
        %v1388 = vld [vmem:[%s1332 + $0x1b8] sm:$0xff]
        %v1389 = vld [vmem:[%s1332 + $0x1c0] sm:$0xff]
        %v1390 = vld [vmem:[%s1332 + $0x1c8] sm:$0xff]
        %v1391 = vld [vmem:[%s1332 + $0x1d0] sm:$0xff]
        %v1392 = vld [vmem:[%s1332 + $0x1d8] sm:$0xff]
        %v1393 = vld [vmem:[%s1332 + $0x1e0] sm:$0xff]
        %v1394 = vld [vmem:[%s1332 + $0x1e8] sm:$0xff]
        %v1395 = vld [vmem:[%s1332 + $0x1f0] sm:$0xff]
        %v1396 = vld [vmem:[%s1332 + $0x1f8] sm:$0xff]
        %v1399 = vrot.slane %v1052, 1
        %v1400 = vrot.slane %v1053, 1
        %1403 = vmatprep.subr.mxu0 %v1364
        %1404 = vmatpush1.msra.mxu0 %v1363
        %1405 = vmatprep.subr.mxu0 %v1362
        %1406 = vmatpush1.msra.mxu0 %v1361
        %1407 = vmatprep.subr.mxu0 %v1360
        %1408 = vmatpush1.msra.mxu0 %v1359
        %1409 = vmatprep.subr.mxu0 %v1358
        %1410 = vmatpush1.msra.mxu0 %v1357
        %1411 = vmatprep.subr.mxu0 %v1356
        %1412 = vmatpush1.msra.mxu0 %v1355
        %1413 = vmatprep.subr.mxu0 %v1354
        %1414 = vmatpush1.msra.mxu0 %v1353
        %1415 = vmatprep.subr.mxu0 %v1352
        %1416 = vmatpush1.msra.mxu0 %v1351
        %1417 = vmatprep.subr.mxu0 %v1350
        %1418 = vmatpush1.msra.mxu0 %v1349
        %1419 = vmatprep.subr.mxu0 %v1348
        %1420 = vmatpush1.msra.mxu0 %v1347
        %1421 = vmatprep.subr.mxu0 %v1346
        %1422 = vmatpush1.msra.mxu0 %v1345
        %1423 = vmatprep.subr.mxu0 %v1344
        %1424 = vmatpush1.msra.mxu0 %v1343
        %1425 = vmatprep.subr.mxu0 %v1342
        %1426 = vmatpush1.msra.mxu0 %v1341
        %1427 = vmatprep.subr.mxu0 %v1340
        %1428 = vmatpush1.msra.mxu0 %v1339
        %1429 = vmatprep.subr.mxu0 %v1338
        %1430 = vmatpush1.msra.mxu0 %v1337
        %1431 = vmatprep.subr.mxu0 %v1336
        %1432 = vmatpush1.msra.mxu0 %v1335
        %1433 = vmatprep.subr.mxu0 %v1334
        %1434 = vmatpush1.msra.mxu0 %v1333
        %1435 = vmatprep.subr.mxu0 %v1396
        %1436 = vmatpush2.msra.mxu0 %v1395
        %1437 = vmatprep.subr.mxu0 %v1394
        %1438 = vmatpush2.msra.mxu0 %v1393
        %1439 = vmatprep.subr.mxu0 %v1392
        %1440 = vmatpush2.msra.mxu0 %v1391
        %1441 = vmatprep.subr.mxu0 %v1390
        %1442 = vmatpush2.msra.mxu0 %v1389
        %1443 = vmatprep.subr.mxu0 %v1388
        %1444 = vmatpush2.msra.mxu0 %v1387
        %1445 = vmatprep.subr.mxu0 %v1386
        %1446 = vmatpush2.msra.mxu0 %v1385
        %1447 = vmatprep.subr.mxu0 %v1384
        %1448 = vmatpush2.msra.mxu0 %v1383
        %1449 = vmatprep.subr.mxu0 %v1382
        %1450 = vmatpush2.msra.mxu0 %v1381
        %1451 = vmatprep.subr.mxu0 %v1380
        %1452 = vmatpush2.msra.mxu0 %v1379
        %1453 = vmatprep.subr.mxu0 %v1378
        %1454 = vmatpush2.msra.mxu0 %v1377
        %1455 = vmatprep.subr.mxu0 %v1376
        %1456 = vmatpush2.msra.mxu0 %v1375
        %1457 = vmatprep.subr.mxu0 %v1374
        %1458 = vmatpush2.msra.mxu0 %v1373
        %1459 = vmatprep.subr.mxu0 %v1372
        %1460 = vmatpush2.msra.mxu0 %v1371
        %1461 = vmatprep.subr.mxu0 %v1370
        %1462 = vmatpush2.msra.mxu0 %v1369
        %1463 = vmatprep.subr.mxu0 %v1368
        %1464 = vmatpush2.msra.mxu0 %v1367
        %1465 = vmatprep.subr.mxu0 %v1366
        %1466 = vmatpush2.msra.mxu0 %v1365
        %1467 = vmatprep.mubr.f32.mxu0 %v1400
        %1468 = vmatmul.mubr.f32.gmra.mxu0 %v1399
        %v1469 = vpop.f32.mrf.mxu0
        %v1470 = vadd.f32 0.0, %v1469
        %v1471 = vpop.f32.mrf.mxu0
        %v1472 = vadd.f32 0.0, %v1471
        %1473 = vdwg.mxu0
        %v1474 = vadd.f32 %v1330, %v1470
        %v1475 = vadd.f32 %v1331, %v1472
        %v1476 = vld [vmem:[%s584] sm:$0x1f]
        %v1477 = vld [vmem:[%s584 + $0x8] sm:$0x1f]
        %v1478 = vld [vmem:[%s621] sm:$0x1f]
        %v1479 = vld [vmem:[%s621 + $0x8] sm:$0x1f]
        %s1480 = scalar_lea.vmem %s6, 3072
        %v1481 = vld [vmem:[%s1480] sm:$0xff]
        %v1482 = vld [vmem:[%s1480 + $0x8] sm:$0xff]
        %v1483 = vld [vmem:[%s1480 + $0x10] sm:$0xff]
        %v1484 = vld [vmem:[%s1480 + $0x18] sm:$0xff]
        %v1485 = vld [vmem:[%s1480 + $0x20] sm:$0xff]
        %v1486 = vld [vmem:[%s1480 + $0x28] sm:$0xff]
        %v1487 = vld [vmem:[%s1480 + $0x30] sm:$0xff]
        %v1488 = vld [vmem:[%s1480 + $0x38] sm:$0xff]
        %v1489 = vld [vmem:[%s1480 + $0x40] sm:$0xff]
        %v1490 = vld [vmem:[%s1480 + $0x48] sm:$0xff]
        %v1491 = vld [vmem:[%s1480 + $0x50] sm:$0xff]
        %v1492 = vld [vmem:[%s1480 + $0x58] sm:$0xff]
        %v1493 = vld [vmem:[%s1480 + $0x60] sm:$0xff]
        %v1494 = vld [vmem:[%s1480 + $0x68] sm:$0xff]
        %v1495 = vld [vmem:[%s1480 + $0x70] sm:$0xff]
        %v1496 = vld [vmem:[%s1480 + $0x78] sm:$0xff]
        %v1497 = vld [vmem:[%s1480 + $0x80] sm:$0xff]
        %v1498 = vld [vmem:[%s1480 + $0x88] sm:$0xff]
        %v1499 = vld [vmem:[%s1480 + $0x90] sm:$0xff]
        %v1500 = vld [vmem:[%s1480 + $0x98] sm:$0xff]
        %v1501 = vld [vmem:[%s1480 + $0xa0] sm:$0xff]
        %v1502 = vld [vmem:[%s1480 + $0xa8] sm:$0xff]
        %v1503 = vld [vmem:[%s1480 + $0xb0] sm:$0xff]
        %v1504 = vld [vmem:[%s1480 + $0xb8] sm:$0xff]
        %v1505 = vld [vmem:[%s1480 + $0xc0] sm:$0xff]
        %v1506 = vld [vmem:[%s1480 + $0xc8] sm:$0xff]
        %v1507 = vld [vmem:[%s1480 + $0xd0] sm:$0xff]
        %v1508 = vld [vmem:[%s1480 + $0xd8] sm:$0xff]
        %v1509 = vld [vmem:[%s1480 + $0xe0] sm:$0xff]
        %v1510 = vld [vmem:[%s1480 + $0xe8] sm:$0xff]
        %v1511 = vld [vmem:[%s1480 + $0xf0] sm:$0xff]
        %v1512 = vld [vmem:[%s1480 + $0xf8] sm:$0xff]
        %v1513 = vld [vmem:[%s1480 + $0x100] sm:$0xff]
        %v1514 = vld [vmem:[%s1480 + $0x108] sm:$0xff]
        %v1515 = vld [vmem:[%s1480 + $0x110] sm:$0xff]
        %v1516 = vld [vmem:[%s1480 + $0x118] sm:$0xff]
        %v1517 = vld [vmem:[%s1480 + $0x120] sm:$0xff]
        %v1518 = vld [vmem:[%s1480 + $0x128] sm:$0xff]
        %v1519 = vld [vmem:[%s1480 + $0x130] sm:$0xff]
        %v1520 = vld [vmem:[%s1480 + $0x138] sm:$0xff]
        %v1521 = vld [vmem:[%s1480 + $0x140] sm:$0xff]
        %v1522 = vld [vmem:[%s1480 + $0x148] sm:$0xff]
        %v1523 = vld [vmem:[%s1480 + $0x150] sm:$0xff]
        %v1524 = vld [vmem:[%s1480 + $0x158] sm:$0xff]
        %v1525 = vld [vmem:[%s1480 + $0x160] sm:$0xff]
        %v1526 = vld [vmem:[%s1480 + $0x168] sm:$0xff]
        %v1527 = vld [vmem:[%s1480 + $0x170] sm:$0xff]
        %v1528 = vld [vmem:[%s1480 + $0x178] sm:$0xff]
        %v1529 = vld [vmem:[%s1480 + $0x180] sm:$0xff]
        %v1530 = vld [vmem:[%s1480 + $0x188] sm:$0xff]
        %v1531 = vld [vmem:[%s1480 + $0x190] sm:$0xff]
        %v1532 = vld [vmem:[%s1480 + $0x198] sm:$0xff]
        %v1533 = vld [vmem:[%s1480 + $0x1a0] sm:$0xff]
        %v1534 = vld [vmem:[%s1480 + $0x1a8] sm:$0xff]
        %v1535 = vld [vmem:[%s1480 + $0x1b0] sm:$0xff]
        %v1536 = vld [vmem:[%s1480 + $0x1b8] sm:$0xff]
        %v1537 = vld [vmem:[%s1480 + $0x1c0] sm:$0xff]
        %v1538 = vld [vmem:[%s1480 + $0x1c8] sm:$0xff]
        %v1539 = vld [vmem:[%s1480 + $0x1d0] sm:$0xff]
        %v1540 = vld [vmem:[%s1480 + $0x1d8] sm:$0xff]
        %v1541 = vld [vmem:[%s1480 + $0x1e0] sm:$0xff]
        %v1542 = vld [vmem:[%s1480 + $0x1e8] sm:$0xff]
        %v1543 = vld [vmem:[%s1480 + $0x1f0] sm:$0xff]
        %v1544 = vld [vmem:[%s1480 + $0x1f8] sm:$0xff]
        %1545 = vmatprep.subr.mxu0 %v1512
        %1546 = vmatpush1.msra.mxu0 %v1511
        %1547 = vmatprep.subr.mxu0 %v1510
        %1548 = vmatpush1.msra.mxu0 %v1509
        %1549 = vmatprep.subr.mxu0 %v1508
        %1550 = vmatpush1.msra.mxu0 %v1507
        %1551 = vmatprep.subr.mxu0 %v1506
        %1552 = vmatpush1.msra.mxu0 %v1505
        %1553 = vmatprep.subr.mxu0 %v1504
        %1554 = vmatpush1.msra.mxu0 %v1503
        %1555 = vmatprep.subr.mxu0 %v1502
        %1556 = vmatpush1.msra.mxu0 %v1501
        %1557 = vmatprep.subr.mxu0 %v1500
        %1558 = vmatpush1.msra.mxu0 %v1499
        %1559 = vmatprep.subr.mxu0 %v1498
        %1560 = vmatpush1.msra.mxu0 %v1497
        %1561 = vmatprep.subr.mxu0 %v1496
        %1562 = vmatpush1.msra.mxu0 %v1495
        %1563 = vmatprep.subr.mxu0 %v1494
        %1564 = vmatpush1.msra.mxu0 %v1493
        %1565 = vmatprep.subr.mxu0 %v1492
        %1566 = vmatpush1.msra.mxu0 %v1491
        %1567 = vmatprep.subr.mxu0 %v1490
        %1568 = vmatpush1.msra.mxu0 %v1489
        %1569 = vmatprep.subr.mxu0 %v1488
        %1570 = vmatpush1.msra.mxu0 %v1487
        %1571 = vmatprep.subr.mxu0 %v1486
        %1572 = vmatpush1.msra.mxu0 %v1485
        %1573 = vmatprep.subr.mxu0 %v1484
        %1574 = vmatpush1.msra.mxu0 %v1483
        %1575 = vmatprep.subr.mxu0 %v1482
        %1576 = vmatpush1.msra.mxu0 %v1481
        %1577 = vmatprep.subr.mxu0 %v1544
        %1578 = vmatpush2.msra.mxu0 %v1543
        %1579 = vmatprep.subr.mxu0 %v1542
        %1580 = vmatpush2.msra.mxu0 %v1541
        %1581 = vmatprep.subr.mxu0 %v1540
        %1582 = vmatpush2.msra.mxu0 %v1539
        %1583 = vmatprep.subr.mxu0 %v1538
        %1584 = vmatpush2.msra.mxu0 %v1537
        %1585 = vmatprep.subr.mxu0 %v1536
        %1586 = vmatpush2.msra.mxu0 %v1535
        %1587 = vmatprep.subr.mxu0 %v1534
        %1588 = vmatpush2.msra.mxu0 %v1533
        %1589 = vmatprep.subr.mxu0 %v1532
        %1590 = vmatpush2.msra.mxu0 %v1531
        %1591 = vmatprep.subr.mxu0 %v1530
        %1592 = vmatpush2.msra.mxu0 %v1529
        %1593 = vmatprep.subr.mxu0 %v1528
        %1594 = vmatpush2.msra.mxu0 %v1527
        %1595 = vmatprep.subr.mxu0 %v1526
        %1596 = vmatpush2.msra.mxu0 %v1525
        %1597 = vmatprep.subr.mxu0 %v1524
        %1598 = vmatpush2.msra.mxu0 %v1523
        %1599 = vmatprep.subr.mxu0 %v1522
        %1600 = vmatpush2.msra.mxu0 %v1521
        %1601 = vmatprep.subr.mxu0 %v1520
        %1602 = vmatpush2.msra.mxu0 %v1519
        %1603 = vmatprep.subr.mxu0 %v1518
        %1604 = vmatpush2.msra.mxu0 %v1517
        %1605 = vmatprep.subr.mxu0 %v1516
        %1606 = vmatpush2.msra.mxu0 %v1515
        %1607 = vmatprep.subr.mxu0 %v1514
        %1608 = vmatpush2.msra.mxu0 %v1513
        %1609 = vmatprep.mubr.f32.mxu0 %v1477
        %1610 = vmatmul.mubr.f32.gmra.mxu0 %v1476
        %v1611 = vpop.f32.mrf.mxu0
        %v1612 = vadd.f32 0.0, %v1611
        %v1613 = vpop.f32.mrf.mxu0
        %v1614 = vadd.f32 0.0, %v1613
        %1615 = vdwg.mxu0
        %v1616 = vadd.f32 %v1474, %v1612
        %v1617 = vadd.f32 %v1475, %v1614
        %s1618 = scalar_lea.vmem %s6, 3584
        %v1619 = vld [vmem:[%s1618] sm:$0xff]
        %v1620 = vld [vmem:[%s1618 + $0x8] sm:$0xff]
        %v1621 = vld [vmem:[%s1618 + $0x10] sm:$0xff]
        %v1622 = vld [vmem:[%s1618 + $0x18] sm:$0xff]
        %v1623 = vld [vmem:[%s1618 + $0x20] sm:$0xff]
        %v1624 = vld [vmem:[%s1618 + $0x28] sm:$0xff]
        %v1625 = vld [vmem:[%s1618 + $0x30] sm:$0xff]
        %v1626 = vld [vmem:[%s1618 + $0x38] sm:$0xff]
        %v1627 = vld [vmem:[%s1618 + $0x40] sm:$0xff]
        %v1628 = vld [vmem:[%s1618 + $0x48] sm:$0xff]
        %v1629 = vld [vmem:[%s1618 + $0x50] sm:$0xff]
        %v1630 = vld [vmem:[%s1618 + $0x58] sm:$0xff]
        %v1631 = vld [vmem:[%s1618 + $0x60] sm:$0xff]
        %v1632 = vld [vmem:[%s1618 + $0x68] sm:$0xff]
        %v1633 = vld [vmem:[%s1618 + $0x70] sm:$0xff]
        %v1634 = vld [vmem:[%s1618 + $0x78] sm:$0xff]
        %v1635 = vld [vmem:[%s1618 + $0x80] sm:$0xff]
        %v1636 = vld [vmem:[%s1618 + $0x88] sm:$0xff]
        %v1637 = vld [vmem:[%s1618 + $0x90] sm:$0xff]
        %v1638 = vld [vmem:[%s1618 + $0x98] sm:$0xff]
        %v1639 = vld [vmem:[%s1618 + $0xa0] sm:$0xff]
        %v1640 = vld [vmem:[%s1618 + $0xa8] sm:$0xff]
        %v1641 = vld [vmem:[%s1618 + $0xb0] sm:$0xff]
        %v1642 = vld [vmem:[%s1618 + $0xb8] sm:$0xff]
        %v1643 = vld [vmem:[%s1618 + $0xc0] sm:$0xff]
        %v1644 = vld [vmem:[%s1618 + $0xc8] sm:$0xff]
        %v1645 = vld [vmem:[%s1618 + $0xd0] sm:$0xff]
        %v1646 = vld [vmem:[%s1618 + $0xd8] sm:$0xff]
        %v1647 = vld [vmem:[%s1618 + $0xe0] sm:$0xff]
        %v1648 = vld [vmem:[%s1618 + $0xe8] sm:$0xff]
        %v1649 = vld [vmem:[%s1618 + $0xf0] sm:$0xff]
        %v1650 = vld [vmem:[%s1618 + $0xf8] sm:$0xff]
        %v1651 = vld [vmem:[%s1618 + $0x100] sm:$0xff]
        %v1652 = vld [vmem:[%s1618 + $0x108] sm:$0xff]
        %v1653 = vld [vmem:[%s1618 + $0x110] sm:$0xff]
        %v1654 = vld [vmem:[%s1618 + $0x118] sm:$0xff]
        %v1655 = vld [vmem:[%s1618 + $0x120] sm:$0xff]
        %v1656 = vld [vmem:[%s1618 + $0x128] sm:$0xff]
        %v1657 = vld [vmem:[%s1618 + $0x130] sm:$0xff]
        %v1658 = vld [vmem:[%s1618 + $0x138] sm:$0xff]
        %v1659 = vld [vmem:[%s1618 + $0x140] sm:$0xff]
        %v1660 = vld [vmem:[%s1618 + $0x148] sm:$0xff]
        %v1661 = vld [vmem:[%s1618 + $0x150] sm:$0xff]
        %v1662 = vld [vmem:[%s1618 + $0x158] sm:$0xff]
        %v1663 = vld [vmem:[%s1618 + $0x160] sm:$0xff]
        %v1664 = vld [vmem:[%s1618 + $0x168] sm:$0xff]
        %v1665 = vld [vmem:[%s1618 + $0x170] sm:$0xff]
        %v1666 = vld [vmem:[%s1618 + $0x178] sm:$0xff]
        %v1667 = vld [vmem:[%s1618 + $0x180] sm:$0xff]
        %v1668 = vld [vmem:[%s1618 + $0x188] sm:$0xff]
        %v1669 = vld [vmem:[%s1618 + $0x190] sm:$0xff]
        %v1670 = vld [vmem:[%s1618 + $0x198] sm:$0xff]
        %v1671 = vld [vmem:[%s1618 + $0x1a0] sm:$0xff]
        %v1672 = vld [vmem:[%s1618 + $0x1a8] sm:$0xff]
        %v1673 = vld [vmem:[%s1618 + $0x1b0] sm:$0xff]
        %v1674 = vld [vmem:[%s1618 + $0x1b8] sm:$0xff]
        %v1675 = vld [vmem:[%s1618 + $0x1c0] sm:$0xff]
        %v1676 = vld [vmem:[%s1618 + $0x1c8] sm:$0xff]
        %v1677 = vld [vmem:[%s1618 + $0x1d0] sm:$0xff]
        %v1678 = vld [vmem:[%s1618 + $0x1d8] sm:$0xff]
        %v1679 = vld [vmem:[%s1618 + $0x1e0] sm:$0xff]
        %v1680 = vld [vmem:[%s1618 + $0x1e8] sm:$0xff]
        %v1681 = vld [vmem:[%s1618 + $0x1f0] sm:$0xff]
        %v1682 = vld [vmem:[%s1618 + $0x1f8] sm:$0xff]
        %1683 = vmatprep.subr.mxu0 %v1650
        %1684 = vmatpush1.msra.mxu0 %v1649
        %1685 = vmatprep.subr.mxu0 %v1648
        %1686 = vmatpush1.msra.mxu0 %v1647
        %1687 = vmatprep.subr.mxu0 %v1646
        %1688 = vmatpush1.msra.mxu0 %v1645
        %1689 = vmatprep.subr.mxu0 %v1644
        %1690 = vmatpush1.msra.mxu0 %v1643
        %1691 = vmatprep.subr.mxu0 %v1642
        %1692 = vmatpush1.msra.mxu0 %v1641
        %1693 = vmatprep.subr.mxu0 %v1640
        %1694 = vmatpush1.msra.mxu0 %v1639
        %1695 = vmatprep.subr.mxu0 %v1638
        %1696 = vmatpush1.msra.mxu0 %v1637
        %1697 = vmatprep.subr.mxu0 %v1636
        %1698 = vmatpush1.msra.mxu0 %v1635
        %1699 = vmatprep.subr.mxu0 %v1634
        %1700 = vmatpush1.msra.mxu0 %v1633
        %1701 = vmatprep.subr.mxu0 %v1632
        %1702 = vmatpush1.msra.mxu0 %v1631
        %1703 = vmatprep.subr.mxu0 %v1630
        %1704 = vmatpush1.msra.mxu0 %v1629
        %1705 = vmatprep.subr.mxu0 %v1628
        %1706 = vmatpush1.msra.mxu0 %v1627
        %1707 = vmatprep.subr.mxu0 %v1626
        %1708 = vmatpush1.msra.mxu0 %v1625
        %1709 = vmatprep.subr.mxu0 %v1624
        %1710 = vmatpush1.msra.mxu0 %v1623
        %1711 = vmatprep.subr.mxu0 %v1622
        %1712 = vmatpush1.msra.mxu0 %v1621
        %1713 = vmatprep.subr.mxu0 %v1620
        %1714 = vmatpush1.msra.mxu0 %v1619
        %1715 = vmatprep.subr.mxu0 %v1682
        %1716 = vmatpush2.msra.mxu0 %v1681
        %1717 = vmatprep.subr.mxu0 %v1680
        %1718 = vmatpush2.msra.mxu0 %v1679
        %1719 = vmatprep.subr.mxu0 %v1678
        %1720 = vmatpush2.msra.mxu0 %v1677
        %1721 = vmatprep.subr.mxu0 %v1676
        %1722 = vmatpush2.msra.mxu0 %v1675
        %1723 = vmatprep.subr.mxu0 %v1674
        %1724 = vmatpush2.msra.mxu0 %v1673
        %1725 = vmatprep.subr.mxu0 %v1672
        %1726 = vmatpush2.msra.mxu0 %v1671
        %1727 = vmatprep.subr.mxu0 %v1670
        %1728 = vmatpush2.msra.mxu0 %v1669
        %1729 = vmatprep.subr.mxu0 %v1668
        %1730 = vmatpush2.msra.mxu0 %v1667
        %1731 = vmatprep.subr.mxu0 %v1666
        %1732 = vmatpush2.msra.mxu0 %v1665
        %1733 = vmatprep.subr.mxu0 %v1664
        %1734 = vmatpush2.msra.mxu0 %v1663
        %1735 = vmatprep.subr.mxu0 %v1662
        %1736 = vmatpush2.msra.mxu0 %v1661
        %1737 = vmatprep.subr.mxu0 %v1660
        %1738 = vmatpush2.msra.mxu0 %v1659
        %1739 = vmatprep.subr.mxu0 %v1658
        %1740 = vmatpush2.msra.mxu0 %v1657
        %1741 = vmatprep.subr.mxu0 %v1656
        %1742 = vmatpush2.msra.mxu0 %v1655
        %1743 = vmatprep.subr.mxu0 %v1654
        %1744 = vmatpush2.msra.mxu0 %v1653
        %1745 = vmatprep.subr.mxu0 %v1652
        %1746 = vmatpush2.msra.mxu0 %v1651
        %1747 = vmatprep.mubr.f32.mxu0 %v1479
        %1748 = vmatmul.mubr.f32.gmra.mxu0 %v1478
        %v1749 = vpop.f32.mrf.mxu0
        %v1750 = vadd.f32 0.0, %v1749
        %v1751 = vpop.f32.mrf.mxu0
        %v1752 = vadd.f32 0.0, %v1751
        %1753 = vdwg.mxu0
        %v1754 = vadd.f32 %v1616, %v1750
        %v1755 = vadd.f32 %v1617, %v1752
        %s1756 = scalar_lea.vmem %s6, 4096
        %v1757 = vld [vmem:[%s1756] sm:$0xff]
        %v1758 = vld [vmem:[%s1756 + $0x8] sm:$0xff]
        %v1759 = vld [vmem:[%s1756 + $0x10] sm:$0xff]
        %v1760 = vld [vmem:[%s1756 + $0x18] sm:$0xff]
        %v1761 = vld [vmem:[%s1756 + $0x20] sm:$0xff]
        %v1762 = vld [vmem:[%s1756 + $0x28] sm:$0xff]
        %v1763 = vld [vmem:[%s1756 + $0x30] sm:$0xff]
        %v1764 = vld [vmem:[%s1756 + $0x38] sm:$0xff]
        %v1765 = vld [vmem:[%s1756 + $0x40] sm:$0xff]
        %v1766 = vld [vmem:[%s1756 + $0x48] sm:$0xff]
        %v1767 = vld [vmem:[%s1756 + $0x50] sm:$0xff]
        %v1768 = vld [vmem:[%s1756 + $0x58] sm:$0xff]
        %v1769 = vld [vmem:[%s1756 + $0x60] sm:$0xff]
        %v1770 = vld [vmem:[%s1756 + $0x68] sm:$0xff]
        %v1771 = vld [vmem:[%s1756 + $0x70] sm:$0xff]
        %v1772 = vld [vmem:[%s1756 + $0x78] sm:$0xff]
        %v1773 = vld [vmem:[%s1756 + $0x80] sm:$0xff]
        %v1774 = vld [vmem:[%s1756 + $0x88] sm:$0xff]
        %v1775 = vld [vmem:[%s1756 + $0x90] sm:$0xff]
        %v1776 = vld [vmem:[%s1756 + $0x98] sm:$0xff]
        %v1777 = vld [vmem:[%s1756 + $0xa0] sm:$0xff]
        %v1778 = vld [vmem:[%s1756 + $0xa8] sm:$0xff]
        %v1779 = vld [vmem:[%s1756 + $0xb0] sm:$0xff]
        %v1780 = vld [vmem:[%s1756 + $0xb8] sm:$0xff]
        %v1781 = vld [vmem:[%s1756 + $0xc0] sm:$0xff]
        %v1782 = vld [vmem:[%s1756 + $0xc8] sm:$0xff]
        %v1783 = vld [vmem:[%s1756 + $0xd0] sm:$0xff]
        %v1784 = vld [vmem:[%s1756 + $0xd8] sm:$0xff]
        %v1785 = vld [vmem:[%s1756 + $0xe0] sm:$0xff]
        %v1786 = vld [vmem:[%s1756 + $0xe8] sm:$0xff]
        %v1787 = vld [vmem:[%s1756 + $0xf0] sm:$0xff]
        %v1788 = vld [vmem:[%s1756 + $0xf8] sm:$0xff]
        %v1789 = vld [vmem:[%s1756 + $0x100] sm:$0xff]
        %v1790 = vld [vmem:[%s1756 + $0x108] sm:$0xff]
        %v1791 = vld [vmem:[%s1756 + $0x110] sm:$0xff]
        %v1792 = vld [vmem:[%s1756 + $0x118] sm:$0xff]
        %v1793 = vld [vmem:[%s1756 + $0x120] sm:$0xff]
        %v1794 = vld [vmem:[%s1756 + $0x128] sm:$0xff]
        %v1795 = vld [vmem:[%s1756 + $0x130] sm:$0xff]
        %v1796 = vld [vmem:[%s1756 + $0x138] sm:$0xff]
        %v1797 = vld [vmem:[%s1756 + $0x140] sm:$0xff]
        %v1798 = vld [vmem:[%s1756 + $0x148] sm:$0xff]
        %v1799 = vld [vmem:[%s1756 + $0x150] sm:$0xff]
        %v1800 = vld [vmem:[%s1756 + $0x158] sm:$0xff]
        %v1801 = vld [vmem:[%s1756 + $0x160] sm:$0xff]
        %v1802 = vld [vmem:[%s1756 + $0x168] sm:$0xff]
        %v1803 = vld [vmem:[%s1756 + $0x170] sm:$0xff]
        %v1804 = vld [vmem:[%s1756 + $0x178] sm:$0xff]
        %v1805 = vld [vmem:[%s1756 + $0x180] sm:$0xff]
        %v1806 = vld [vmem:[%s1756 + $0x188] sm:$0xff]
        %v1807 = vld [vmem:[%s1756 + $0x190] sm:$0xff]
        %v1808 = vld [vmem:[%s1756 + $0x198] sm:$0xff]
        %v1809 = vld [vmem:[%s1756 + $0x1a0] sm:$0xff]
        %v1810 = vld [vmem:[%s1756 + $0x1a8] sm:$0xff]
        %v1811 = vld [vmem:[%s1756 + $0x1b0] sm:$0xff]
        %v1812 = vld [vmem:[%s1756 + $0x1b8] sm:$0xff]
        %v1813 = vld [vmem:[%s1756 + $0x1c0] sm:$0xff]
        %v1814 = vld [vmem:[%s1756 + $0x1c8] sm:$0xff]
        %v1815 = vld [vmem:[%s1756 + $0x1d0] sm:$0xff]
        %v1816 = vld [vmem:[%s1756 + $0x1d8] sm:$0xff]
        %v1817 = vld [vmem:[%s1756 + $0x1e0] sm:$0xff]
        %v1818 = vld [vmem:[%s1756 + $0x1e8] sm:$0xff]
        %v1819 = vld [vmem:[%s1756 + $0x1f0] sm:$0xff]
        %v1820 = vld [vmem:[%s1756 + $0x1f8] sm:$0xff]
        %v1823 = vrot.slane %v1476, 1
        %v1824 = vrot.slane %v1477, 1
        %1827 = vmatprep.subr.mxu0 %v1788
        %1828 = vmatpush1.msra.mxu0 %v1787
        %1829 = vmatprep.subr.mxu0 %v1786
        %1830 = vmatpush1.msra.mxu0 %v1785
        %1831 = vmatprep.subr.mxu0 %v1784
        %1832 = vmatpush1.msra.mxu0 %v1783
        %1833 = vmatprep.subr.mxu0 %v1782
        %1834 = vmatpush1.msra.mxu0 %v1781
        %1835 = vmatprep.subr.mxu0 %v1780
        %1836 = vmatpush1.msra.mxu0 %v1779
        %1837 = vmatprep.subr.mxu0 %v1778
        %1838 = vmatpush1.msra.mxu0 %v1777
        %1839 = vmatprep.subr.mxu0 %v1776
        %1840 = vmatpush1.msra.mxu0 %v1775
        %1841 = vmatprep.subr.mxu0 %v1774
        %1842 = vmatpush1.msra.mxu0 %v1773
        %1843 = vmatprep.subr.mxu0 %v1772
        %1844 = vmatpush1.msra.mxu0 %v1771
        %1845 = vmatprep.subr.mxu0 %v1770
        %1846 = vmatpush1.msra.mxu0 %v1769
        %1847 = vmatprep.subr.mxu0 %v1768
        %1848 = vmatpush1.msra.mxu0 %v1767
        %1849 = vmatprep.subr.mxu0 %v1766
        %1850 = vmatpush1.msra.mxu0 %v1765
        %1851 = vmatprep.subr.mxu0 %v1764
        %1852 = vmatpush1.msra.mxu0 %v1763
        %1853 = vmatprep.subr.mxu0 %v1762
        %1854 = vmatpush1.msra.mxu0 %v1761
        %1855 = vmatprep.subr.mxu0 %v1760
        %1856 = vmatpush1.msra.mxu0 %v1759
        %1857 = vmatprep.subr.mxu0 %v1758
        %1858 = vmatpush1.msra.mxu0 %v1757
        %1859 = vmatprep.subr.mxu0 %v1820
        %1860 = vmatpush2.msra.mxu0 %v1819
        %1861 = vmatprep.subr.mxu0 %v1818
        %1862 = vmatpush2.msra.mxu0 %v1817
        %1863 = vmatprep.subr.mxu0 %v1816
        %1864 = vmatpush2.msra.mxu0 %v1815
        %1865 = vmatprep.subr.mxu0 %v1814
        %1866 = vmatpush2.msra.mxu0 %v1813
        %1867 = vmatprep.subr.mxu0 %v1812
        %1868 = vmatpush2.msra.mxu0 %v1811
        %1869 = vmatprep.subr.mxu0 %v1810
        %1870 = vmatpush2.msra.mxu0 %v1809
        %1871 = vmatprep.subr.mxu0 %v1808
        %1872 = vmatpush2.msra.mxu0 %v1807
        %1873 = vmatprep.subr.mxu0 %v1806
        %1874 = vmatpush2.msra.mxu0 %v1805
        %1875 = vmatprep.subr.mxu0 %v1804
        %1876 = vmatpush2.msra.mxu0 %v1803
        %1877 = vmatprep.subr.mxu0 %v1802
        %1878 = vmatpush2.msra.mxu0 %v1801
        %1879 = vmatprep.subr.mxu0 %v1800
        %1880 = vmatpush2.msra.mxu0 %v1799
        %1881 = vmatprep.subr.mxu0 %v1798
        %1882 = vmatpush2.msra.mxu0 %v1797
        %1883 = vmatprep.subr.mxu0 %v1796
        %1884 = vmatpush2.msra.mxu0 %v1795
        %1885 = vmatprep.subr.mxu0 %v1794
        %1886 = vmatpush2.msra.mxu0 %v1793
        %1887 = vmatprep.subr.mxu0 %v1792
        %1888 = vmatpush2.msra.mxu0 %v1791
        %1889 = vmatprep.subr.mxu0 %v1790
        %1890 = vmatpush2.msra.mxu0 %v1789
        %1891 = vmatprep.mubr.f32.mxu0 %v1824
        %1892 = vmatmul.mubr.f32.gmra.mxu0 %v1823
        %v1893 = vpop.f32.mrf.mxu0
        %v1894 = vadd.f32 0.0, %v1893
        %v1895 = vpop.f32.mrf.mxu0
        %v1896 = vadd.f32 0.0, %v1895
        %1897 = vdwg.mxu0
        %v1898 = vadd.f32 %v1754, %v1894
        %v1899 = vadd.f32 %v1755, %v1896
        %v1900 = vld [vmem:[%s7] sm:$0x3]
        %v1902 = vlaneseq
        %v1903 = vshrl.u32 %v1902, 7
        %v1904 = vsub.s32 0, %v1903
        %v1905 = vrot.slane %v1900, %v1904
        %v1906 = vlaneseq
        %v1907 = vshrl.u32 %v1906, 7
        %v1908 = vsub.s32 1, %v1907
        %v1909 = vrot.slane %v1900, %v1908
        %v1912 = vadd.f32 %v1898, %v1905
        %v1913 = vadd.f32 %v1899, %v1909
        %v1914 = vmax.f32 %v1912, 0.0
        %v1915 = vmax.f32 %v1913, 0.0
        %v1916 = vld [vmem:[%s632] sm:$0xff]
        %v1918 = vcombine.high %v1916, %v1916
        %v1920 = vadd.f32 %v1914, %v1916
        %v1921 = vadd.f32 %v1915, %v1918
        %v1924 = vcombine.low %v1920, %v1921
        %1926 = vst [vmem:[%s549] sm:$0xff] %v1924
        %s1927 = sand.u32 %s303, 1
        %s1928 = scalar_lea.sflag [#allocation3], %s1927
        %s1929 = sand.u32 %s303, 1
        %s1930 = smul.addr %s1929, 8
        %s1931 = scalar_lea.vmem [#allocation2], %s1930
        // Predicated region
        $region57: #{local_use_add_forward.9} parent=55 // pred_check
          %p1932 = pneg %p313
        $region58: #{local_use_add_forward.9} parent=55 // pred_check_branch
          %1934 = sbr.rel (%p1932) target = $region60
        $region59: #{local_use_add_forward.9} parent=55 // pred_region
          %s1936 = ssub.s32 128, 128
          %1937 = vsyncadd %s1928, %s1936
          %s1938 = smul.addr %s28, 2
          %s1939 = smul.addr %s27, 8
          %s1940 = sadd.s32 %s1938, %s1939
          %s1941 = smul.addr %s1940, 64
          %s1942 = scalar_lea.hbm %s9, %s1941
          %s1944 = sshll.u32 %s1931, 4
          %s1945 = int_to_ptr.vmem [resolvable:$true] %s1944
          %1947 = dma.vmem_to_hbm [thread:$0]  %s1945, 128, %s1942, %s1928
        $region60: #{local_use_add_forward.9} parent=55 // pred_fallthru
          _
      $region56: #{local_use_add_forward.9} parent=5 // pred_fallthru
        _
      %p1948 = scmp.le.s32.totalorder 2, %s18
      // Predicated region
      $region61: #{local_use_add_forward.9} parent=5 // pred_check
        %p1949 = pneg %p1948
      $region62: #{local_use_add_forward.9} parent=5 // pred_check_branch
        %1951 = sbr.rel (%p1949) target = $region64
      $region63: #{local_use_add_forward.9} parent=5 // pred_region
        %s1952 = ssub.s32 %s18, 2
        // Predicated region
        $region65: #{local_use_add_forward.9} parent=63 // pred_check
          %p1953 = pneg %p319
        $region66: #{local_use_add_forward.9} parent=63 // pred_check_branch
          %1955 = sbr.rel (%p1953) target = $region68
        $region67: #{local_use_add_forward.9} parent=63 // pred_region
          %s1956 = sand.u32 %s304, 1
          %s1957 = scalar_lea.sflag [#allocation3], %s1956
          %s1958 = sand.u32 %s304, 1
          %s1959 = smul.addr %s1958, 8
          %s1960 = scalar_lea.vmem [#allocation2], %s1959
          %1961 = dma.done %s1957, 128
        $region68: #{local_use_add_forward.9} parent=63 // pred_fallthru
          _
      $region64: #{local_use_add_forward.9} parent=5 // pred_fallthru
        _
    $region6: #{local_use_add_forward.9} parent=1 // loop_footer
      %s22 = sadd.s32 1, %s18
    $region7: #{local_use_add_forward.9} parent=1 // loop_footer_branch
      %17 = sbr.rel target = $region3
    $region8: #{local_use_add_forward.9} parent=1 // loop_exit
      _
    %1962 = vsyncpa [#allocation3], 1
    %s1963 = scalar_lea.sflag [#allocation3], 1
    %1964 = vsyncpa %s1963, 1

</llo_original>
